<compile_context>
chip_gen: v5e
topology: v5e:2x2
jax: 0.10.0
libtpu: 0.0.40
codegen_flags: <defaults>
</compile_context>

<pallas_src>
import functools
import math

import jax
import jax.numpy as jnp
from jax.experimental import pallas as pl
from jax.experimental.pallas import tpu as pltpu


_NEG_INF = -1e18        # same masked_fill value as the torch module
_LANE = 128


# ----------------------------- timing signal ---------------------------------

def gen_timing_signal(length, channels, min_timescale=1.0, max_timescale=1.0e4):
    """Sinusoidal timing signal [length, channels] (matches _gen_timing_signal)."""
    position = jnp.arange(length, dtype=jnp.float32)
    num_timescales = channels // 2
    log_inc = (math.log(float(max_timescale) / float(min_timescale)) /
               max(num_timescales - 1, 1))
    inv_timescales = min_timescale * jnp.exp(
        jnp.arange(num_timescales, dtype=jnp.float32) * -log_inc)
    scaled_time = position[:, None] * inv_timescales[None, :]
    signal = jnp.concatenate([jnp.sin(scaled_time), jnp.cos(scaled_time)], axis=1)
    signal = jnp.pad(signal, ((0, 0), (0, channels % 2)))
    return signal


# ----------------------------- helpers ----------------------------------------

def _layer_norm(v, g, b, eps=1e-6):
    """Repo LayerNorm: gamma * (x - mean) / (std + eps) + beta, unbiased std."""
    n = v.shape[-1]
    mean = jnp.mean(v, axis=-1, keepdims=True)
    var = jnp.sum(jnp.square(v - mean), axis=-1, keepdims=True) / max(n - 1, 1)
    return (v - mean) / (jnp.sqrt(var) + eps) * g + b


@functools.lru_cache(maxsize=1)
def _buffered_one_supported():
    """Probe whether BlockSpec(pipeline_mode=pl.Buffered(1)) compiles here."""
    try:
        def _copy(x_ref, o_ref):
            o_ref[...] = x_ref[...]
        fn = pl.pallas_call(
            _copy,
            out_shape=jax.ShapeDtypeStruct((8, _LANE), jnp.float32),
            grid=(1,),
            in_specs=[pl.BlockSpec((8, _LANE), lambda i: (0, 0),
                                   pipeline_mode=pl.Buffered(1))],
            out_specs=pl.BlockSpec((8, _LANE), lambda i: (0, 0)),
        )
        jax.block_until_ready(fn(jnp.zeros((8, _LANE), jnp.float32)))
        return True
    except Exception:
        return False


@functools.lru_cache(maxsize=1)
def _vmem_limit_bytes():
    """Explicit scoped-VMEM limit: ~80% of physical, capped at 100 MiB."""
    try:
        cap = int(pltpu.get_tpu_info().vmem_capacity_bytes)
        return min(int(cap * 0.8), 100 * 1024 * 1024)
    except Exception:
        return 32 * 1024 * 1024


def _batch_spec(tail_shape):
    nd = len(tail_shape)
    return pl.BlockSpec((None,) + tuple(tail_shape),
                        lambda b: (b,) + (0,) * nd)


def _const_spec(shape):
    nd = len(shape)
    index_map = lambda b: (0,) * nd
    if _buffered_one_supported():
        # constant block index -> single-buffer it (double-buffering the
        # weights would be pure VMEM waste; matters most on v7x's 64 MiB)
        return pl.BlockSpec(tuple(shape), index_map, pipeline_mode=pl.Buffered(1))
    return pl.BlockSpec(tuple(shape), index_map)


# ----------------------------- fused decoder-layer kernel --------------------

def _decoder_layer_kernel(*refs, num_heads, fuse_embed, fuse_final_ln, compute_attn):
    it = iter(refs)
    if fuse_embed:
        inp_ref, wp_ref, t_ref = next(it), next(it), next(it)
    else:
        x_ref = next(it)
    enc_ref, mtrg_ref, msrc_ref = next(it), next(it), next(it)
    lng_ref, lnb_ref = next(it), next(it)
    wqs_ref, wks_ref, wvs_ref, wos_ref = next(it), next(it), next(it), next(it)
    wqc_ref, wkc_ref, wvc_ref, woc_ref = next(it), next(it), next(it), next(it)
    wf1_ref, bf1_ref, wf2_ref, bf2_ref = next(it), next(it), next(it), next(it)
    if fuse_final_ln:
        lnfg_ref, lnfb_ref = next(it), next(it)
    o_ref = next(it)
    attn_ref = next(it) if compute_attn else None

    bf16 = jnp.bfloat16

    if fuse_embed:
        # x = embedding_proj(inputs) + timing_signal   (fused into layer 0)
        x = jnp.dot(inp_ref[...].astype(bf16), wp_ref[...],
                    preferred_element_type=jnp.float32) + t_ref[...]
    else:
        x = x_ref[...]                       # [L, H] f32 residual stream
    enc = enc_ref[...]                       # [Lkv, H] f32 (Lkv padded to 128)
    L = x.shape[0]

    # Additive mask biases (f32), computed ONCE per grid step, reused by every
    # head (no per-head jnp.where selects).  dec_mask = key-pad OR future.
    col = jax.lax.broadcasted_iota(jnp.int32, (L, L), 1)
    row = jax.lax.broadcasted_iota(jnp.int32, (L, L), 0)
    dec_bias = jnp.where(jnp.logical_or(mtrg_ref[...] > 0.0, col > row),
                         _NEG_INF, 0.0).astype(jnp.float32)          # [L, L]
    src_bias = jnp.where(msrc_ref[...] > 0.0,
                         _NEG_INF, 0.0).astype(jnp.float32)          # [1, Lkv]

    lng = lng_ref[...]          # [3, H] LN gammas (self / cross / ffn)
    lnb = lnb_ref[...]          # [3, H] LN betas

    def mha(q_in, kv_in, wq_ref, wk_ref, wv_ref, wo_ref, bias, want_attn):
        nh = num_heads
        wq, wk, wv, wo = wq_ref[...], wk_ref[...], wv_ref[...], wo_ref[...]
        # projections: bf16 operands, f32 accumulation (MXU-native path)
        q = jnp.dot(q_in.astype(bf16), wq, preferred_element_type=jnp.float32)
        k = jnp.dot(kv_in.astype(bf16), wk, preferred_element_type=jnp.float32)
        v = jnp.dot(kv_in.astype(bf16), wv, preferred_element_type=jnp.float32)
        dk = q.shape[-1] // nh
        dv = v.shape[-1] // nh
        q = q * (float(dk) ** -0.5)          # query_scale (torch semantics)
        # head-major stacks -> ONE batched dot_general for logits and one for
        # context (no per-head matmul loop, no lane-dim concat of heads)
        qh = jnp.stack([q[:, h * dk:(h + 1) * dk] for h in range(nh)], 0).astype(bf16)
        kh = jnp.stack([k[:, h * dk:(h + 1) * dk] for h in range(nh)], 0).astype(bf16)
        vh = jnp.stack([v[:, h * dv:(h + 1) * dv] for h in range(nh)], 0).astype(bf16)
        logits = jnp.einsum("hqd,hkd->hqk", qh, kh,
                            preferred_element_type=jnp.float32)     # f32 [nh,Lq,Lk]
        logits = logits + bias   # mask stays f32 (bf16 would overflow -1e18)
        attn = None
        if want_attn:            # head-averaged masked logits (torch behavior)
            attn = jnp.sum(logits, axis=0) * (1.0 / nh)
        m = jnp.max(logits, axis=-1, keepdims=True)
        e = jnp.exp(logits - m)
        w = e * pl.reciprocal(jnp.sum(e, axis=-1, keepdims=True), approx=True)
        ctx = jnp.einsum("hqk,hkd->hqd", w.astype(bf16), vh,
                         preferred_element_type=jnp.float32)        # [nh, Lq, dv]
        # merge heads by accumulating into the output projection with sublane
        # slices of W_o (cheap) instead of a lane-dim concatenate.
        out = jnp.zeros((q_in.shape[0], wo.shape[1]), jnp.float32)
        for h in range(nh):
            out = out + jnp.dot(ctx[h].astype(bf16), wo[h * dv:(h + 1) * dv, :],
                                preferred_element_type=jnp.float32)
        return out, attn

    # --- masked multi-head self attention (+ residual) ---
    xn = _layer_norm(x, lng[0:1, :], lnb[0:1, :])
    y, _ = mha(xn, xn, wqs_ref, wks_ref, wvs_ref, wos_ref, dec_bias, False)
    x = x + y
    # --- encoder-decoder attention (+ residual) ---
    xn = _layer_norm(x, lng[1:2, :], lnb[1:2, :])
    y, attn = mha(xn, enc, wqc_ref, wkc_ref, wvc_ref, woc_ref, src_bias, compute_attn)
    x = x + y
    # --- position-wise feed forward (+ residual) ---
    # TODO(synk): original repo FFN (layer_config='cc') uses causal Conv1d(k=3);
    # the standard Linear-ReLU-Linear FFN is implemented here.
    xn = _layer_norm(x, lng[2:3, :], lnb[2:3, :])
    h1 = jnp.maximum(
        jnp.dot(xn.astype(bf16), wf1_ref[...], preferred_element_type=jnp.float32)
        + bf1_ref[...], 0.0)
    y = jnp.dot(h1.astype(bf16), wf2_ref[...],
                preferred_element_type=jnp.float32) + bf2_ref[...]
    x = x + y

    if fuse_final_ln:            # final Decoder LayerNorm fused into last layer
        x = _layer_norm(x, lnfg_ref[...], lnfb_ref[...])

    o_ref[...] = x.astype(o_ref.dtype)
    if compute_attn:
        attn_ref[...] = attn.astype(attn_ref.dtype)


# ----------------------------- wrappers ---------------------------------------

def decoder_layer(x, enc, mask_trg, mask_src, lp, *, num_heads,
                  fuse_embed=False, embed=None,
                  fuse_final_ln=False, final_ln=None,
                  compute_attn=False):
    B, L = x.shape[0], x.shape[1]
    Lkv, H = enc.shape[1], enc.shape[2]
    Dk = lp["wq_self"].shape[1]
    Dv = lp["wv_self"].shape[1]
    F = lp["w_ff1"].shape[1]
    bf16 = jnp.bfloat16

    args, in_specs = [], []
    if fuse_embed:
        wp, timing = embed
        E = x.shape[2]
        args += [x, wp.astype(bf16), timing]
        in_specs += [_batch_spec((L, E)), _const_spec((E, H)), _const_spec((L, H))]
    else:
        args += [x]
        in_specs += [_batch_spec((L, H))]

    args += [enc, mask_trg, mask_src,
             lp["ln_g"], lp["ln_b"],
             lp["wq_self"].astype(bf16), lp["wk_self"].astype(bf16),
             lp["wv_self"].astype(bf16), lp["wo_self"].astype(bf16),
             lp["wq_cross"].astype(bf16), lp["wk_cross"].astype(bf16),
             lp["wv_cross"].astype(bf16), lp["wo_cross"].astype(bf16),
             lp["w_ff1"].astype(bf16), lp["b_ff1"],
             lp["w_ff2"].astype(bf16), lp["b_ff2"]]
    in_specs += [_batch_spec((Lkv, H)), _batch_spec((1, L)), _batch_spec((1, Lkv)),
                 _const_spec((3, H)), _const_spec((3, H)),
                 _const_spec((H, Dk)), _const_spec((H, Dk)),
                 _const_spec((H, Dv)), _const_spec((Dv, H)),
                 _const_spec((H, Dk)), _const_spec((H, Dk)),
                 _const_spec((H, Dv)), _const_spec((Dv, H)),
                 _const_spec((H, F)), _const_spec((1, F)),
                 _const_spec((F, H)), _const_spec((1, H))]
    if fuse_final_ln:
        g_f, b_f = final_ln
        args += [g_f, b_f]
        in_specs += [_const_spec((1, H)), _const_spec((1, H))]

    if compute_attn:
        out_shape = (jax.ShapeDtypeStruct((B, L, H), jnp.float32),
                     jax.ShapeDtypeStruct((B, L, Lkv), jnp.float32))
        out_specs = (_batch_spec((L, H)), _batch_spec((L, Lkv)))
    else:
        out_shape = jax.ShapeDtypeStruct((B, L, H), jnp.float32)
        out_specs = _batch_spec((L, H))

    # advisory cost estimate
    flops = (2 * L * H * (2 * Dk + Dv) + 2 * L * L * (Dk + Dv) + 2 * L * Dv * H   # self
             + 2 * L * H * Dk + 2 * Lkv * H * (Dk + Dv)
             + 2 * L * Lkv * (Dk + Dv) + 2 * L * Dv * H                           # cross
             + 4 * L * H * F)                                                     # ffn
    if fuse_embed:
        flops += 2 * L * x.shape[2] * H
    flops = int(B * flops)
    transcendentals = int(B * num_heads * (L * L + L * Lkv))
    bytes_accessed = int(sum(int(a.size) * a.dtype.itemsize for a in args)
                         + 4 * B * L * H
                         + (4 * B * L * Lkv if compute_attn else 0))

    kernel = functools.partial(_decoder_layer_kernel, num_heads=num_heads,
                               fuse_embed=fuse_embed, fuse_final_ln=fuse_final_ln,
                               compute_attn=compute_attn)
    return pl.pallas_call(
        kernel,
        out_shape=out_shape,
        grid_spec=pltpu.PrefetchScalarGridSpec(
            num_scalar_prefetch=0,
            grid=(B,),
            in_specs=in_specs,
            out_specs=out_specs),
        compiler_params=pltpu.CompilerParams(
            dimension_semantics=("parallel",),
            vmem_limit_bytes=_vmem_limit_bytes()),
        cost_estimate=pl.CostEstimate(flops=flops, transcendentals=transcendentals,
                                      bytes_accessed=bytes_accessed),
    )(*args)


def decoder_forward(params, inputs, encoder_output, mask, *, num_heads):
    """Pallas Decoder.forward.  mask = (mask_src [B,1,Ls], mask_trg [B,1,L]),
    float masks with >0 meaning padded.  Returns (y [B,L,H], attn_dist [B,L,Ls])."""
    # TODO(synk): universal/ACT branch (act_fn, position_signal) not implemented;
    # only the universal=False path of Decoder.forward is translated.
    # TODO(synk): input/layer/attention/relu dropouts are identity in eval mode.
    mask_src, mask_trg = mask
    B, L, E = inputs.shape
    Ls = encoder_output.shape[1]

    # Lane-dense cross-attention / attn_dist output: pad encoder length to a
    # multiple of 128 once (padded keys masked out); slice attn back below.
    Lkv = ((Ls + _LANE - 1) // _LANE) * _LANE
    enc_p = jnp.pad(encoder_output, ((0, 0), (0, Lkv - Ls), (0, 0)))
    msrc_p = jnp.pad(mask_src, ((0, 0), (0, 0), (0, Lkv - Ls)), constant_values=1.0)

    timing = params["timing"][:L, :]
    num_layers = len(params["layers"])
    x = inputs
    attn_dist = None
    for i, lp in enumerate(params["layers"]):
        first = (i == 0)
        last = (i == num_layers - 1)
        out = decoder_layer(
            x, enc_p, mask_trg, msrc_p, lp, num_heads=num_heads,
            fuse_embed=first,
            embed=(params["wp"], timing) if first else None,
            fuse_final_ln=last,
            final_ln=(params["ln_f_g"], params["ln_f_b"]) if last else None,
            compute_attn=last)
        if last:
            x, attn_dist = out
        else:
            x = out
    return x, attn_dist[:, :, :Ls]


# ----------------------------- pure-JAX reference -----------------------------

def reference_forward(params, inputs, encoder_output, mask, *, num_heads):
    mask_src, mask_trg = mask
    B, L, E = inputs.shape
    x = jnp.einsum("ble,eh->blh", inputs, params["wp"]) + params["timing"][None, :L, :]

    causal = jnp.triu(jnp.ones((L, L), dtype=bool), k=1)
    dec_mask = jnp.logical_or(mask_trg > 0.0, causal[None])    # [B, L, L]
    src_mask = mask_src > 0.0                                  # [B, 1, Ls]

    def mha(q_in, kv_in, wq, wk, wv, wo, m):
        Dk, Dv = wq.shape[1], wv.shape[1]
        dk, dv = Dk // num_heads, Dv // num_heads
        Lq, Lk = q_in.shape[1], kv_in.shape[1]
        q = (q_in @ wq).reshape(B, Lq, num_heads, dk).transpose(0, 2, 1, 3) * (dk ** -0.5)
        k = (kv_in @ wk).reshape(B, Lk, num_heads, dk).transpose(0, 2, 1, 3)
        v = (kv_in @ wv).reshape(B, Lk, num_heads, dv).transpose(0, 2, 1, 3)
        logits = jnp.einsum("bhqd,bhkd->bhqk", q, k)
        logits = jnp.where(m[:, None, :, :], _NEG_INF, logits)
        attn = jnp.sum(logits, axis=1) / num_heads
        w = jax.nn.softmax(logits, axis=-1)
        ctx = jnp.einsum("bhqk,bhkd->bhqd", w, v).transpose(0, 2, 1, 3).reshape(B, Lq, Dv)
        return ctx @ wo, attn

    attn_dist = None
    for lp in params["layers"]:
        xn = _layer_norm(x, lp["ln_g"][0], lp["ln_b"][0])
        y, _ = mha(xn, xn, lp["wq_self"], lp["wk_self"], lp["wv_self"], lp["wo_self"],
                   dec_mask)
        x = x + y
        xn = _layer_norm(x, lp["ln_g"][1], lp["ln_b"][1])
        y, attn_dist = mha(xn, encoder_output, lp["wq_cross"], lp["wk_cross"],
                           lp["wv_cross"], lp["wo_cross"], src_mask)
        x = x + y
        xn = _layer_norm(x, lp["ln_g"][2], lp["ln_b"][2])
        h1 = jax.nn.relu(xn @ lp["w_ff1"] + lp["b_ff1"])
        x = x + (h1 @ lp["w_ff2"] + lp["b_ff2"])
    return _layer_norm(x, params["ln_f_g"], params["ln_f_b"]), attn_dist


# ----------------------------- params & demo ----------------------------------

def init_params(key, *, E, H, Dk, Dv, F, num_layers, max_length):
    def linear(k, fan_in, fan_out):
        bound = 1.0 / math.sqrt(fan_in)
        return jax.random.uniform(k, (fan_in, fan_out), minval=-bound, maxval=bound,
                                  dtype=jnp.float32)

    keys = iter(jax.random.split(key, num_layers * 12 + 2))
    params = {
        "wp": linear(next(keys), E, H),                 # embedding_proj (no bias)
        "timing": gen_timing_signal(max_length, H),
        "ln_f_g": jnp.ones((1, H), jnp.float32),
        "ln_f_b": jnp.zeros((1, H), jnp.float32),
        "layers": [],
    }
    for _ in range(num_layers):
        params["layers"].append({
            "ln_g": jnp.ones((3, H), jnp.float32),
            "ln_b": jnp.zeros((3, H), jnp.float32),
            "wq_self": linear(next(keys), H, Dk),
            "wk_self": linear(next(keys), H, Dk),
            "wv_self": linear(next(keys), H, Dv),
            "wo_self": linear(next(keys), Dv, H),
            "wq_cross": linear(next(keys), H, Dk),
            "wk_cross": linear(next(keys), H, Dk),
            "wv_cross": linear(next(keys), H, Dv),
            "wo_cross": linear(next(keys), Dv, H),
            "w_ff1": linear(next(keys), H, F),
            "b_ff1": jax.random.uniform(next(keys), (1, F), minval=-0.1, maxval=0.1,
                                        dtype=jnp.float32),
            "w_ff2": linear(next(keys), F, H),
            "b_ff2": jax.random.uniform(next(keys), (1, H), minval=-0.1, maxval=0.1,
                                        dtype=jnp.float32),
        })
    return params


if __name__ == "__main__":
    # Small shapes consistent with the module: embedding_size=32, hidden_size=32,
    # num_layers=2, num_heads=4, total_key_depth=32, total_value_depth=32,
    # filter_size=64, batch=2, target length=8, source length=10.
    B, L, Ls = 2, 8, 10
    E = H = Dk = Dv = 32
    F = 64
    num_layers, num_heads = 2, 4
    max_length = 64

    key = jax.random.PRNGKey(0)
    kp, kx, ke = jax.random.split(key, 3)
    params = init_params(kp, E=E, H=H, Dk=Dk, Dv=Dv, F=F,
                         num_layers=num_layers, max_length=max_length)

    inputs = jax.random.normal(kx, (B, L, E), dtype=jnp.float32)
    encoder_output = jax.random.normal(ke, (B, Ls, H), dtype=jnp.float32)
    # padding masks (1.0 = padded position), like the torch data.eq(PAD) masks
    mask_src = jnp.zeros((B, 1, Ls), jnp.float32).at[0, 0, 8:].set(1.0).at[1, 0, 7:].set(1.0)
    mask_trg = jnp.zeros((B, 1, L), jnp.float32).at[0, 0, 7:].set(1.0).at[1, 0, 6:].set(1.0)

    y, attn_dist = decoder_forward(params, inputs, encoder_output,
                                   (mask_src, mask_trg), num_heads=num_heads)
    y = jax.block_until_ready(y)
    attn_dist = jax.block_until_ready(attn_dist)

    y_ref, attn_ref = reference_forward(params, inputs, encoder_output,
                                        (mask_src, mask_trg), num_heads=num_heads)
    assert y.shape == (B, L, H) and attn_dist.shape == (B, L, Ls)
    # bf16 matmul operands (f32 accumulate) -> loosened parity tolerance
    assert jnp.allclose(y, y_ref, atol=5e-2, rtol=5e-2), "y mismatch vs reference"
    assert jnp.allclose(attn_dist, attn_ref, atol=5e-2, rtol=5e-2), \
        "attn mismatch vs reference"
    print("KERNEL_OK")
</pallas_src>

<mosaic_0001>
module attributes {stable_mosaic.version = 11 : i64} {
  func.func @_copy(%arg0: i32, %arg1: memref<8x128xf32, #tpu.memory_space<vmem>>, %arg2: memref<8x128xf32, #tpu.memory_space<vmem>>) attributes {dimension_semantics = [#tpu.dimension_semantics<arbitrary>], iteration_bounds = array<i64: 1>, scalar_prefetch = 0 : i64, scratch_operands = 0 : i64, tpu.core_type = #tpu.core_type<tc>, window_params = [{pipeline_mode = #tpu.pipeline_mode<synchronous>, transform_indices = @transform_0, window_bounds = array<i64: 8, 128>}, {pipeline_mode = #tpu.pipeline_mode<synchronous>, transform_indices = @transform_1, window_bounds = array<i64: 8, 128>}]} {
    %c0 = arith.constant 0 : index
    %c0_0 = arith.constant 0 : index
    %0 = vector.load %arg1[%c0, %c0_0] : memref<8x128xf32, #tpu.memory_space<vmem>>, vector<8x128xf32>
    %c0_1 = arith.constant 0 : index
    %c0_2 = arith.constant 0 : index
    %1 = vector.load %arg2[%c0_1, %c0_2] : memref<8x128xf32, #tpu.memory_space<vmem>>, vector<8x128xf32>
    tpu.vector_store %arg2[%c0_1, %c0_2], %0 {strides = array<i32>} : memref<8x128xf32, #tpu.memory_space<vmem>>, vector<8x128xf32>,
    return
  }
  func.func @transform_0(%arg0: i32) -> (i32, i32) {
    %c0_i32 = arith.constant 0 : i32
    %c0_i32_0 = arith.constant 0 : i32
    %c0_i32_1 = arith.constant 0 : i32
    return %c0_i32, %c0_i32_0 : i32, i32
  }
  func.func @transform_1(%arg0: i32) -> (i32, i32) {
    %c0_i32 = arith.constant 0 : i32
    %c0_i32_0 = arith.constant 0 : i32
    %c0_i32_1 = arith.constant 0 : i32
    return %c0_i32, %c0_i32_0 : i32, i32
  }
}

module attributes {stable_mosaic.version = 11 : i64} {
  func.func @_decoder_layer_kernel(%arg0: i32, %arg1: memref<1x8x32xf32, #tpu.memory_space<vmem>>, %arg2: memref<32x32xbf16, #tpu.memory_space<vmem>>, %arg3: memref<8x32xf32, #tpu.memory_space<vmem>>, %arg4: memref<1x128x32xf32, #tpu.memory_space<vmem>>, %arg5: memref<1x1x8xf32, #tpu.memory_space<vmem>>, %arg6: memref<1x1x128xf32, #tpu.memory_space<vmem>>, %arg7: memref<3x32xf32, #tpu.memory_space<vmem>>, %arg8: memref<3x32xf32, #tpu.memory_space<vmem>>, %arg9: memref<32x32xbf16, #tpu.memory_space<vmem>>, %arg10: memref<32x32xbf16, #tpu.memory_space<vmem>>, %arg11: memref<32x32xbf16, #tpu.memory_space<vmem>>, %arg12: memref<32x32xbf16, #tpu.memory_space<vmem>>, %arg13: memref<32x32xbf16, #tpu.memory_space<vmem>>, %arg14: memref<32x32xbf16, #tpu.memory_space<vmem>>, %arg15: memref<32x32xbf16, #tpu.memory_space<vmem>>, %arg16: memref<32x32xbf16, #tpu.memory_space<vmem>>, %arg17: memref<32x64xbf16, #tpu.memory_space<vmem>>, %arg18: memref<1x64xf32, #tpu.memory_space<vmem>>, %arg19: memref<64x32xbf16, #tpu.memory_space<vmem>>, %arg20: memref<1x32xf32, #tpu.memory_space<vmem>>, %arg21: memref<1x8x32xf32, #tpu.memory_space<vmem>>) attributes {dimension_semantics = [#tpu.dimension_semantics<parallel>], iteration_bounds = array<i64: 2>, scalar_prefetch = 0 : i64, scratch_operands = 0 : i64, tpu.core_type = #tpu.core_type<tc>, window_params = [{transform_indices = @transform_0, window_bounds = array<i64: 1, 8, 32>}, {pipeline_mode = #tpu.pipeline_mode<synchronous>, transform_indices = @transform_1, window_bounds = array<i64: 32, 32>}, {pipeline_mode = #tpu.pipeline_mode<synchronous>, transform_indices = @transform_2, window_bounds = array<i64: 8, 32>}, {transform_indices = @transform_3, window_bounds = array<i64: 1, 128, 32>}, {transform_indices = @transform_4, window_bounds = array<i64: 1, 1, 8>}, {transform_indices = @transform_5, window_bounds = array<i64: 1, 1, 128>}, {pipeline_mode = #tpu.pipeline_mode<synchronous>, transform_indices = @transform_6, window_bounds = array<i64: 3, 32>}, {pipeline_mode = #tpu.pipeline_mode<synchronous>, transform_indices = @transform_7, window_bounds = array<i64: 3, 32>}, {pipeline_mode = #tpu.pipeline_mode<synchronous>, transform_indices = @transform_8, window_bounds = array<i64: 32, 32>}, {pipeline_mode = #tpu.pipeline_mode<synchronous>, transform_indices = @transform_9, window_bounds = array<i64: 32, 32>}, {pipeline_mode = #tpu.pipeline_mode<synchronous>, transform_indices = @transform_10, window_bounds = array<i64: 32, 32>}, {pipeline_mode = #tpu.pipeline_mode<synchronous>, transform_indices = @transform_11, window_bounds = array<i64: 32, 32>}, {pipeline_mode = #tpu.pipeline_mode<synchronous>, transform_indices = @transform_12, window_bounds = array<i64: 32, 32>}, {pipeline_mode = #tpu.pipeline_mode<synchronous>, transform_indices = @transform_13, window_bounds = array<i64: 32, 32>}, {pipeline_mode = #tpu.pipeline_mode<synchronous>, transform_indices = @transform_14, window_bounds = array<i64: 32, 32>}, {pipeline_mode = #tpu.pipeline_mode<synchronous>, transform_indices = @transform_15, window_bounds = array<i64: 32, 32>}, {pipeline_mode = #tpu.pipeline_mode<synchronous>, transform_indices = @transform_16, window_bounds = array<i64: 32, 64>}, {pipeline_mode = #tpu.pipeline_mode<synchronous>, transform_indices = @transform_17, window_bounds = array<i64: 1, 64>}, {pipeline_mode = #tpu.pipeline_mode<synchronous>, transform_indices = @transform_18, window_bounds = array<i64: 64, 32>}, {pipeline_mode = #tpu.pipeline_mode<synchronous>, transform_indices = @transform_19, window_bounds = array<i64: 1, 32>}, {transform_indices = @transform_20, window_bounds = array<i64: 1, 8, 32>}]} {
    %c0 = arith.constant 0 : index
    %c0_0 = arith.constant 0 : index
    %c0_1 = arith.constant 0 : index
    %0 = vector.load %arg1[%c0, %c0_0, %c0_1] : memref<1x8x32xf32, #tpu.memory_space<vmem>>, vector<1x8x32xf32>
    %1 = vector.shape_cast %0 : vector<1x8x32xf32> to vector<8x32xf32>
    %2 = arith.truncf %1 : vector<8x32xf32> to vector<8x32xbf16>
    %c0_2 = arith.constant 0 : index
    %c0_3 = arith.constant 0 : index
    %3 = vector.load %arg2[%c0_2, %c0_3] : memref<32x32xbf16, #tpu.memory_space<vmem>>, vector<32x32xbf16>
    %cst = arith.constant dense<0.000000e+00> : vector<8x32xf32>
    %4 = tpu.matmul %2, %3, %cst {dimension_numbers = #tpu.dot_dimension_numbers<[1], [0], [0], [1], [0, 0, 1, 1], [], []>} : vector<8x32xbf16>, vector<32x32xbf16>, vector<8x32xf32> -> vector<8x32xf32>
    %c0_4 = arith.constant 0 : index
    %c0_5 = arith.constant 0 : index
    %5 = vector.load %arg3[%c0_4, %c0_5] : memref<8x32xf32, #tpu.memory_space<vmem>>, vector<8x32xf32>
    %6 = arith.addf %4, %5 : vector<8x32xf32>
    %c0_6 = arith.constant 0 : index
    %c0_7 = arith.constant 0 : index
    %c0_8 = arith.constant 0 : index
    %7 = vector.load %arg4[%c0_6, %c0_7, %c0_8] : memref<1x128x32xf32, #tpu.memory_space<vmem>>, vector<1x128x32xf32>
    %8 = vector.shape_cast %7 : vector<1x128x32xf32> to vector<128x32xf32>
    %9 = tpu.iota {dimensions = array<i32: 1>} : vector<8x8xi32>
    %10 = tpu.iota {dimensions = array<i32: 0>} : vector<8x8xi32>
    %c0_9 = arith.constant 0 : index
    %c0_10 = arith.constant 0 : index
    %c0_11 = arith.constant 0 : index
    %11 = vector.load %arg5[%c0_9, %c0_10, %c0_11] : memref<1x1x8xf32, #tpu.memory_space<vmem>>, vector<1x1x8xf32>
    %12 = vector.shape_cast %11 : vector<1x1x8xf32> to vector<1x8xf32>
    %cst_12 = arith.constant 0.000000e+00 : f32
    %13 = vector.broadcast %cst_12 : f32 to vector<1x8xf32>
    %14 = arith.cmpf ogt, %12, %13 : vector<1x8xf32>
    %15 = arith.cmpi sgt, %9, %10 : vector<8x8xi32>
    %16 = vector.broadcast %14 : vector<1x8xi1> to vector<8x8xi1>
    %17 = arith.ori %16, %15 : vector<8x8xi1>
    %cst_13 = arith.constant -9.99999984E+17 : f32
    %cst_14 = arith.constant 0.000000e+00 : f32
    %18 = vector.broadcast %cst_13 : f32 to vector<8x8xf32>
    %19 = vector.broadcast %cst_14 : f32 to vector<8x8xf32>
    %20 = arith.select %17, %18, %19 : vector<8x8xi1>, vector<8x8xf32>
    %c0_15 = arith.constant 0 : index
    %c0_16 = arith.constant 0 : index
    %c0_17 = arith.constant 0 : index
    %21 = vector.load %arg6[%c0_15, %c0_16, %c0_17] : memref<1x1x128xf32, #tpu.memory_space<vmem>>, vector<1x1x128xf32>
    %22 = vector.shape_cast %21 : vector<1x1x128xf32> to vector<1x128xf32>
    %cst_18 = arith.constant 0.000000e+00 : f32
    %23 = vector.broadcast %cst_18 : f32 to vector<1x128xf32>
    %24 = arith.cmpf ogt, %22, %23 : vector<1x128xf32>
    %cst_19 = arith.constant -9.99999984E+17 : f32
    %cst_20 = arith.constant 0.000000e+00 : f32
    %25 = vector.broadcast %cst_19 : f32 to vector<1x128xf32>
    %26 = vector.broadcast %cst_20 : f32 to vector<1x128xf32>
    %27 = arith.select %24, %25, %26 : vector<1x128xi1>, vector<1x128xf32>
    %c0_21 = arith.constant 0 : index
    %c0_22 = arith.constant 0 : index
    %28 = vector.load %arg7[%c0_21, %c0_22] : memref<3x32xf32, #tpu.memory_space<vmem>>, vector<3x32xf32>
    %c0_23 = arith.constant 0 : index
    %c0_24 = arith.constant 0 : index
    %29 = vector.load %arg8[%c0_23, %c0_24] : memref<3x32xf32, #tpu.memory_space<vmem>>, vector<3x32xf32>
    %30 = vector.extract_strided_slice %28 {offsets = [0, 0], sizes = [1, 32], strides = [1, 1]} : vector<3x32xf32> to vector<1x32xf32>
    %31 = vector.extract_strided_slice %29 {offsets = [0, 0], sizes = [1, 32], strides = [1, 1]} : vector<3x32xf32> to vector<1x32xf32>
    %cst_25 = arith.constant dense<0.000000e+00> : vector<8xf32>
    %32 = vector.multi_reduction <add>, %6, %cst_25 [1] : vector<8x32xf32> to vector<8xf32>
    %33 = vector.shape_cast %32 : vector<8xf32> to vector<8x1xf32>
    %cst_26 = arith.constant 3.200000e+01 : f32
    %34 = vector.broadcast %cst_26 : f32 to vector<8x1xf32>
    %35 = arith.divf %33, %34 : vector<8x1xf32>
    %36 = vector.broadcast %35 : vector<8x1xf32> to vector<8x32xf32>
    %37 = arith.subf %6, %36 : vector<8x32xf32>
    %38 = arith.mulf %37, %37 : vector<8x32xf32>
    %cst_27 = arith.constant dense<0.000000e+00> : vector<8xf32>
    %39 = vector.multi_reduction <add>, %38, %cst_27 [1] : vector<8x32xf32> to vector<8xf32>
    %40 = vector.shape_cast %39 : vector<8xf32> to vector<8x1xf32>
    %cst_28 = arith.constant 3.100000e+01 : f32
    %41 = vector.broadcast %cst_28 : f32 to vector<8x1xf32>
    %42 = arith.divf %40, %41 : vector<8x1xf32>
    %43 = vector.broadcast %35 : vector<8x1xf32> to vector<8x32xf32>
    %44 = arith.subf %6, %43 : vector<8x32xf32>
    %45 = math.sqrt %42 : vector<8x1xf32>
    %cst_29 = arith.constant 9.99999997E-7 : f32
    %46 = vector.broadcast %cst_29 : f32 to vector<8x1xf32>
    %47 = arith.addf %45, %46 : vector<8x1xf32>
    %48 = vector.broadcast %47 : vector<8x1xf32> to vector<8x32xf32>
    %49 = arith.divf %44, %48 : vector<8x32xf32>
    %50 = vector.broadcast %30 : vector<1x32xf32> to vector<8x32xf32>
    %51 = arith.mulf %49, %50 : vector<8x32xf32>
    %52 = vector.broadcast %31 : vector<1x32xf32> to vector<8x32xf32>
    %53 = arith.addf %51, %52 : vector<8x32xf32>
    %c0_30 = arith.constant 0 : index
    %c0_31 = arith.constant 0 : index
    %54 = vector.load %arg9[%c0_30, %c0_31] : memref<32x32xbf16, #tpu.memory_space<vmem>>, vector<32x32xbf16>
    %c0_32 = arith.constant 0 : index
    %c0_33 = arith.constant 0 : index
    %55 = vector.load %arg10[%c0_32, %c0_33] : memref<32x32xbf16, #tpu.memory_space<vmem>>, vector<32x32xbf16>
    %c0_34 = arith.constant 0 : index
    %c0_35 = arith.constant 0 : index
    %56 = vector.load %arg11[%c0_34, %c0_35] : memref<32x32xbf16, #tpu.memory_space<vmem>>, vector<32x32xbf16>
    %c0_36 = arith.constant 0 : index
    %c0_37 = arith.constant 0 : index
    %57 = vector.load %arg12[%c0_36, %c0_37] : memref<32x32xbf16, #tpu.memory_space<vmem>>, vector<32x32xbf16>
    %58 = arith.truncf %53 : vector<8x32xf32> to vector<8x32xbf16>
    %cst_38 = arith.constant dense<0.000000e+00> : vector<8x32xf32>
    %59 = tpu.matmul %58, %54, %cst_38 {dimension_numbers = #tpu.dot_dimension_numbers<[1], [0], [0], [1], [0, 0, 1, 1], [], []>} : vector<8x32xbf16>, vector<32x32xbf16>, vector<8x32xf32> -> vector<8x32xf32>
    %60 = arith.truncf %53 : vector<8x32xf32> to vector<8x32xbf16>
    %cst_39 = arith.constant dense<0.000000e+00> : vector<8x32xf32>
    %61 = tpu.matmul %60, %55, %cst_39 {dimension_numbers = #tpu.dot_dimension_numbers<[1], [0], [0], [1], [0, 0, 1, 1], [], []>} : vector<8x32xbf16>, vector<32x32xbf16>, vector<8x32xf32> -> vector<8x32xf32>
    %62 = arith.truncf %53 : vector<8x32xf32> to vector<8x32xbf16>
    %cst_40 = arith.constant dense<0.000000e+00> : vector<8x32xf32>
    %63 = tpu.matmul %62, %56, %cst_40 {dimension_numbers = #tpu.dot_dimension_numbers<[1], [0], [0], [1], [0, 0, 1, 1], [], []>} : vector<8x32xbf16>, vector<32x32xbf16>, vector<8x32xf32> -> vector<8x32xf32>
    %cst_41 = arith.constant 0.353553385 : f32
    %64 = vector.broadcast %cst_41 : f32 to vector<8x32xf32>
    %65 = arith.mulf %59, %64 : vector<8x32xf32>
    %66 = vector.extract_strided_slice %65 {offsets = [0, 0], sizes = [8, 8], strides = [1, 1]} : vector<8x32xf32> to vector<8x8xf32>
    %67 = vector.extract_strided_slice %65 {offsets = [0, 8], sizes = [8, 8], strides = [1, 1]} : vector<8x32xf32> to vector<8x8xf32>
    %68 = vector.extract_strided_slice %65 {offsets = [0, 16], sizes = [8, 8], strides = [1, 1]} : vector<8x32xf32> to vector<8x8xf32>
    %69 = vector.extract_strided_slice %65 {offsets = [0, 24], sizes = [8, 8], strides = [1, 1]} : vector<8x32xf32> to vector<8x8xf32>
    %70 = vector.shape_cast %66 : vector<8x8xf32> to vector<1x8x8xf32>
    %71 = vector.shape_cast %67 : vector<8x8xf32> to vector<1x8x8xf32>
    %72 = vector.shape_cast %68 : vector<8x8xf32> to vector<1x8x8xf32>
    %73 = vector.shape_cast %69 : vector<8x8xf32> to vector<1x8x8xf32>
    %74 = tpu.concatenate %70, %71, %72, %73 in 0 : vector<1x8x8xf32>, vector<1x8x8xf32>, vector<1x8x8xf32>, vector<1x8x8xf32> -> vector<4x8x8xf32>
    %75 = arith.truncf %74 : vector<4x8x8xf32> to vector<4x8x8xbf16>
    %76 = vector.extract_strided_slice %61 {offsets = [0, 0], sizes = [8, 8], strides = [1, 1]} : vector<8x32xf32> to vector<8x8xf32>
    %77 = vector.extract_strided_slice %61 {offsets = [0, 8], sizes = [8, 8], strides = [1, 1]} : vector<8x32xf32> to vector<8x8xf32>
    %78 = vector.extract_strided_slice %61 {offsets = [0, 16], sizes = [8, 8], strides = [1, 1]} : vector<8x32xf32> to vector<8x8xf32>
    %79 = vector.extract_strided_slice %61 {offsets = [0, 24], sizes = [8, 8], strides = [1, 1]} : vector<8x32xf32> to vector<8x8xf32>
    %80 = vector.shape_cast %76 : vector<8x8xf32> to vector<1x8x8xf32>
    %81 = vector.shape_cast %77 : vector<8x8xf32> to vector<1x8x8xf32>
    %82 = vector.shape_cast %78 : vector<8x8xf32> to vector<1x8x8xf32>
    %83 = vector.shape_cast %79 : vector<8x8xf32> to vector<1x8x8xf32>
    %84 = tpu.concatenate %80, %81, %82, %83 in 0 : vector<1x8x8xf32>, vector<1x8x8xf32>, vector<1x8x8xf32>, vector<1x8x8xf32> -> vector<4x8x8xf32>
    %85 = arith.truncf %84 : vector<4x8x8xf32> to vector<4x8x8xbf16>
    %86 = vector.extract_strided_slice %63 {offsets = [0, 0], sizes = [8, 8], strides = [1, 1]} : vector<8x32xf32> to vector<8x8xf32>
    %87 = vector.extract_strided_slice %63 {offsets = [0, 8], sizes = [8, 8], strides = [1, 1]} : vector<8x32xf32> to vector<8x8xf32>
    %88 = vector.extract_strided_slice %63 {offsets = [0, 16], sizes = [8, 8], strides = [1, 1]} : vector<8x32xf32> to vector<8x8xf32>
    %89 = vector.extract_strided_slice %63 {offsets = [0, 24], sizes = [8, 8], strides = [1, 1]} : vector<8x32xf32> to vector<8x8xf32>
    %90 = vector.shape_cast %86 : vector<8x8xf32> to vector<1x8x8xf32>
    %91 = vector.shape_cast %87 : vector<8x8xf32> to vector<1x8x8xf32>
    %92 = vector.shape_cast %88 : vector<8x8xf32> to vector<1x8x8xf32>
    %93 = vector.shape_cast %89 : vector<8x8xf32> to vector<1x8x8xf32>
    %94 = tpu.concatenate %90, %91, %92, %93 in 0 : vector<1x8x8xf32>, vector<1x8x8xf32>, vector<1x8x8xf32>, vector<1x8x8xf32> -> vector<4x8x8xf32>
    %95 = arith.truncf %94 : vector<4x8x8xf32> to vector<4x8x8xbf16>
    "tpu.trace_start"() <{level = 10 : i32, message = "hqd,hkd->hqk"}> : () -> ()
    %cst_42 = arith.constant dense<0.000000e+00> : vector<4x8x8xf32>
    %96 = tpu.matmul %75, %85, %cst_42 {dimension_numbers = #tpu.dot_dimension_numbers<[2], [2], [1], [1], [0, 0, 0, 1, 1, 1], [0], [0]>} : vector<4x8x8xbf16>, vector<4x8x8xbf16>, vector<4x8x8xf32> -> vector<4x8x8xf32>
    "tpu.trace_stop"() : () -> ()
    %97 = vector.shape_cast %20 : vector<8x8xf32> to vector<1x8x8xf32>
    %98 = vector.broadcast %97 : vector<1x8x8xf32> to vector<4x8x8xf32>
    %99 = arith.addf %96, %98 : vector<4x8x8xf32>
    %cst_43 = arith.constant dense<0xFF800000> : vector<4x8xf32>
    %100 = vector.multi_reduction <maximumf>, %99, %cst_43 [2] : vector<4x8x8xf32> to vector<4x8xf32>
    %101 = vector.shape_cast %100 : vector<4x8xf32> to vector<4x8x1xf32>
    %102 = vector.broadcast %101 : vector<4x8x1xf32> to vector<4x8x8xf32>
    %103 = arith.subf %99, %102 : vector<4x8x8xf32>
    %104 = math.exp %103 : vector<4x8x8xf32>
    %cst_44 = arith.constant dense<0.000000e+00> : vector<4x8xf32>
    %105 = vector.multi_reduction <add>, %104, %cst_44 [2] : vector<4x8x8xf32> to vector<4x8xf32>
    %106 = vector.shape_cast %105 : vector<4x8xf32> to vector<4x8x1xf32>
    %107 = tpu.reciprocal %106 {approx = true} : vector<4x8x1xf32> -> vector<4x8x1xf32>
    %108 = vector.broadcast %107 : vector<4x8x1xf32> to vector<4x8x8xf32>
    %109 = arith.mulf %104, %108 : vector<4x8x8xf32>
    %110 = arith.truncf %109 : vector<4x8x8xf32> to vector<4x8x8xbf16>
    "tpu.trace_start"() <{level = 10 : i32, message = "hqk,hkd->hqd"}> : () -> ()
    %cst_45 = arith.constant dense<0.000000e+00> : vector<4x8x8xf32>
    %111 = tpu.matmul %110, %95, %cst_45 {dimension_numbers = #tpu.dot_dimension_numbers<[2], [1], [1], [2], [0, 0, 0, 1, 1, 2], [0], [0]>} : vector<4x8x8xbf16>, vector<4x8x8xbf16>, vector<4x8x8xf32> -> vector<4x8x8xf32>
    %cst_46 = arith.constant 0.000000e+00 : f32
    "tpu.trace_stop"() : () -> ()
    %112 = vector.broadcast %cst_46 : f32 to vector<8x32xf32>
    %113 = vector.extract_strided_slice %111 {offsets = [0, 0, 0], sizes = [1, 8, 8], strides = [1, 1, 1]} : vector<4x8x8xf32> to vector<1x8x8xf32>
    %114 = vector.shape_cast %113 : vector<1x8x8xf32> to vector<8x8xf32>
    %115 = arith.truncf %114 : vector<8x8xf32> to vector<8x8xbf16>
    %116 = vector.extract_strided_slice %57 {offsets = [0, 0], sizes = [8, 32], strides = [1, 1]} : vector<32x32xbf16> to vector<8x32xbf16>
    %cst_47 = arith.constant dense<0.000000e+00> : vector<8x32xf32>
    %117 = tpu.matmul %115, %116, %cst_47 {dimension_numbers = #tpu.dot_dimension_numbers<[1], [0], [0], [1], [0, 0, 1, 1], [], []>} : vector<8x8xbf16>, vector<8x32xbf16>, vector<8x32xf32> -> vector<8x32xf32>
    %118 = arith.addf %112, %117 : vector<8x32xf32>
    %119 = vector.extract_strided_slice %111 {offsets = [1, 0, 0], sizes = [1, 8, 8], strides = [1, 1, 1]} : vector<4x8x8xf32> to vector<1x8x8xf32>
    %120 = vector.shape_cast %119 : vector<1x8x8xf32> to vector<8x8xf32>
    %121 = arith.truncf %120 : vector<8x8xf32> to vector<8x8xbf16>
    %122 = vector.extract_strided_slice %57 {offsets = [8, 0], sizes = [8, 32], strides = [1, 1]} : vector<32x32xbf16> to vector<8x32xbf16>
    %cst_48 = arith.constant dense<0.000000e+00> : vector<8x32xf32>
    %123 = tpu.matmul %121, %122, %cst_48 {dimension_numbers = #tpu.dot_dimension_numbers<[1], [0], [0], [1], [0, 0, 1, 1], [], []>} : vector<8x8xbf16>, vector<8x32xbf16>, vector<8x32xf32> -> vector<8x32xf32>
    %124 = arith.addf %118, %123 : vector<8x32xf32>
    %125 = vector.extract_strided_slice %111 {offsets = [2, 0, 0], sizes = [1, 8, 8], strides = [1, 1, 1]} : vector<4x8x8xf32> to vector<1x8x8xf32>
    %126 = vector.shape_cast %125 : vector<1x8x8xf32> to vector<8x8xf32>
    %127 = arith.truncf %126 : vector<8x8xf32> to vector<8x8xbf16>
    %128 = vector.extract_strided_slice %57 {offsets = [16, 0], sizes = [8, 32], strides = [1, 1]} : vector<32x32xbf16> to vector<8x32xbf16>
    %cst_49 = arith.constant dense<0.000000e+00> : vector<8x32xf32>
    %129 = tpu.matmul %127, %128, %cst_49 {dimension_numbers = #tpu.dot_dimension_numbers<[1], [0], [0], [1], [0, 0, 1, 1], [], []>} : vector<8x8xbf16>, vector<8x32xbf16>, vector<8x32xf32> -> vector<8x32xf32>
    %130 = arith.addf %124, %129 : vector<8x32xf32>
    %131 = vector.extract_strided_slice %111 {offsets = [3, 0, 0], sizes = [1, 8, 8], strides = [1, 1, 1]} : vector<4x8x8xf32> to vector<1x8x8xf32>
    %132 = vector.shape_cast %131 : vector<1x8x8xf32> to vector<8x8xf32>
    %133 = arith.truncf %132 : vector<8x8xf32> to vector<8x8xbf16>
    %134 = vector.extract_strided_slice %57 {offsets = [24, 0], sizes = [8, 32], strides = [1, 1]} : vector<32x32xbf16> to vector<8x32xbf16>
    %cst_50 = arith.constant dense<0.000000e+00> : vector<8x32xf32>
    %135 = tpu.matmul %133, %134, %cst_50 {dimension_numbers = #tpu.dot_dimension_numbers<[1], [0], [0], [1], [0, 0, 1, 1], [], []>} : vector<8x8xbf16>, vector<8x32xbf16>, vector<8x32xf32> -> vector<8x32xf32>
    %136 = arith.addf %130, %135 : vector<8x32xf32>
    %137 = arith.addf %6, %136 : vector<8x32xf32>
    %138 = vector.extract_strided_slice %28 {offsets = [1, 0], sizes = [1, 32], strides = [1, 1]} : vector<3x32xf32> to vector<1x32xf32>
    %139 = vector.extract_strided_slice %29 {offsets = [1, 0], sizes = [1, 32], strides = [1, 1]} : vector<3x32xf32> to vector<1x32xf32>
    %cst_51 = arith.constant dense<0.000000e+00> : vector<8xf32>
    %140 = vector.multi_reduction <add>, %137, %cst_51 [1] : vector<8x32xf32> to vector<8xf32>
    %141 = vector.shape_cast %140 : vector<8xf32> to vector<8x1xf32>
    %cst_52 = arith.constant 3.200000e+01 : f32
    %142 = vector.broadcast %cst_52 : f32 to vector<8x1xf32>
    %143 = arith.divf %141, %142 : vector<8x1xf32>
    %144 = vector.broadcast %143 : vector<8x1xf32> to vector<8x32xf32>
    %145 = arith.subf %137, %144 : vector<8x32xf32>
    %146 = arith.mulf %145, %145 : vector<8x32xf32>
    %cst_53 = arith.constant dense<0.000000e+00> : vector<8xf32>
    %147 = vector.multi_reduction <add>, %146, %cst_53 [1] : vector<8x32xf32> to vector<8xf32>
    %148 = vector.shape_cast %147 : vector<8xf32> to vector<8x1xf32>
    %cst_54 = arith.constant 3.100000e+01 : f32
    %149 = vector.broadcast %cst_54 : f32 to vector<8x1xf32>
    %150 = arith.divf %148, %149 : vector<8x1xf32>
    %151 = vector.broadcast %143 : vector<8x1xf32> to vector<8x32xf32>
    %152 = arith.subf %137, %151 : vector<8x32xf32>
    %153 = math.sqrt %150 : vector<8x1xf32>
    %cst_55 = arith.constant 9.99999997E-7 : f32
    %154 = vector.broadcast %cst_55 : f32 to vector<8x1xf32>
    %155 = arith.addf %153, %154 : vector<8x1xf32>
    %156 = vector.broadcast %155 : vector<8x1xf32> to vector<8x32xf32>
    %157 = arith.divf %152, %156 : vector<8x32xf32>
    %158 = vector.broadcast %138 : vector<1x32xf32> to vector<8x32xf32>
    %159 = arith.mulf %157, %158 : vector<8x32xf32>
    %160 = vector.broadcast %139 : vector<1x32xf32> to vector<8x32xf32>
    %161 = arith.addf %159, %160 : vector<8x32xf32>
    %c0_56 = arith.constant 0 : index
    %c0_57 = arith.constant 0 : index
    %162 = vector.load %arg13[%c0_56, %c0_57] : memref<32x32xbf16, #tpu.memory_space<vmem>>, vector<32x32xbf16>
    %c0_58 = arith.constant 0 : index
    %c0_59 = arith.constant 0 : index
    %163 = vector.load %arg14[%c0_58, %c0_59] : memref<32x32xbf16, #tpu.memory_space<vmem>>, vector<32x32xbf16>
    %c0_60 = arith.constant 0 : index
    %c0_61 = arith.constant 0 : index
    %164 = vector.load %arg15[%c0_60, %c0_61] : memref<32x32xbf16, #tpu.memory_space<vmem>>, vector<32x32xbf16>
    %c0_62 = arith.constant 0 : index
    %c0_63 = arith.constant 0 : index
    %165 = vector.load %arg16[%c0_62, %c0_63] : memref<32x32xbf16, #tpu.memory_space<vmem>>, vector<32x32xbf16>
    %166 = arith.truncf %161 : vector<8x32xf32> to vector<8x32xbf16>
    %cst_64 = arith.constant dense<0.000000e+00> : vector<8x32xf32>
    %167 = tpu.matmul %166, %162, %cst_64 {dimension_numbers = #tpu.dot_dimension_numbers<[1], [0], [0], [1], [0, 0, 1, 1], [], []>} : vector<8x32xbf16>, vector<32x32xbf16>, vector<8x32xf32> -> vector<8x32xf32>
    %168 = arith.truncf %8 : vector<128x32xf32> to vector<128x32xbf16>
    %cst_65 = arith.constant dense<0.000000e+00> : vector<128x32xf32>
    %169 = tpu.matmul %168, %163, %cst_65 {dimension_numbers = #tpu.dot_dimension_numbers<[1], [0], [0], [1], [0, 0, 1, 1], [], []>} : vector<128x32xbf16>, vector<32x32xbf16>, vector<128x32xf32> -> vector<128x32xf32>
    %170 = arith.truncf %8 : vector<128x32xf32> to vector<128x32xbf16>
    %cst_66 = arith.constant dense<0.000000e+00> : vector<128x32xf32>
    %171 = tpu.matmul %170, %164, %cst_66 {dimension_numbers = #tpu.dot_dimension_numbers<[1], [0], [0], [1], [0, 0, 1, 1], [], []>} : vector<128x32xbf16>, vector<32x32xbf16>, vector<128x32xf32> -> vector<128x32xf32>
    %cst_67 = arith.constant 0.353553385 : f32
    %172 = vector.broadcast %cst_67 : f32 to vector<8x32xf32>
    %173 = arith.mulf %167, %172 : vector<8x32xf32>
    %174 = vector.extract_strided_slice %173 {offsets = [0, 0], sizes = [8, 8], strides = [1, 1]} : vector<8x32xf32> to vector<8x8xf32>
    %175 = vector.extract_strided_slice %173 {offsets = [0, 8], sizes = [8, 8], strides = [1, 1]} : vector<8x32xf32> to vector<8x8xf32>
    %176 = vector.extract_strided_slice %173 {offsets = [0, 16], sizes = [8, 8], strides = [1, 1]} : vector<8x32xf32> to vector<8x8xf32>
    %177 = vector.extract_strided_slice %173 {offsets = [0, 24], sizes = [8, 8], strides = [1, 1]} : vector<8x32xf32> to vector<8x8xf32>
    %178 = vector.shape_cast %174 : vector<8x8xf32> to vector<1x8x8xf32>
    %179 = vector.shape_cast %175 : vector<8x8xf32> to vector<1x8x8xf32>
    %180 = vector.shape_cast %176 : vector<8x8xf32> to vector<1x8x8xf32>
    %181 = vector.shape_cast %177 : vector<8x8xf32> to vector<1x8x8xf32>
    %182 = tpu.concatenate %178, %179, %180, %181 in 0 : vector<1x8x8xf32>, vector<1x8x8xf32>, vector<1x8x8xf32>, vector<1x8x8xf32> -> vector<4x8x8xf32>
    %183 = arith.truncf %182 : vector<4x8x8xf32> to vector<4x8x8xbf16>
    %184 = vector.extract_strided_slice %169 {offsets = [0, 0], sizes = [128, 8], strides = [1, 1]} : vector<128x32xf32> to vector<128x8xf32>
    %185 = vector.extract_strided_slice %169 {offsets = [0, 8], sizes = [128, 8], strides = [1, 1]} : vector<128x32xf32> to vector<128x8xf32>
    %186 = vector.extract_strided_slice %169 {offsets = [0, 16], sizes = [128, 8], strides = [1, 1]} : vector<128x32xf32> to vector<128x8xf32>
    %187 = vector.extract_strided_slice %169 {offsets = [0, 24], sizes = [128, 8], strides = [1, 1]} : vector<128x32xf32> to vector<128x8xf32>
    %188 = vector.shape_cast %184 : vector<128x8xf32> to vector<1x128x8xf32>
    %189 = vector.shape_cast %185 : vector<128x8xf32> to vector<1x128x8xf32>
    %190 = vector.shape_cast %186 : vector<128x8xf32> to vector<1x128x8xf32>
    %191 = vector.shape_cast %187 : vector<128x8xf32> to vector<1x128x8xf32>
    %192 = tpu.concatenate %188, %189, %190, %191 in 0 : vector<1x128x8xf32>, vector<1x128x8xf32>, vector<1x128x8xf32>, vector<1x128x8xf32> -> vector<4x128x8xf32>
    %193 = arith.truncf %192 : vector<4x128x8xf32> to vector<4x128x8xbf16>
    %194 = vector.extract_strided_slice %171 {offsets = [0, 0], sizes = [128, 8], strides = [1, 1]} : vector<128x32xf32> to vector<128x8xf32>
    %195 = vector.extract_strided_slice %171 {offsets = [0, 8], sizes = [128, 8], strides = [1, 1]} : vector<128x32xf32> to vector<128x8xf32>
    %196 = vector.extract_strided_slice %171 {offsets = [0, 16], sizes = [128, 8], strides = [1, 1]} : vector<128x32xf32> to vector<128x8xf32>
    %197 = vector.extract_strided_slice %171 {offsets = [0, 24], sizes = [128, 8], strides = [1, 1]} : vector<128x32xf32> to vector<128x8xf32>
    %198 = vector.shape_cast %194 : vector<128x8xf32> to vector<1x128x8xf32>
    %199 = vector.shape_cast %195 : vector<128x8xf32> to vector<1x128x8xf32>
    %200 = vector.shape_cast %196 : vector<128x8xf32> to vector<1x128x8xf32>
    %201 = vector.shape_cast %197 : vector<128x8xf32> to vector<1x128x8xf32>
    %202 = tpu.concatenate %198, %199, %200, %201 in 0 : vector<1x128x8xf32>, vector<1x128x8xf32>, vector<1x128x8xf32>, vector<1x128x8xf32> -> vector<4x128x8xf32>
    %203 = arith.truncf %202 : vector<4x128x8xf32> to vector<4x128x8xbf16>
    "tpu.trace_start"() <{level = 10 : i32, message = "hqd,hkd->hqk"}> : () -> ()
    %cst_68 = arith.constant dense<0.000000e+00> : vector<4x8x128xf32>
    %204 = tpu.matmul %183, %193, %cst_68 {dimension_numbers = #tpu.dot_dimension_numbers<[2], [2], [1], [1], [0, 0, 0, 1, 1, 1], [0], [0]>} : vector<4x8x8xbf16>, vector<4x128x8xbf16>, vector<4x8x128xf32> -> vector<4x8x128xf32>
    "tpu.trace_stop"() : () -> ()
    %205 = vector.shape_cast %27 : vector<1x128xf32> to vector<1x1x128xf32>
    %206 = vector.broadcast %205 : vector<1x1x128xf32> to vector<4x8x128xf32>
    %207 = arith.addf %204, %206 : vector<4x8x128xf32>
    %cst_69 = arith.constant dense<0xFF800000> : vector<4x8xf32>
    %208 = vector.multi_reduction <maximumf>, %207, %cst_69 [2] : vector<4x8x128xf32> to vector<4x8xf32>
    %209 = vector.shape_cast %208 : vector<4x8xf32> to vector<4x8x1xf32>
    %210 = vector.broadcast %209 : vector<4x8x1xf32> to vector<4x8x128xf32>
    %211 = arith.subf %207, %210 : vector<4x8x128xf32>
    %212 = math.exp %211 : vector<4x8x128xf32>
    %cst_70 = arith.constant dense<0.000000e+00> : vector<4x8xf32>
    %213 = vector.multi_reduction <add>, %212, %cst_70 [2] : vector<4x8x128xf32> to vector<4x8xf32>
    %214 = vector.shape_cast %213 : vector<4x8xf32> to vector<4x8x1xf32>
    %215 = tpu.reciprocal %214 {approx = true} : vector<4x8x1xf32> -> vector<4x8x1xf32>
    %216 = vector.broadcast %215 : vector<4x8x1xf32> to vector<4x8x128xf32>
    %217 = arith.mulf %212, %216 : vector<4x8x128xf32>
    %218 = arith.truncf %217 : vector<4x8x128xf32> to vector<4x8x128xbf16>
    "tpu.trace_start"() <{level = 10 : i32, message = "hqk,hkd->hqd"}> : () -> ()
    %cst_71 = arith.constant dense<0.000000e+00> : vector<4x8x8xf32>
    %219 = tpu.matmul %218, %203, %cst_71 {dimension_numbers = #tpu.dot_dimension_numbers<[2], [1], [1], [2], [0, 0, 0, 1, 1, 2], [0], [0]>} : vector<4x8x128xbf16>, vector<4x128x8xbf16>, vector<4x8x8xf32> -> vector<4x8x8xf32>
    %cst_72 = arith.constant 0.000000e+00 : f32
    "tpu.trace_stop"() : () -> ()
    %220 = vector.broadcast %cst_72 : f32 to vector<8x32xf32>
    %221 = vector.extract_strided_slice %219 {offsets = [0, 0, 0], sizes = [1, 8, 8], strides = [1, 1, 1]} : vector<4x8x8xf32> to vector<1x8x8xf32>
    %222 = vector.shape_cast %221 : vector<1x8x8xf32> to vector<8x8xf32>
    %223 = arith.truncf %222 : vector<8x8xf32> to vector<8x8xbf16>
    %224 = vector.extract_strided_slice %165 {offsets = [0, 0], sizes = [8, 32], strides = [1, 1]} : vector<32x32xbf16> to vector<8x32xbf16>
    %cst_73 = arith.constant dense<0.000000e+00> : vector<8x32xf32>
    %225 = tpu.matmul %223, %224, %cst_73 {dimension_numbers = #tpu.dot_dimension_numbers<[1], [0], [0], [1], [0, 0, 1, 1], [], []>} : vector<8x8xbf16>, vector<8x32xbf16>, vector<8x32xf32> -> vector<8x32xf32>
    %226 = arith.addf %220, %225 : vector<8x32xf32>
    %227 = vector.extract_strided_slice %219 {offsets = [1, 0, 0], sizes = [1, 8, 8], strides = [1, 1, 1]} : vector<4x8x8xf32> to vector<1x8x8xf32>
    %228 = vector.shape_cast %227 : vector<1x8x8xf32> to vector<8x8xf32>
    %229 = arith.truncf %228 : vector<8x8xf32> to vector<8x8xbf16>
    %230 = vector.extract_strided_slice %165 {offsets = [8, 0], sizes = [8, 32], strides = [1, 1]} : vector<32x32xbf16> to vector<8x32xbf16>
    %cst_74 = arith.constant dense<0.000000e+00> : vector<8x32xf32>
    %231 = tpu.matmul %229, %230, %cst_74 {dimension_numbers = #tpu.dot_dimension_numbers<[1], [0], [0], [1], [0, 0, 1, 1], [], []>} : vector<8x8xbf16>, vector<8x32xbf16>, vector<8x32xf32> -> vector<8x32xf32>
    %232 = arith.addf %226, %231 : vector<8x32xf32>
    %233 = vector.extract_strided_slice %219 {offsets = [2, 0, 0], sizes = [1, 8, 8], strides = [1, 1, 1]} : vector<4x8x8xf32> to vector<1x8x8xf32>
    %234 = vector.shape_cast %233 : vector<1x8x8xf32> to vector<8x8xf32>
    %235 = arith.truncf %234 : vector<8x8xf32> to vector<8x8xbf16>
    %236 = vector.extract_strided_slice %165 {offsets = [16, 0], sizes = [8, 32], strides = [1, 1]} : vector<32x32xbf16> to vector<8x32xbf16>
    %cst_75 = arith.constant dense<0.000000e+00> : vector<8x32xf32>
    %237 = tpu.matmul %235, %236, %cst_75 {dimension_numbers = #tpu.dot_dimension_numbers<[1], [0], [0], [1], [0, 0, 1, 1], [], []>} : vector<8x8xbf16>, vector<8x32xbf16>, vector<8x32xf32> -> vector<8x32xf32>
    %238 = arith.addf %232, %237 : vector<8x32xf32>
    %239 = vector.extract_strided_slice %219 {offsets = [3, 0, 0], sizes = [1, 8, 8], strides = [1, 1, 1]} : vector<4x8x8xf32> to vector<1x8x8xf32>
    %240 = vector.shape_cast %239 : vector<1x8x8xf32> to vector<8x8xf32>
    %241 = arith.truncf %240 : vector<8x8xf32> to vector<8x8xbf16>
    %242 = vector.extract_strided_slice %165 {offsets = [24, 0], sizes = [8, 32], strides = [1, 1]} : vector<32x32xbf16> to vector<8x32xbf16>
    %cst_76 = arith.constant dense<0.000000e+00> : vector<8x32xf32>
    %243 = tpu.matmul %241, %242, %cst_76 {dimension_numbers = #tpu.dot_dimension_numbers<[1], [0], [0], [1], [0, 0, 1, 1], [], []>} : vector<8x8xbf16>, vector<8x32xbf16>, vector<8x32xf32> -> vector<8x32xf32>
    %244 = arith.addf %238, %243 : vector<8x32xf32>
    %245 = arith.addf %137, %244 : vector<8x32xf32>
    %246 = vector.extract_strided_slice %28 {offsets = [2, 0], sizes = [1, 32], strides = [1, 1]} : vector<3x32xf32> to vector<1x32xf32>
    %247 = vector.extract_strided_slice %29 {offsets = [2, 0], sizes = [1, 32], strides = [1, 1]} : vector<3x32xf32> to vector<1x32xf32>
    %cst_77 = arith.constant dense<0.000000e+00> : vector<8xf32>
    %248 = vector.multi_reduction <add>, %245, %cst_77 [1] : vector<8x32xf32> to vector<8xf32>
    %249 = vector.shape_cast %248 : vector<8xf32> to vector<8x1xf32>
    %cst_78 = arith.constant 3.200000e+01 : f32
    %250 = vector.broadcast %cst_78 : f32 to vector<8x1xf32>
    %251 = arith.divf %249, %250 : vector<8x1xf32>
    %252 = vector.broadcast %251 : vector<8x1xf32> to vector<8x32xf32>
    %253 = arith.subf %245, %252 : vector<8x32xf32>
    %254 = arith.mulf %253, %253 : vector<8x32xf32>
    %cst_79 = arith.constant dense<0.000000e+00> : vector<8xf32>
    %255 = vector.multi_reduction <add>, %254, %cst_79 [1] : vector<8x32xf32> to vector<8xf32>
    %256 = vector.shape_cast %255 : vector<8xf32> to vector<8x1xf32>
    %cst_80 = arith.constant 3.100000e+01 : f32
    %257 = vector.broadcast %cst_80 : f32 to vector<8x1xf32>
    %258 = arith.divf %256, %257 : vector<8x1xf32>
    %259 = vector.broadcast %251 : vector<8x1xf32> to vector<8x32xf32>
    %260 = arith.subf %245, %259 : vector<8x32xf32>
    %261 = math.sqrt %258 : vector<8x1xf32>
    %cst_81 = arith.constant 9.99999997E-7 : f32
    %262 = vector.broadcast %cst_81 : f32 to vector<8x1xf32>
    %263 = arith.addf %261, %262 : vector<8x1xf32>
    %264 = vector.broadcast %263 : vector<8x1xf32> to vector<8x32xf32>
    %265 = arith.divf %260, %264 : vector<8x32xf32>
    %266 = vector.broadcast %246 : vector<1x32xf32> to vector<8x32xf32>
    %267 = arith.mulf %265, %266 : vector<8x32xf32>
    %268 = vector.broadcast %247 : vector<1x32xf32> to vector<8x32xf32>
    %269 = arith.addf %267, %268 : vector<8x32xf32>
    %270 = arith.truncf %269 : vector<8x32xf32> to vector<8x32xbf16>
    %c0_82 = arith.constant 0 : index
    %c0_83 = arith.constant 0 : index
    %271 = vector.load %arg17[%c0_82, %c0_83] : memref<32x64xbf16, #tpu.memory_space<vmem>>, vector<32x64xbf16>
    %cst_84 = arith.constant dense<0.000000e+00> : vector<8x64xf32>
    %272 = tpu.matmul %270, %271, %cst_84 {dimension_numbers = #tpu.dot_dimension_numbers<[1], [0], [0], [1], [0, 0, 1, 1], [], []>} : vector<8x32xbf16>, vector<32x64xbf16>, vector<8x64xf32> -> vector<8x64xf32>
    %c0_85 = arith.constant 0 : index
    %c0_86 = arith.constant 0 : index
    %273 = vector.load %arg18[%c0_85, %c0_86] : memref<1x64xf32, #tpu.memory_space<vmem>>, vector<1x64xf32>
    %274 = vector.broadcast %273 : vector<1x64xf32> to vector<8x64xf32>
    %275 = arith.addf %272, %274 : vector<8x64xf32>
    %cst_87 = arith.constant 0.000000e+00 : f32
    %276 = vector.broadcast %cst_87 : f32 to vector<8x64xf32>
    %277 = arith.maximumf %275, %276 : vector<8x64xf32>
    %278 = arith.truncf %277 : vector<8x64xf32> to vector<8x64xbf16>
    %c0_88 = arith.constant 0 : index
    %c0_89 = arith.constant 0 : index
    %279 = vector.load %arg19[%c0_88, %c0_89] : memref<64x32xbf16, #tpu.memory_space<vmem>>, vector<64x32xbf16>
    %cst_90 = arith.constant dense<0.000000e+00> : vector<8x32xf32>
    %280 = tpu.matmul %278, %279, %cst_90 {dimension_numbers = #tpu.dot_dimension_numbers<[1], [0], [0], [1], [0, 0, 1, 1], [], []>} : vector<8x64xbf16>, vector<64x32xbf16>, vector<8x32xf32> -> vector<8x32xf32>
    %c0_91 = arith.constant 0 : index
    %c0_92 = arith.constant 0 : index
    %281 = vector.load %arg20[%c0_91, %c0_92] : memref<1x32xf32, #tpu.memory_space<vmem>>, vector<1x32xf32>
    %282 = vector.broadcast %281 : vector<1x32xf32> to vector<8x32xf32>
    %283 = arith.addf %280, %282 : vector<8x32xf32>
    %284 = arith.addf %245, %283 : vector<8x32xf32>
    %c0_93 = arith.constant 0 : index
    %c0_94 = arith.constant 0 : index
    %c0_95 = arith.constant 0 : index
    %285 = vector.load %arg21[%c0_93, %c0_94, %c0_95] : memref<1x8x32xf32, #tpu.memory_space<vmem>>, vector<1x8x32xf32>
    %286 = vector.shape_cast %285 : vector<1x8x32xf32> to vector<8x32xf32>
    %287 = vector.shape_cast %284 : vector<8x32xf32> to vector<1x8x32xf32>
    tpu.vector_store %arg21[%c0_93, %c0_94, %c0_95], %287 {strides = array<i32>} : memref<1x8x32xf32, #tpu.memory_space<vmem>>, vector<1x8x32xf32>,
    return
  }
  func.func @transform_0(%arg0: i32) -> (i32, i32, i32) {
    %c0_i32 = arith.constant 0 : i32
    %c0_i32_0 = arith.constant 0 : i32
    %c0_i32_1 = arith.constant 0 : i32
    return %arg0, %c0_i32, %c0_i32_0 : i32, i32, i32
  }
  func.func @transform_1(%arg0: i32) -> (i32, i32) {
    %c0_i32 = arith.constant 0 : i32
    %c0_i32_0 = arith.constant 0 : i32
    %c0_i32_1 = arith.constant 0 : i32
    return %c0_i32, %c0_i32_0 : i32, i32
  }
  func.func @transform_2(%arg0: i32) -> (i32, i32) {
    %c0_i32 = arith.constant 0 : i32
    %c0_i32_0 = arith.constant 0 : i32
    %c0_i32_1 = arith.constant 0 : i32
    return %c0_i32, %c0_i32_0 : i32, i32
  }
  func.func @transform_3(%arg0: i32) -> (i32, i32, i32) {
    %c0_i32 = arith.constant 0 : i32
    %c0_i32_0 = arith.constant 0 : i32
    %c0_i32_1 = arith.constant 0 : i32
    return %arg0, %c0_i32, %c0_i32_0 : i32, i32, i32
  }
  func.func @transform_4(%arg0: i32) -> (i32, i32, i32) {
    %c0_i32 = arith.constant 0 : i32
    %c0_i32_0 = arith.constant 0 : i32
    %c0_i32_1 = arith.constant 0 : i32
    return %arg0, %c0_i32, %c0_i32_0 : i32, i32, i32
  }
  func.func @transform_5(%arg0: i32) -> (i32, i32, i32) {
    %c0_i32 = arith.constant 0 : i32
    %c0_i32_0 = arith.constant 0 : i32
    %c0_i32_1 = arith.constant 0 : i32
    return %arg0, %c0_i32, %c0_i32_0 : i32, i32, i32
  }
  func.func @transform_6(%arg0: i32) -> (i32, i32) {
    %c0_i32 = arith.constant 0 : i32
    %c0_i32_0 = arith.constant 0 : i32
    %c0_i32_1 = arith.constant 0 : i32
    return %c0_i32, %c0_i32_0 : i32, i32
  }
  func.func @transform_7(%arg0: i32) -> (i32, i32) {
    %c0_i32 = arith.constant 0 : i32
    %c0_i32_0 = arith.constant 0 : i32
    %c0_i32_1 = arith.constant 0 : i32
    return %c0_i32, %c0_i32_0 : i32, i32
  }
  func.func @transform_8(%arg0: i32) -> (i32, i32) {
    %c0_i32 = arith.constant 0 : i32
    %c0_i32_0 = arith.constant 0 : i32
    %c0_i32_1 = arith.constant 0 : i32
    return %c0_i32, %c0_i32_0 : i32, i32
  }
  func.func @transform_9(%arg0: i32) -> (i32, i32) {
    %c0_i32 = arith.constant 0 : i32
    %c0_i32_0 = arith.constant 0 : i32
    %c0_i32_1 = arith.constant 0 : i32
    return %c0_i32, %c0_i32_0 : i32, i32
  }
  func.func @transform_10(%arg0: i32) -> (i32, i32) {
    %c0_i32 = arith.constant 0 : i32
    %c0_i32_0 = arith.constant 0 : i32
    %c0_i32_1 = arith.constant 0 : i32
    return %c0_i32, %c0_i32_0 : i32, i32
  }
  func.func @transform_11(%arg0: i32) -> (i32, i32) {
    %c0_i32 = arith.constant 0 : i32
    %c0_i32_0 = arith.constant 0 : i32
    %c0_i32_1 = arith.constant 0 : i32
    return %c0_i32, %c0_i32_0 : i32, i32
  }
  func.func @transform_12(%arg0: i32) -> (i32, i32) {
    %c0_i32 = arith.constant 0 : i32
    %c0_i32_0 = arith.constant 0 : i32
    %c0_i32_1 = arith.constant 0 : i32
    return %c0_i32, %c0_i32_0 : i32, i32
  }
  func.func @transform_13(%arg0: i32) -> (i32, i32) {
    %c0_i32 = arith.constant 0 : i32
    %c0_i32_0 = arith.constant 0 : i32
    %c0_i32_1 = arith.constant 0 : i32
    return %c0_i32, %c0_i32_0 : i32, i32
  }
  func.func @transform_14(%arg0: i32) -> (i32, i32) {
    %c0_i32 = arith.constant 0 : i32
    %c0_i32_0 = arith.constant 0 : i32
    %c0_i32_1 = arith.constant 0 : i32
    return %c0_i32, %c0_i32_0 : i32, i32
  }
  func.func @transform_15(%arg0: i32) -> (i32, i32) {
    %c0_i32 = arith.constant 0 : i32
    %c0_i32_0 = arith.constant 0 : i32
    %c0_i32_1 = arith.constant 0 : i32
    return %c0_i32, %c0_i32_0 : i32, i32
  }
  func.func @transform_16(%arg0: i32) -> (i32, i32) {
    %c0_i32 = arith.constant 0 : i32
    %c0_i32_0 = arith.constant 0 : i32
    %c0_i32_1 = arith.constant 0 : i32
    return %c0_i32, %c0_i32_0 : i32, i32
  }
  func.func @transform_17(%arg0: i32) -> (i32, i32) {
    %c0_i32 = arith.constant 0 : i32
    %c0_i32_0 = arith.constant 0 : i32
    %c0_i32_1 = arith.constant 0 : i32
    return %c0_i32, %c0_i32_0 : i32, i32
  }
  func.func @transform_18(%arg0: i32) -> (i32, i32) {
    %c0_i32 = arith.constant 0 : i32
    %c0_i32_0 = arith.constant 0 : i32
    %c0_i32_1 = arith.constant 0 : i32
    return %c0_i32, %c0_i32_0 : i32, i32
  }
  func.func @transform_19(%arg0: i32) -> (i32, i32) {
    %c0_i32 = arith.constant 0 : i32
    %c0_i32_0 = arith.constant 0 : i32
    %c0_i32_1 = arith.constant 0 : i32
    return %c0_i32, %c0_i32_0 : i32, i32
  }
  func.func @transform_20(%arg0: i32) -> (i32, i32, i32) {
    %c0_i32 = arith.constant 0 : i32
    %c0_i32_0 = arith.constant 0 : i32
    %c0_i32_1 = arith.constant 0 : i32
    return %arg0, %c0_i32, %c0_i32_0 : i32, i32, i32
  }
}

</mosaic_0001>

<llo_original>
// kernel: tpu_custom_call.1
$region0: #{tpu_custom_call.1}
  #allocation0 [shape = 'u32[]', space=smem, size = 0x4, offset = 0x4, fixed_abs, tag = 'smem constant byte address 0x4 - core index']
  #allocation1 [shape = 'u32[72,128]{1,0:T(1,128)}', space=vmem, size = 0x9000, scoped, tag = 'internal scratch']
  %s0 = inlined_call_operand.hbm [shape: f32[8,128], index: 0, kind: input, shape index: {}]
  %s1 = inlined_call_operand.hbm [shape: f32[8,128], index: 1, kind: output, shape index: {}]
  %s2 = sld [smem:[#allocation0]]
  $region18: #{tpu_custom_call.1} parent=0
    _
  %s4 = ssub.s32 1, %s2
  %s5 = scalar_select 0, %s4, %s2
  $region1: #{tpu_custom_call.1} parent=0
    #allocation2 [shape = 'u8[4096]{0}', space=vmem, size = 0x1000, scoped, tag = 'input window, operand 0, single buffered']
    #allocation3 [shape = 's32[1]{0}', space=sflag, size = 0x4, scoped, tag = 'scoped memory for tpu_custom_call.1']
    #allocation4 [shape = 's32[1]{0}', space=sflag, size = 0x4, scoped, tag = 'scoped memory for tpu_custom_call.1']
    #allocation5 [shape = 'u8[4096]{0}', space=vmem, size = 0x1000, scoped, tag = 'output window, operand 0, single buffered']
    %6 = vsyncpa [#allocation3], 0
    %7 = vsyncpa [#allocation4], 0
    // Predicated region
    $region2: #{tpu_custom_call.1} parent=1 // pred_check
      _
    $region3: #{tpu_custom_call.1} parent=1 // pred_check_branch
      %9 = sbr.rel (0) target = $region5
    $region4: #{tpu_custom_call.1} parent=1 // pred_region
      %11 = vsyncadd [#allocation3], 0
      %s13 = sshll.u32 %s0, 4
      %s14 = int_to_ptr.hbm [resolvable:$true] %s13
      %s15 = sshll.u32 [#allocation2], 4
      %s16 = int_to_ptr.vmem [resolvable:$true] %s15
      %18 = dma.hbm_to_vmem [thread:$0]  %s14, 128, %s16, [#allocation3]
    $region5: #{tpu_custom_call.1} parent=1 // pred_fallthru
      _
    // Predicated region
    $region6: #{tpu_custom_call.1} parent=1 // pred_check
      _
    $region7: #{tpu_custom_call.1} parent=1 // pred_check_branch
      %20 = sbr.rel (0) target = $region9
    $region8: #{tpu_custom_call.1} parent=1 // pred_region
      %22 = dma.done [#allocation3], 128
    $region9: #{tpu_custom_call.1} parent=1 // pred_fallthru
      _
    %v23 = vld [vmem:[#allocation2] sm:$0xff]
    %24 = vst [vmem:[#allocation5] sm:$0xff] %v23
    // Predicated region
    $region10: #{tpu_custom_call.1} parent=1 // pred_check
      _
    $region11: #{tpu_custom_call.1} parent=1 // pred_check_branch
      %26 = sbr.rel (0) target = $region13
    $region12: #{tpu_custom_call.1} parent=1 // pred_region
      %28 = vsyncadd [#allocation4], 0
      %s30 = sshll.u32 [#allocation5], 4
      %s31 = int_to_ptr.vmem [resolvable:$true] %s30
      %s32 = sshll.u32 %s1, 4
      %s33 = int_to_ptr.hbm [resolvable:$true] %s32
      %35 = dma.vmem_to_hbm [thread:$0]  %s31, 128, %s33, [#allocation4]
    $region13: #{tpu_custom_call.1} parent=1 // pred_fallthru
      _
    // Predicated region
    $region14: #{tpu_custom_call.1} parent=1 // pred_check
      _
    $region15: #{tpu_custom_call.1} parent=1 // pred_check_branch
      %37 = sbr.rel (0) target = $region17
    $region16: #{tpu_custom_call.1} parent=1 // pred_region
      %39 = dma.done [#allocation4], 128
    $region17: #{tpu_custom_call.1} parent=1 // pred_fallthru
      _
    %40 = vsyncpa [#allocation3], 1
    %41 = vsyncpa [#allocation4], 1

// kernel: tpu_custom_call.1
$region0: #{tpu_custom_call.1}
  #allocation0 [shape = 'u32[]', space=smem, size = 0x4, offset = 0x4, fixed_abs, tag = 'smem constant byte address 0x4 - core index']
  #allocation1 [shape = 'u32[72,128]{1,0:T(1,128)}', space=vmem, size = 0x9000, scoped, tag = 'internal scratch']
  %s0 = inlined_call_operand.vmem [shape: f32[2,8,32], index: 0, kind: input, shape index: {}]
  %s1 = inlined_call_operand.vmem [shape: bf16[32,32], index: 1, kind: input, shape index: {}]
  %s2 = inlined_call_operand.vmem [shape: f32[8,32], index: 2, kind: input, shape index: {}]
  %s3 = inlined_call_operand.vmem [shape: f32[2,128,32], index: 3, kind: input, shape index: {}]
  %s4 = inlined_call_operand.vmem [shape: f32[2,1,8], index: 4, kind: input, shape index: {}]
  %s5 = inlined_call_operand.vmem [shape: f32[2,1,128], index: 5, kind: input, shape index: {}]
  %s6 = inlined_call_operand.vmem [shape: f32[3,32], index: 6, kind: input, shape index: {}]
  %s7 = inlined_call_operand.vmem [shape: f32[3,32], index: 7, kind: input, shape index: {}]
  %s8 = inlined_call_operand.vmem [shape: bf16[32,32], index: 8, kind: input, shape index: {}]
  %s9 = inlined_call_operand.vmem [shape: bf16[32,32], index: 9, kind: input, shape index: {}]
  %s10 = inlined_call_operand.vmem [shape: bf16[32,32], index: 10, kind: input, shape index: {}]
  %s11 = inlined_call_operand.vmem [shape: bf16[32,32], index: 11, kind: input, shape index: {}]
  %s12 = inlined_call_operand.vmem [shape: bf16[32,32], index: 12, kind: input, shape index: {}]
  %s13 = inlined_call_operand.vmem [shape: bf16[32,32], index: 13, kind: input, shape index: {}]
  %s14 = inlined_call_operand.vmem [shape: bf16[32,32], index: 14, kind: input, shape index: {}]
  %s15 = inlined_call_operand.vmem [shape: bf16[32,32], index: 15, kind: input, shape index: {}]
  %s16 = inlined_call_operand.vmem [shape: bf16[32,64], index: 16, kind: input, shape index: {}]
  %s17 = inlined_call_operand.vmem [shape: f32[1,64], index: 17, kind: input, shape index: {}]
  %s18 = inlined_call_operand.vmem [shape: bf16[64,32], index: 18, kind: input, shape index: {}]
  %s19 = inlined_call_operand.vmem [shape: f32[1,32], index: 19, kind: input, shape index: {}]
  %s20 = inlined_call_operand.hbm [shape: f32[2,8,32], index: 20, kind: output, shape index: {}]
  %s21 = sld [smem:[#allocation0]]
  $region113: #{tpu_custom_call.1} parent=0
    _
  %s23 = ssub.s32 1, %s21
  %s24 = scalar_select 0, %s23, %s21
  $region1: #{tpu_custom_call.1} parent=0
    #allocation2 [shape = 'u8[8192]{0}', space=vmem, size = 0x2000, scoped, tag = 'output window, operand 0']
    #allocation3 [shape = 's32[2]{0}', space=sflag, size = 0x8, scoped, tag = 'scoped memory for tpu_custom_call.1']
    %25 = vsyncpa [#allocation3], 0
    %s26 = scalar_lea.sflag [#allocation3], 1
    %27 = vsyncpa %s26, 0
    loop: start=0, step=1, limit=4
    $region2: #{tpu_custom_call.1} parent=1 // loop_pre_header
      _
    $region3: #{tpu_custom_call.1} parent=1 // loop_header
      %s29 = sphi 0, %s33
      %p30 = scmp.ge.s32.totalorder %s29, 4
      %s39 = sphi 0, %s41
      %s42 = sphi 0, %s39
      %s43 = sphi 0, %s42
      %s59 = sphi 0, %s43
      %s63 = sphi 0, %s63
      %s65 = sphi 0, %s63
      %s66 = sphi 0, %s65
      %s80 = sphi 0, %s66
      %s84 = sphi 0, %s84
      %s86 = sphi 0, %s84
      %s87 = sphi 0, %s86
      %s101 = sphi 0, %s87
      %s107 = sphi 0, %s109
      %s110 = sphi 0, %s107
      %s111 = sphi 0, %s110
      %s127 = sphi 0, %s111
      %s133 = sphi 0, %s135
      %s136 = sphi 0, %s133
      %s137 = sphi 0, %s136
      %s153 = sphi 0, %s137
      %s159 = sphi 0, %s161
      %s162 = sphi 0, %s159
      %s163 = sphi 0, %s162
      %s179 = sphi 0, %s163
      %s183 = sphi 0, %s183
      %s185 = sphi 0, %s183
      %s186 = sphi 0, %s185
      %s200 = sphi 0, %s186
      %s204 = sphi 0, %s204
      %s206 = sphi 0, %s204
      %s207 = sphi 0, %s206
      %s221 = sphi 0, %s207
      %s225 = sphi 0, %s225
      %s227 = sphi 0, %s225
      %s228 = sphi 0, %s227
      %s242 = sphi 0, %s228
      %s246 = sphi 0, %s246
      %s248 = sphi 0, %s246
      %s249 = sphi 0, %s248
      %s263 = sphi 0, %s249
      %s267 = sphi 0, %s267
      %s269 = sphi 0, %s267
      %s270 = sphi 0, %s269
      %s284 = sphi 0, %s270
      %s288 = sphi 0, %s288
      %s290 = sphi 0, %s288
      %s291 = sphi 0, %s290
      %s305 = sphi 0, %s291
      %s309 = sphi 0, %s309
      %s311 = sphi 0, %s309
      %s312 = sphi 0, %s311
      %s326 = sphi 0, %s312
      %s330 = sphi 0, %s330
      %s332 = sphi 0, %s330
      %s333 = sphi 0, %s332
      %s347 = sphi 0, %s333
      %s351 = sphi 0, %s351
      %s353 = sphi 0, %s351
      %s354 = sphi 0, %s353
      %s368 = sphi 0, %s354
      %s372 = sphi 0, %s372
      %s374 = sphi 0, %s372
      %s375 = sphi 0, %s374
      %s389 = sphi 0, %s375
      %s393 = sphi 0, %s393
      %s395 = sphi 0, %s393
      %s396 = sphi 0, %s395
      %s410 = sphi 0, %s396
      %s414 = sphi 0, %s414
      %s416 = sphi 0, %s414
      %s417 = sphi 0, %s416
      %s431 = sphi 0, %s417
      %s435 = sphi 0, %s435
      %s437 = sphi 0, %s435
      %s438 = sphi 0, %s437
      %s452 = sphi 0, %s438
      %s456 = sphi 0, %s456
      %s458 = sphi 0, %s456
      %s459 = sphi 0, %s458
      %s473 = sphi 0, %s459
      %s479 = sphi 0, %s481
      %s482 = sphi 0, %s479
      %s483 = sphi 0, %s482
      %s499 = sphi 0, %s483
    $region4: #{tpu_custom_call.1} parent=1 // loop_header_branch
      %32 = sbr.rel (%p30) target = $region8
    $region5: #{tpu_custom_call.1} parent=1 // loop_body
      %s34 = ssub.s32 %s29, 1
      %s35 = ssub.s32 %s29, 2
      %s36 = sadd.s32 %s29, 1
      %s37 = ssub.s32 %s29, %s36
      %p38 = scmp.eq.s32.totalorder %s37, 0
      %s40 = sadd.s32 %s39, 1
      %s41 = scalar_select %p38, %s39, %s40
      %p44 = pneg %p38
      %p45 = scmp.eq.s32.totalorder %s29, 1
      %p46 = por %p44, %p45
      %p47 = scmp.ne.s32.totalorder %s39, %s42
      %p48 = scmp.eq.s32.totalorder %s29, 0
      %p49 = por %p47, %p48
      %p50 = scmp.ne.s32.totalorder %s39, %s42
      %p51 = scmp.eq.s32.totalorder %s34, 1
      %p52 = por %p50, %p51
      %p53 = scmp.ne.s32.totalorder %s42, %s43
      %p54 = scmp.eq.s32.totalorder %s34, 0
      %p55 = por %p53, %p54
      %p56 = scmp.ne.s32.totalorder %s42, %s43
      %p57 = scmp.eq.s32.totalorder %s35, 1
      %p58 = por %p56, %p57
      %p60 = scmp.ne.s32.totalorder %s43, %s59
      %p61 = scmp.eq.s32.totalorder %s35, 0
      %p62 = por %p60, %p61
      %s64 = sadd.s32 %s63, 1
      %p67 = scmp.eq.s32.totalorder %s29, 1
      %p68 = scmp.ne.s32.totalorder %s63, %s65
      %p69 = scmp.eq.s32.totalorder %s29, 0
      %p70 = por %p68, %p69
      %p71 = scmp.ne.s32.totalorder %s63, %s65
      %p72 = scmp.eq.s32.totalorder %s34, 1
      %p73 = por %p71, %p72
      %p74 = scmp.ne.s32.totalorder %s65, %s66
      %p75 = scmp.eq.s32.totalorder %s34, 0
      %p76 = por %p74, %p75
      %p77 = scmp.ne.s32.totalorder %s65, %s66
      %p78 = scmp.eq.s32.totalorder %s35, 1
      %p79 = por %p77, %p78
      %p81 = scmp.ne.s32.totalorder %s66, %s80
      %p82 = scmp.eq.s32.totalorder %s35, 0
      %p83 = por %p81, %p82
      %s85 = sadd.s32 %s84, 1
      %p88 = scmp.eq.s32.totalorder %s29, 1
      %p89 = scmp.ne.s32.totalorder %s84, %s86
      %p90 = scmp.eq.s32.totalorder %s29, 0
      %p91 = por %p89, %p90
      %p92 = scmp.ne.s32.totalorder %s84, %s86
      %p93 = scmp.eq.s32.totalorder %s34, 1
      %p94 = por %p92, %p93
      %p95 = scmp.ne.s32.totalorder %s86, %s87
      %p96 = scmp.eq.s32.totalorder %s34, 0
      %p97 = por %p95, %p96
      %p98 = scmp.ne.s32.totalorder %s86, %s87
      %p99 = scmp.eq.s32.totalorder %s35, 1
      %p100 = por %p98, %p99
      %p102 = scmp.ne.s32.totalorder %s87, %s101
      %p103 = scmp.eq.s32.totalorder %s35, 0
      %p104 = por %p102, %p103
      %s105 = ssub.s32 %s29, %s36
      %p106 = scmp.eq.s32.totalorder %s105, 0
      %s108 = sadd.s32 %s107, 1
      %s109 = scalar_select %p106, %s107, %s108
      %p112 = pneg %p106
      %p113 = scmp.eq.s32.totalorder %s29, 1
      %p114 = por %p112, %p113
      %p115 = scmp.ne.s32.totalorder %s107, %s110
      %p116 = scmp.eq.s32.totalorder %s29, 0
      %p117 = por %p115, %p116
      %p118 = scmp.ne.s32.totalorder %s107, %s110
      %p119 = scmp.eq.s32.totalorder %s34, 1
      %p120 = por %p118, %p119
      %p121 = scmp.ne.s32.totalorder %s110, %s111
      %p122 = scmp.eq.s32.totalorder %s34, 0
      %p123 = por %p121, %p122
      %p124 = scmp.ne.s32.totalorder %s110, %s111
      %p125 = scmp.eq.s32.totalorder %s35, 1
      %p126 = por %p124, %p125
      %p128 = scmp.ne.s32.totalorder %s111, %s127
      %p129 = scmp.eq.s32.totalorder %s35, 0
      %p130 = por %p128, %p129
      %s131 = ssub.s32 %s29, %s36
      %p132 = scmp.eq.s32.totalorder %s131, 0
      %s134 = sadd.s32 %s133, 1
      %s135 = scalar_select %p132, %s133, %s134
      %p138 = pneg %p132
      %p139 = scmp.eq.s32.totalorder %s29, 1
      %p140 = por %p138, %p139
      %p141 = scmp.ne.s32.totalorder %s133, %s136
      %p142 = scmp.eq.s32.totalorder %s29, 0
      %p143 = por %p141, %p142
      %p144 = scmp.ne.s32.totalorder %s133, %s136
      %p145 = scmp.eq.s32.totalorder %s34, 1
      %p146 = por %p144, %p145
      %p147 = scmp.ne.s32.totalorder %s136, %s137
      %p148 = scmp.eq.s32.totalorder %s34, 0
      %p149 = por %p147, %p148
      %p150 = scmp.ne.s32.totalorder %s136, %s137
      %p151 = scmp.eq.s32.totalorder %s35, 1
      %p152 = por %p150, %p151
      %p154 = scmp.ne.s32.totalorder %s137, %s153
      %p155 = scmp.eq.s32.totalorder %s35, 0
      %p156 = por %p154, %p155
      %s157 = ssub.s32 %s29, %s36
      %p158 = scmp.eq.s32.totalorder %s157, 0
      %s160 = sadd.s32 %s159, 1
      %s161 = scalar_select %p158, %s159, %s160
      %p164 = pneg %p158
      %p165 = scmp.eq.s32.totalorder %s29, 1
      %p166 = por %p164, %p165
      %p167 = scmp.ne.s32.totalorder %s159, %s162
      %p168 = scmp.eq.s32.totalorder %s29, 0
      %p169 = por %p167, %p168
      %p170 = scmp.ne.s32.totalorder %s159, %s162
      %p171 = scmp.eq.s32.totalorder %s34, 1
      %p172 = por %p170, %p171
      %p173 = scmp.ne.s32.totalorder %s162, %s163
      %p174 = scmp.eq.s32.totalorder %s34, 0
      %p175 = por %p173, %p174
      %p176 = scmp.ne.s32.totalorder %s162, %s163
      %p177 = scmp.eq.s32.totalorder %s35, 1
      %p178 = por %p176, %p177
      %p180 = scmp.ne.s32.totalorder %s163, %s179
      %p181 = scmp.eq.s32.totalorder %s35, 0
      %p182 = por %p180, %p181
      %s184 = sadd.s32 %s183, 1
      %p187 = scmp.eq.s32.totalorder %s29, 1
      %p188 = scmp.ne.s32.totalorder %s183, %s185
      %p189 = scmp.eq.s32.totalorder %s29, 0
      %p190 = por %p188, %p189
      %p191 = scmp.ne.s32.totalorder %s183, %s185
      %p192 = scmp.eq.s32.totalorder %s34, 1
      %p193 = por %p191, %p192
      %p194 = scmp.ne.s32.totalorder %s185, %s186
      %p195 = scmp.eq.s32.totalorder %s34, 0
      %p196 = por %p194, %p195
      %p197 = scmp.ne.s32.totalorder %s185, %s186
      %p198 = scmp.eq.s32.totalorder %s35, 1
      %p199 = por %p197, %p198
      %p201 = scmp.ne.s32.totalorder %s186, %s200
      %p202 = scmp.eq.s32.totalorder %s35, 0
      %p203 = por %p201, %p202
      %s205 = sadd.s32 %s204, 1
      %p208 = scmp.eq.s32.totalorder %s29, 1
      %p209 = scmp.ne.s32.totalorder %s204, %s206
      %p210 = scmp.eq.s32.totalorder %s29, 0
      %p211 = por %p209, %p210
      %p212 = scmp.ne.s32.totalorder %s204, %s206
      %p213 = scmp.eq.s32.totalorder %s34, 1
      %p214 = por %p212, %p213
      %p215 = scmp.ne.s32.totalorder %s206, %s207
      %p216 = scmp.eq.s32.totalorder %s34, 0
      %p217 = por %p215, %p216
      %p218 = scmp.ne.s32.totalorder %s206, %s207
      %p219 = scmp.eq.s32.totalorder %s35, 1
      %p220 = por %p218, %p219
      %p222 = scmp.ne.s32.totalorder %s207, %s221
      %p223 = scmp.eq.s32.totalorder %s35, 0
      %p224 = por %p222, %p223
      %s226 = sadd.s32 %s225, 1
      %p229 = scmp.eq.s32.totalorder %s29, 1
      %p230 = scmp.ne.s32.totalorder %s225, %s227
      %p231 = scmp.eq.s32.totalorder %s29, 0
      %p232 = por %p230, %p231
      %p233 = scmp.ne.s32.totalorder %s225, %s227
      %p234 = scmp.eq.s32.totalorder %s34, 1
      %p235 = por %p233, %p234
      %p236 = scmp.ne.s32.totalorder %s227, %s228
      %p237 = scmp.eq.s32.totalorder %s34, 0
      %p238 = por %p236, %p237
      %p239 = scmp.ne.s32.totalorder %s227, %s228
      %p240 = scmp.eq.s32.totalorder %s35, 1
      %p241 = por %p239, %p240
      %p243 = scmp.ne.s32.totalorder %s228, %s242
      %p244 = scmp.eq.s32.totalorder %s35, 0
      %p245 = por %p243, %p244
      %s247 = sadd.s32 %s246, 1
      %p250 = scmp.eq.s32.totalorder %s29, 1
      %p251 = scmp.ne.s32.totalorder %s246, %s248
      %p252 = scmp.eq.s32.totalorder %s29, 0
      %p253 = por %p251, %p252
      %p254 = scmp.ne.s32.totalorder %s246, %s248
      %p255 = scmp.eq.s32.totalorder %s34, 1
      %p256 = por %p254, %p255
      %p257 = scmp.ne.s32.totalorder %s248, %s249
      %p258 = scmp.eq.s32.totalorder %s34, 0
      %p259 = por %p257, %p258
      %p260 = scmp.ne.s32.totalorder %s248, %s249
      %p261 = scmp.eq.s32.totalorder %s35, 1
      %p262 = por %p260, %p261
      %p264 = scmp.ne.s32.totalorder %s249, %s263
      %p265 = scmp.eq.s32.totalorder %s35, 0
      %p266 = por %p264, %p265
      %s268 = sadd.s32 %s267, 1
      %p271 = scmp.eq.s32.totalorder %s29, 1
      %p272 = scmp.ne.s32.totalorder %s267, %s269
      %p273 = scmp.eq.s32.totalorder %s29, 0
      %p274 = por %p272, %p273
      %p275 = scmp.ne.s32.totalorder %s267, %s269
      %p276 = scmp.eq.s32.totalorder %s34, 1
      %p277 = por %p275, %p276
      %p278 = scmp.ne.s32.totalorder %s269, %s270
      %p279 = scmp.eq.s32.totalorder %s34, 0
      %p280 = por %p278, %p279
      %p281 = scmp.ne.s32.totalorder %s269, %s270
      %p282 = scmp.eq.s32.totalorder %s35, 1
      %p283 = por %p281, %p282
      %p285 = scmp.ne.s32.totalorder %s270, %s284
      %p286 = scmp.eq.s32.totalorder %s35, 0
      %p287 = por %p285, %p286
      %s289 = sadd.s32 %s288, 1
      %p292 = scmp.eq.s32.totalorder %s29, 1
      %p293 = scmp.ne.s32.totalorder %s288, %s290
      %p294 = scmp.eq.s32.totalorder %s29, 0
      %p295 = por %p293, %p294
      %p296 = scmp.ne.s32.totalorder %s288, %s290
      %p297 = scmp.eq.s32.totalorder %s34, 1
      %p298 = por %p296, %p297
      %p299 = scmp.ne.s32.totalorder %s290, %s291
      %p300 = scmp.eq.s32.totalorder %s34, 0
      %p301 = por %p299, %p300
      %p302 = scmp.ne.s32.totalorder %s290, %s291
      %p303 = scmp.eq.s32.totalorder %s35, 1
      %p304 = por %p302, %p303
      %p306 = scmp.ne.s32.totalorder %s291, %s305
      %p307 = scmp.eq.s32.totalorder %s35, 0
      %p308 = por %p306, %p307
      %s310 = sadd.s32 %s309, 1
      %p313 = scmp.eq.s32.totalorder %s29, 1
      %p314 = scmp.ne.s32.totalorder %s309, %s311
      %p315 = scmp.eq.s32.totalorder %s29, 0
      %p316 = por %p314, %p315
      %p317 = scmp.ne.s32.totalorder %s309, %s311
      %p318 = scmp.eq.s32.totalorder %s34, 1
      %p319 = por %p317, %p318
      %p320 = scmp.ne.s32.totalorder %s311, %s312
      %p321 = scmp.eq.s32.totalorder %s34, 0
      %p322 = por %p320, %p321
      %p323 = scmp.ne.s32.totalorder %s311, %s312
      %p324 = scmp.eq.s32.totalorder %s35, 1
      %p325 = por %p323, %p324
      %p327 = scmp.ne.s32.totalorder %s312, %s326
      %p328 = scmp.eq.s32.totalorder %s35, 0
      %p329 = por %p327, %p328
      %s331 = sadd.s32 %s330, 1
      %p334 = scmp.eq.s32.totalorder %s29, 1
      %p335 = scmp.ne.s32.totalorder %s330, %s332
      %p336 = scmp.eq.s32.totalorder %s29, 0
      %p337 = por %p335, %p336
      %p338 = scmp.ne.s32.totalorder %s330, %s332
      %p339 = scmp.eq.s32.totalorder %s34, 1
      %p340 = por %p338, %p339
      %p341 = scmp.ne.s32.totalorder %s332, %s333
      %p342 = scmp.eq.s32.totalorder %s34, 0
      %p343 = por %p341, %p342
      %p344 = scmp.ne.s32.totalorder %s332, %s333
      %p345 = scmp.eq.s32.totalorder %s35, 1
      %p346 = por %p344, %p345
      %p348 = scmp.ne.s32.totalorder %s333, %s347
      %p349 = scmp.eq.s32.totalorder %s35, 0
      %p350 = por %p348, %p349
      %s352 = sadd.s32 %s351, 1
      %p355 = scmp.eq.s32.totalorder %s29, 1
      %p356 = scmp.ne.s32.totalorder %s351, %s353
      %p357 = scmp.eq.s32.totalorder %s29, 0
      %p358 = por %p356, %p357
      %p359 = scmp.ne.s32.totalorder %s351, %s353
      %p360 = scmp.eq.s32.totalorder %s34, 1
      %p361 = por %p359, %p360
      %p362 = scmp.ne.s32.totalorder %s353, %s354
      %p363 = scmp.eq.s32.totalorder %s34, 0
      %p364 = por %p362, %p363
      %p365 = scmp.ne.s32.totalorder %s353, %s354
      %p366 = scmp.eq.s32.totalorder %s35, 1
      %p367 = por %p365, %p366
      %p369 = scmp.ne.s32.totalorder %s354, %s368
      %p370 = scmp.eq.s32.totalorder %s35, 0
      %p371 = por %p369, %p370
      %s373 = sadd.s32 %s372, 1
      %p376 = scmp.eq.s32.totalorder %s29, 1
      %p377 = scmp.ne.s32.totalorder %s372, %s374
      %p378 = scmp.eq.s32.totalorder %s29, 0
      %p379 = por %p377, %p378
      %p380 = scmp.ne.s32.totalorder %s372, %s374
      %p381 = scmp.eq.s32.totalorder %s34, 1
      %p382 = por %p380, %p381
      %p383 = scmp.ne.s32.totalorder %s374, %s375
      %p384 = scmp.eq.s32.totalorder %s34, 0
      %p385 = por %p383, %p384
      %p386 = scmp.ne.s32.totalorder %s374, %s375
      %p387 = scmp.eq.s32.totalorder %s35, 1
      %p388 = por %p386, %p387
      %p390 = scmp.ne.s32.totalorder %s375, %s389
      %p391 = scmp.eq.s32.totalorder %s35, 0
      %p392 = por %p390, %p391
      %s394 = sadd.s32 %s393, 1
      %p397 = scmp.eq.s32.totalorder %s29, 1
      %p398 = scmp.ne.s32.totalorder %s393, %s395
      %p399 = scmp.eq.s32.totalorder %s29, 0
      %p400 = por %p398, %p399
      %p401 = scmp.ne.s32.totalorder %s393, %s395
      %p402 = scmp.eq.s32.totalorder %s34, 1
      %p403 = por %p401, %p402
      %p404 = scmp.ne.s32.totalorder %s395, %s396
      %p405 = scmp.eq.s32.totalorder %s34, 0
      %p406 = por %p404, %p405
      %p407 = scmp.ne.s32.totalorder %s395, %s396
      %p408 = scmp.eq.s32.totalorder %s35, 1
      %p409 = por %p407, %p408
      %p411 = scmp.ne.s32.totalorder %s396, %s410
      %p412 = scmp.eq.s32.totalorder %s35, 0
      %p413 = por %p411, %p412
      %s415 = sadd.s32 %s414, 1
      %p418 = scmp.eq.s32.totalorder %s29, 1
      %p419 = scmp.ne.s32.totalorder %s414, %s416
      %p420 = scmp.eq.s32.totalorder %s29, 0
      %p421 = por %p419, %p420
      %p422 = scmp.ne.s32.totalorder %s414, %s416
      %p423 = scmp.eq.s32.totalorder %s34, 1
      %p424 = por %p422, %p423
      %p425 = scmp.ne.s32.totalorder %s416, %s417
      %p426 = scmp.eq.s32.totalorder %s34, 0
      %p427 = por %p425, %p426
      %p428 = scmp.ne.s32.totalorder %s416, %s417
      %p429 = scmp.eq.s32.totalorder %s35, 1
      %p430 = por %p428, %p429
      %p432 = scmp.ne.s32.totalorder %s417, %s431
      %p433 = scmp.eq.s32.totalorder %s35, 0
      %p434 = por %p432, %p433
      %s436 = sadd.s32 %s435, 1
      %p439 = scmp.eq.s32.totalorder %s29, 1
      %p440 = scmp.ne.s32.totalorder %s435, %s437
      %p441 = scmp.eq.s32.totalorder %s29, 0
      %p442 = por %p440, %p441
      %p443 = scmp.ne.s32.totalorder %s435, %s437
      %p444 = scmp.eq.s32.totalorder %s34, 1
      %p445 = por %p443, %p444
      %p446 = scmp.ne.s32.totalorder %s437, %s438
      %p447 = scmp.eq.s32.totalorder %s34, 0
      %p448 = por %p446, %p447
      %p449 = scmp.ne.s32.totalorder %s437, %s438
      %p450 = scmp.eq.s32.totalorder %s35, 1
      %p451 = por %p449, %p450
      %p453 = scmp.ne.s32.totalorder %s438, %s452
      %p454 = scmp.eq.s32.totalorder %s35, 0
      %p455 = por %p453, %p454
      %s457 = sadd.s32 %s456, 1
      %p460 = scmp.eq.s32.totalorder %s29, 1
      %p461 = scmp.ne.s32.totalorder %s456, %s458
      %p462 = scmp.eq.s32.totalorder %s29, 0
      %p463 = por %p461, %p462
      %p464 = scmp.ne.s32.totalorder %s456, %s458
      %p465 = scmp.eq.s32.totalorder %s34, 1
      %p466 = por %p464, %p465
      %p467 = scmp.ne.s32.totalorder %s458, %s459
      %p468 = scmp.eq.s32.totalorder %s34, 0
      %p469 = por %p467, %p468
      %p470 = scmp.ne.s32.totalorder %s458, %s459
      %p471 = scmp.eq.s32.totalorder %s35, 1
      %p472 = por %p470, %p471
      %p474 = scmp.ne.s32.totalorder %s459, %s473
      %p475 = scmp.eq.s32.totalorder %s35, 0
      %p476 = por %p474, %p475
      %s477 = ssub.s32 %s29, %s36
      %p478 = scmp.eq.s32.totalorder %s477, 0
      %s480 = sadd.s32 %s479, 1
      %s481 = scalar_select %p478, %s479, %s480
      %p484 = pneg %p478
      %p485 = scmp.eq.s32.totalorder %s29, 1
      %p486 = por %p484, %p485
      %p487 = scmp.ne.s32.totalorder %s479, %s482
      %p488 = scmp.eq.s32.totalorder %s29, 0
      %p489 = por %p487, %p488
      %p490 = scmp.ne.s32.totalorder %s479, %s482
      %p491 = scmp.eq.s32.totalorder %s34, 1
      %p492 = por %p490, %p491
      %p493 = scmp.ne.s32.totalorder %s482, %s483
      %p494 = scmp.eq.s32.totalorder %s34, 0
      %p495 = por %p493, %p494
      %p496 = scmp.ne.s32.totalorder %s482, %s483
      %p497 = scmp.eq.s32.totalorder %s35, 1
      %p498 = por %p496, %p497
      %p500 = scmp.ne.s32.totalorder %s483, %s499
      %p501 = scmp.eq.s32.totalorder %s35, 0
      %p502 = por %p500, %p501
      %p503 = scmp.le.s32.totalorder 1, %s29
      %p504 = scmp.lt.s32.totalorder %s29, 3
      %p505 = pnand %p503, %p504
      %p506 = pneg %p505
      // Predicated region
      $region9: #{tpu_custom_call.1} parent=5 // pred_check
        _
      $region10: #{tpu_custom_call.1} parent=5 // pred_check_branch
        %508 = sbr.rel (%p505) target = $region12
      $region11: #{tpu_custom_call.1} parent=5 // pred_region
        %s509 = ssub.s32 %s29, 1
        // Predicated region
        $region13: #{tpu_custom_call.1} parent=11 // pred_check
          %p510 = pneg %p76
        $region14: #{tpu_custom_call.1} parent=11 // pred_check_branch
          %512 = sbr.rel (%p510) target = $region16
        $region15: #{tpu_custom_call.1} parent=11 // pred_region
          _
        $region16: #{tpu_custom_call.1} parent=11 // pred_fallthru
          _
        // Predicated region
        $region17: #{tpu_custom_call.1} parent=11 // pred_check
          %p513 = pneg %p97
        $region18: #{tpu_custom_call.1} parent=11 // pred_check_branch
          %515 = sbr.rel (%p513) target = $region20
        $region19: #{tpu_custom_call.1} parent=11 // pred_region
          _
        $region20: #{tpu_custom_call.1} parent=11 // pred_fallthru
          _
        // Predicated region
        $region21: #{tpu_custom_call.1} parent=11 // pred_check
          %p516 = pneg %p196
        $region22: #{tpu_custom_call.1} parent=11 // pred_check_branch
          %518 = sbr.rel (%p516) target = $region24
        $region23: #{tpu_custom_call.1} parent=11 // pred_region
          _
        $region24: #{tpu_custom_call.1} parent=11 // pred_fallthru
          _
        // Predicated region
        $region25: #{tpu_custom_call.1} parent=11 // pred_check
          %p519 = pneg %p217
        $region26: #{tpu_custom_call.1} parent=11 // pred_check_branch
          %521 = sbr.rel (%p519) target = $region28
        $region27: #{tpu_custom_call.1} parent=11 // pred_region
          _
        $region28: #{tpu_custom_call.1} parent=11 // pred_fallthru
          _
        // Predicated region
        $region29: #{tpu_custom_call.1} parent=11 // pred_check
          %p522 = pneg %p238
        $region30: #{tpu_custom_call.1} parent=11 // pred_check_branch
          %524 = sbr.rel (%p522) target = $region32
        $region31: #{tpu_custom_call.1} parent=11 // pred_region
          _
        $region32: #{tpu_custom_call.1} parent=11 // pred_fallthru
          _
        // Predicated region
        $region33: #{tpu_custom_call.1} parent=11 // pred_check
          %p525 = pneg %p259
        $region34: #{tpu_custom_call.1} parent=11 // pred_check_branch
          %527 = sbr.rel (%p525) target = $region36
        $region35: #{tpu_custom_call.1} parent=11 // pred_region
          _
        $region36: #{tpu_custom_call.1} parent=11 // pred_fallthru
          _
        // Predicated region
        $region37: #{tpu_custom_call.1} parent=11 // pred_check
          %p528 = pneg %p280
        $region38: #{tpu_custom_call.1} parent=11 // pred_check_branch
          %530 = sbr.rel (%p528) target = $region40
        $region39: #{tpu_custom_call.1} parent=11 // pred_region
          _
        $region40: #{tpu_custom_call.1} parent=11 // pred_fallthru
          _
        // Predicated region
        $region41: #{tpu_custom_call.1} parent=11 // pred_check
          %p531 = pneg %p301
        $region42: #{tpu_custom_call.1} parent=11 // pred_check_branch
          %533 = sbr.rel (%p531) target = $region44
        $region43: #{tpu_custom_call.1} parent=11 // pred_region
          _
        $region44: #{tpu_custom_call.1} parent=11 // pred_fallthru
          _
        // Predicated region
        $region45: #{tpu_custom_call.1} parent=11 // pred_check
          %p534 = pneg %p322
        $region46: #{tpu_custom_call.1} parent=11 // pred_check_branch
          %536 = sbr.rel (%p534) target = $region48
        $region47: #{tpu_custom_call.1} parent=11 // pred_region
          _
        $region48: #{tpu_custom_call.1} parent=11 // pred_fallthru
          _
        // Predicated region
        $region49: #{tpu_custom_call.1} parent=11 // pred_check
          %p537 = pneg %p343
        $region50: #{tpu_custom_call.1} parent=11 // pred_check_branch
          %539 = sbr.rel (%p537) target = $region52
        $region51: #{tpu_custom_call.1} parent=11 // pred_region
          _
        $region52: #{tpu_custom_call.1} parent=11 // pred_fallthru
          _
        // Predicated region
        $region53: #{tpu_custom_call.1} parent=11 // pred_check
          %p540 = pneg %p364
        $region54: #{tpu_custom_call.1} parent=11 // pred_check_branch
          %542 = sbr.rel (%p540) target = $region56
        $region55: #{tpu_custom_call.1} parent=11 // pred_region
          _
        $region56: #{tpu_custom_call.1} parent=11 // pred_fallthru
          _
        // Predicated region
        $region57: #{tpu_custom_call.1} parent=11 // pred_check
          %p543 = pneg %p385
        $region58: #{tpu_custom_call.1} parent=11 // pred_check_branch
          %545 = sbr.rel (%p543) target = $region60
        $region59: #{tpu_custom_call.1} parent=11 // pred_region
          _
        $region60: #{tpu_custom_call.1} parent=11 // pred_fallthru
          _
        // Predicated region
        $region61: #{tpu_custom_call.1} parent=11 // pred_check
          %p546 = pneg %p406
        $region62: #{tpu_custom_call.1} parent=11 // pred_check_branch
          %548 = sbr.rel (%p546) target = $region64
        $region63: #{tpu_custom_call.1} parent=11 // pred_region
          _
        $region64: #{tpu_custom_call.1} parent=11 // pred_fallthru
          _
        // Predicated region
        $region65: #{tpu_custom_call.1} parent=11 // pred_check
          %p549 = pneg %p427
        $region66: #{tpu_custom_call.1} parent=11 // pred_check_branch
          %551 = sbr.rel (%p549) target = $region68
        $region67: #{tpu_custom_call.1} parent=11 // pred_region
          _
        $region68: #{tpu_custom_call.1} parent=11 // pred_fallthru
          _
        // Predicated region
        $region69: #{tpu_custom_call.1} parent=11 // pred_check
          %p552 = pneg %p448
        $region70: #{tpu_custom_call.1} parent=11 // pred_check_branch
          %554 = sbr.rel (%p552) target = $region72
        $region71: #{tpu_custom_call.1} parent=11 // pred_region
          _
        $region72: #{tpu_custom_call.1} parent=11 // pred_fallthru
          _
        // Predicated region
        $region73: #{tpu_custom_call.1} parent=11 // pred_check
          %p555 = pneg %p469
        $region74: #{tpu_custom_call.1} parent=11 // pred_check_branch
          %557 = sbr.rel (%p555) target = $region76
        $region75: #{tpu_custom_call.1} parent=11 // pred_region
          _
        $region76: #{tpu_custom_call.1} parent=11 // pred_fallthru
          _
      $region12: #{tpu_custom_call.1} parent=5 // pred_fallthru
        _
      %p558 = scmp.lt.s32.totalorder %s29, 2
      // Predicated region
      $region77: #{tpu_custom_call.1} parent=5 // pred_check
        %p559 = pneg %p558
      $region78: #{tpu_custom_call.1} parent=5 // pred_check_branch
        %561 = sbr.rel (%p559) target = $region80
      $region79: #{tpu_custom_call.1} parent=5 // pred_region
        // Predicated region
        $region81: #{tpu_custom_call.1} parent=79 // pred_check
          %p562 = pneg %p49
        $region82: #{tpu_custom_call.1} parent=79 // pred_check_branch
          %564 = sbr.rel (%p562) target = $region84
        $region83: #{tpu_custom_call.1} parent=79 // pred_region
          %p565 = scmp.lt.s32.totalorder %s29, 1
          %s566 = scalar_select %p565, %s29, 1
          %s567 = smul.addr %s566, 8
          %s568 = scalar_lea.vmem %s0, %s567
        $region84: #{tpu_custom_call.1} parent=79 // pred_fallthru
          _
        // Predicated region
        $region85: #{tpu_custom_call.1} parent=79 // pred_check
          %p569 = pneg %p117
        $region86: #{tpu_custom_call.1} parent=79 // pred_check_branch
          %571 = sbr.rel (%p569) target = $region88
        $region87: #{tpu_custom_call.1} parent=79 // pred_region
          %p572 = scmp.lt.s32.totalorder %s29, 1
          %s573 = scalar_select %p572, %s29, 1
          %s574 = smul.addr %s573, 16
          %s575 = smul.addr %s574, 8
          %s576 = scalar_lea.vmem %s3, %s575
        $region88: #{tpu_custom_call.1} parent=79 // pred_fallthru
          _
        // Predicated region
        $region89: #{tpu_custom_call.1} parent=79 // pred_check
          %p577 = pneg %p143
        $region90: #{tpu_custom_call.1} parent=79 // pred_check_branch
          %579 = sbr.rel (%p577) target = $region92
        $region91: #{tpu_custom_call.1} parent=79 // pred_region
          %p580 = scmp.lt.s32.totalorder %s29, 1
          %s581 = scalar_select %p580, %s29, 1
          %s582 = scalar_lea.vmem %s4, %s581
        $region92: #{tpu_custom_call.1} parent=79 // pred_fallthru
          _
        // Predicated region
        $region93: #{tpu_custom_call.1} parent=79 // pred_check
          %p583 = pneg %p169
        $region94: #{tpu_custom_call.1} parent=79 // pred_check_branch
          %585 = sbr.rel (%p583) target = $region96
        $region95: #{tpu_custom_call.1} parent=79 // pred_region
          %p586 = scmp.lt.s32.totalorder %s29, 1
          %s587 = scalar_select %p586, %s29, 1
          %s588 = scalar_lea.vmem %s5, %s587
        $region96: #{tpu_custom_call.1} parent=79 // pred_fallthru
          _
      $region80: #{tpu_custom_call.1} parent=5 // pred_fallthru
        _
      %p589 = scmp.le.s32.totalorder 1, %s29
      %p590 = scmp.lt.s32.totalorder %s29, 3
      %p591 = pnand %p589, %p590
      %p592 = pneg %p591
      // Predicated region
      $region97: #{tpu_custom_call.1} parent=5 // pred_check
        _
      $region98: #{tpu_custom_call.1} parent=5 // pred_check_branch
        %594 = sbr.rel (%p591) target = $region100
      $region99: #{tpu_custom_call.1} parent=5 // pred_region
        %s595 = ssub.s32 %s29, 1
        %p596 = scmp.lt.s32.totalorder %s34, 1
        %s597 = scalar_select %p596, %s34, 1
        %s598 = smul.addr %s597, 8
        %s599 = scalar_lea.vmem %s0, %s598
        %p600 = pneg %p55
        %p601 = pneg %p52
        %p602 = pneg %p76
        %p603 = pneg %p73
        %p604 = pneg %p97
        %p605 = pneg %p94
        %p606 = scmp.lt.s32.totalorder %s34, 1
        %s607 = scalar_select %p606, %s34, 1
        %s608 = smul.addr %s607, 16
        %s609 = smul.addr %s608, 8
        %s610 = scalar_lea.vmem %s3, %s609
        %p611 = pneg %p123
        %p612 = pneg %p120
        %p613 = scmp.lt.s32.totalorder %s34, 1
        %s614 = scalar_select %p613, %s34, 1
        %s615 = scalar_lea.vmem %s4, %s614
        %p616 = pneg %p149
        %p617 = pneg %p146
        %p618 = scmp.lt.s32.totalorder %s34, 1
        %s619 = scalar_select %p618, %s34, 1
        %s620 = scalar_lea.vmem %s5, %s619
        %p621 = pneg %p175
        %p622 = pneg %p172
        %p623 = pneg %p196
        %p624 = pneg %p193
        %p625 = pneg %p217
        %p626 = pneg %p214
        %p627 = pneg %p238
        %p628 = pneg %p235
        %p629 = pneg %p259
        %p630 = pneg %p256
        %p631 = pneg %p280
        %p632 = pneg %p277
        %p633 = pneg %p301
        %p634 = pneg %p298
        %p635 = pneg %p322
        %p636 = pneg %p319
        %p637 = pneg %p343
        %p638 = pneg %p340
        %p639 = pneg %p364
        %p640 = pneg %p361
        %p641 = pneg %p385
        %p642 = pneg %p382
        %p643 = pneg %p406
        %p644 = pneg %p403
        %p645 = pneg %p427
        %p646 = pneg %p424
        %p647 = pneg %p448
        %p648 = pneg %p445
        %p649 = pneg %p469
        %p650 = pneg %p466
        %p651 = pneg %p495
        %p652 = pneg %p492
        %s653 = sand.u32 %s482, 1
        %s654 = scalar_lea.sflag [#allocation3], %s653
        %s655 = sand.u32 %s482, 1
        %s656 = smul.addr %s655, 8
        %s657 = scalar_lea.vmem [#allocation2], %s656
        %p658 = scmp.lt.s32.totalorder %s34, 1
        %s659 = scalar_select %p658, %s34, 1
        %s660 = smul.addr %s659, 8
        %s661 = scalar_lea.vmem %s0, %s660
        %p662 = scmp.lt.s32.totalorder %s34, 1
        %s663 = scalar_select %p662, %s34, 1
        %s664 = smul.addr %s663, 16
        %s665 = smul.addr %s664, 8
        %s666 = scalar_lea.vmem %s3, %s665
        %p667 = scmp.lt.s32.totalorder %s34, 1
        %s668 = scalar_select %p667, %s34, 1
        %s669 = scalar_lea.vmem %s4, %s668
        %p670 = scmp.lt.s32.totalorder %s34, 1
        %s671 = scalar_select %p670, %s34, 1
        %s672 = scalar_lea.vmem %s5, %s671
        %v674 = vld [vmem:[%s661] sm:$0xff]
        %v675 = vpack.c.bf16 %v674, %v674
        %v676 = vld [vmem:[%s1] sm:$0xf]
        %v677 = vld [vmem:[%s1 + $0x4] sm:$0xf]
        %v678 = vld [vmem:[%s1 + $0x8] sm:$0xf]
        %v679 = vld [vmem:[%s1 + $0xc] sm:$0xf]
        %v680 = vld [vmem:[%s2] sm:$0xff]
        %v685 = vunpack.c.l.b16 %v676
        %v686 = vunpack.c.l.b16 %v677
        %v687 = vunpack.c.l.b16 %v678
        %v688 = vunpack.c.l.b16 %v679
        %v689 = vpack.c.b16 %v686, %v685
        %v690 = vpack.c.b16 %v688, %v687
        %vm693 = vcmask 261120
        %v695 = vsel %vm693, %v675, 0
        %697 = vmatpush.bf16.msra.mxu0 0
        %698 = vmatpush.bf16.msra.mxu0 0
        %699 = vmatpush.bf16.msra.mxu0 0
        %700 = vmatpush.bf16.msra.mxu0 0
        %701 = vmatpush.bf16.msra.mxu0 0
        %702 = vmatpush.bf16.msra.mxu0 0
        %703 = vmatpush.bf16.msra.mxu0 %v690
        %704 = vmatpush.bf16.msra.mxu0 %v689
        %705 = vmatmul.bf16.gmra.mxu0 %v695
        %v706 = vpop.f32.mrf.mxu0
        %v707 = vadd.f32 %v680, %v706
        %v708 = vpop.f32.mrf.mxu0
        %709 = vdwg.mxu0
        %v710 = vld [vmem:[%s666] sm:$0xff]
        %v711 = vld [vmem:[%s666 + $0x8] sm:$0xff]
        %v712 = vld [vmem:[%s666 + $0x10] sm:$0xff]
        %v713 = vld [vmem:[%s666 + $0x18] sm:$0xff]
        %v714 = vld [vmem:[%s666 + $0x20] sm:$0xff]
        %v715 = vld [vmem:[%s666 + $0x28] sm:$0xff]
        %v716 = vld [vmem:[%s666 + $0x30] sm:$0xff]
        %v717 = vld [vmem:[%s666 + $0x38] sm:$0xff]
        %v718 = vld [vmem:[%s666 + $0x40] sm:$0xff]
        %v719 = vld [vmem:[%s666 + $0x48] sm:$0xff]
        %v720 = vld [vmem:[%s666 + $0x50] sm:$0xff]
        %v721 = vld [vmem:[%s666 + $0x58] sm:$0xff]
        %v722 = vld [vmem:[%s666 + $0x60] sm:$0xff]
        %v723 = vld [vmem:[%s666 + $0x68] sm:$0xff]
        %v724 = vld [vmem:[%s666 + $0x70] sm:$0xff]
        %v725 = vld [vmem:[%s666 + $0x78] sm:$0xff]
        %v726 = vlaneseq
        %v727 = vand.u32 %v726, 127
        %v728 = vlaneseq
        %v729 = vshrl.u32 %v728, 7
        %v730 = vld [vmem:[%s669] sm:$0x1]
        %vm731 = vcmp.gt.f32.partialorder %v730, 0.0
        %vm732 = vcmp.gt.s32.totalorder %v727, %v729
        %v733 = vsel %vm731, 1, 0
        %v734 = vperm.slane %v733, 0
        %vm735 = vcmp.eq.s32.totalorder %v734, 1
        %vm736 = vmor %vm735, %vm732
        %v737 = vsel %vm736, -1e+18, 0.0
        %v738 = vld [vmem:[%s672] sm:$0x1]
        %vm739 = vcmp.gt.f32.partialorder %v738, 0.0
        %v740 = vsel %vm739, -1e+18, 0.0
        %v741 = vld [vmem:[%s6] sm:$0x7]
        %v742 = vld [vmem:[%s7] sm:$0x7]
        %v743 = vsel %vm693, %v707, 0.0
        %744 = vadd.xlane.f32.xlu0 %v743
        %v745 = vpop.xlane.xlu0 %744
        %v746 = vrcp.pop 32.0
        %v747 = vmul.f32 32.0, %v746
        %v748 = vsub.f32 1.0, %v747
        %v749 = vmul.f32 %v746, %v748
        %v750 = vadd.f32 %v746, %v749
        %vm751 = vweird.f32 %v746
        %v752 = vsel %vm751, %v746, %v750
        %v753 = vmul.f32 %v745, %v752
        %v754 = vsub.f32 %v707, %v753
        %v755 = vmul.f32 %v754, %v754
        %v756 = vsel %vm693, %v755, 0.0
        %757 = vadd.xlane.f32.xlu0 %v756
        %v758 = vpop.xlane.xlu0 %757
        %v759 = vrcp.pop 31.0
        %v760 = vmul.f32 31.0, %v759
        %v761 = vsub.f32 1.0, %v760
        %v762 = vmul.f32 %v759, %v761
        %v763 = vadd.f32 %v759, %v762
        %vm764 = vweird.f32 %v759
        %v765 = vsel %vm764, %v759, %v763
        %v766 = vmul.f32 %v758, %v765
        %v767 = vrsqrt.pop %v766
        %v768 = vmul.f32 %v767, %v766
        %v769 = vmul.f32 %v768, %v767
        %v770 = vmul.f32 0.5, %v769
        %v771 = vsub.f32 1.5, %v770
        %v772 = vmul.f32 %v767, %v771
        %v773 = vmul.f32 %v766, %v772
        %vm774 = vcmp.eq.f32.partialorder %v766, inf
        %v775 = vsel %vm774, %v766, %v773
        %vm776 = vcmp.eq.f32.partialorder %v766, 0.0
        %v777 = vand.u32 %v766, 2147483648
        %v778 = vsel %vm776, %v777, %v775
        %v779 = vadd.f32 %v778, 1e-06
        %v780 = vrcp.pop %v779
        %v781 = vmul.f32 %v779, %v780
        %v782 = vsub.f32 1.0, %v781
        %v783 = vmul.f32 %v780, %v782
        %v784 = vadd.f32 %v780, %v783
        %vm785 = vweird.f32 %v779
        %vm786 = vweird.f32 %v780
        %vm787 = vmor %vm785, %vm786
        %v788 = vsel %vm787, %v780, %v784
        %v789 = vand.u32 2147483647, %v779
        %vm790 = vcmp.eq.f32.partialorder %v789, 8.507059e+37
        %v791 = vand.u32 %v779, 2147483648
        %v792 = vor.u32 1.1754944e-38, %v791
        %v793 = vsel %vm790, %v792, %v788
        %v794 = vmul.f32 %v754, %v793
        %v795 = vperm.slane %v741, 0
        %v796 = vmul.f32 %v794, %v795
        %v797 = vperm.slane %v742, 0
        %v798 = vadd.f32 %v796, %v797
        %v799 = vld [vmem:[%s8] sm:$0xf]
        %v800 = vld [vmem:[%s8 + $0x4] sm:$0xf]
        %v801 = vld [vmem:[%s8 + $0x8] sm:$0xf]
        %v802 = vld [vmem:[%s8 + $0xc] sm:$0xf]
        %v803 = vld [vmem:[%s9] sm:$0xf]
        %v804 = vld [vmem:[%s9 + $0x4] sm:$0xf]
        %v805 = vld [vmem:[%s9 + $0x8] sm:$0xf]
        %v806 = vld [vmem:[%s9 + $0xc] sm:$0xf]
        %v807 = vld [vmem:[%s10] sm:$0xf]
        %v808 = vld [vmem:[%s10 + $0x4] sm:$0xf]
        %v809 = vld [vmem:[%s10 + $0x8] sm:$0xf]
        %v810 = vld [vmem:[%s10 + $0xc] sm:$0xf]
        %v811 = vld [vmem:[%s11] sm:$0xf]
        %v812 = vld [vmem:[%s11 + $0x4] sm:$0xf]
        %v813 = vld [vmem:[%s11 + $0x8] sm:$0xf]
        %v814 = vld [vmem:[%s11 + $0xc] sm:$0xf]
        %v815 = vpack.c.bf16 %v798, %v798
        %v820 = vunpack.c.l.b16 %v799
        %v821 = vunpack.c.l.b16 %v800
        %v822 = vunpack.c.l.b16 %v801
        %v823 = vunpack.c.l.b16 %v802
        %v824 = vpack.c.b16 %v821, %v820
        %v825 = vpack.c.b16 %v823, %v822
        %v829 = vsel %vm693, %v815, 0
        %831 = vmatpush.bf16.msra.mxu0 0
        %832 = vmatpush.bf16.msra.mxu0 0
        %833 = vmatpush.bf16.msra.mxu0 0
        %834 = vmatpush.bf16.msra.mxu0 0
        %835 = vmatpush.bf16.msra.mxu0 0
        %836 = vmatpush.bf16.msra.mxu0 0
        %837 = vmatpush.bf16.msra.mxu0 %v825
        %838 = vmatpush.bf16.msra.mxu0 %v824
        %839 = vmatmul.bf16.gmra.mxu0 %v829
        %v840 = vpop.f32.mrf.mxu0
        %v841 = vadd.f32 0.0, %v840
        %v842 = vpop.f32.mrf.mxu0
        %843 = vdwg.mxu0
        %v848 = vunpack.c.l.b16 %v803
        %v849 = vunpack.c.l.b16 %v804
        %v850 = vunpack.c.l.b16 %v805
        %v851 = vunpack.c.l.b16 %v806
        %v852 = vpack.c.b16 %v849, %v848
        %v853 = vpack.c.b16 %v851, %v850
        %856 = vmatpush.bf16.msra.mxu0 0
        %857 = vmatpush.bf16.msra.mxu0 0
        %858 = vmatpush.bf16.msra.mxu0 0
        %859 = vmatpush.bf16.msra.mxu0 0
        %860 = vmatpush.bf16.msra.mxu0 0
        %861 = vmatpush.bf16.msra.mxu0 0
        %862 = vmatpush.bf16.msra.mxu0 %v853
        %863 = vmatpush.bf16.msra.mxu0 %v852
        %864 = vmatmul.bf16.gmra.mxu0 %v829
        %v865 = vpop.f32.mrf.mxu0
        %v866 = vadd.f32 0.0, %v865
        %v867 = vpop.f32.mrf.mxu0
        %868 = vdwg.mxu0
        %v873 = vunpack.c.l.b16 %v807
        %v874 = vunpack.c.l.b16 %v808
        %v875 = vunpack.c.l.b16 %v809
        %v876 = vunpack.c.l.b16 %v810
        %v877 = vpack.c.b16 %v874, %v873
        %v878 = vpack.c.b16 %v876, %v875
        %881 = vmatpush.bf16.msra.mxu0 0
        %882 = vmatpush.bf16.msra.mxu0 0
        %883 = vmatpush.bf16.msra.mxu0 0
        %884 = vmatpush.bf16.msra.mxu0 0
        %885 = vmatpush.bf16.msra.mxu0 0
        %886 = vmatpush.bf16.msra.mxu0 0
        %887 = vmatpush.bf16.msra.mxu0 %v878
        %888 = vmatpush.bf16.msra.mxu0 %v877
        %889 = vmatmul.bf16.gmra.mxu0 %v829
        %v890 = vpop.f32.mrf.mxu0
        %v891 = vadd.f32 0.0, %v890
        %v892 = vpop.f32.mrf.mxu0
        %893 = vdwg.mxu0
        %v894 = vmul.f32 %v841, 0.35355338
        %896 = vrot.lane.b32.xlu0 %v894, 120
        %v897 = vpop.permute.xlu0 %896
        %899 = vrot.lane.b32.xlu0 %v894, 112
        %v900 = vpop.permute.xlu0 %899
        %902 = vrot.lane.b32.xlu0 %v894, 104
        %v903 = vpop.permute.xlu0 %902
        %v905 = vpack.c.bf16 %v894, %v894
        %v906 = vpack.c.bf16 %v897, %v897
        %v907 = vpack.c.bf16 %v900, %v900
        %v908 = vpack.c.bf16 %v903, %v903
        %910 = vrot.lane.b32.xlu0 %v866, 120
        %v911 = vpop.permute.xlu0 %910
        %913 = vrot.lane.b32.xlu0 %v866, 112
        %v914 = vpop.permute.xlu0 %913
        %916 = vrot.lane.b32.xlu0 %v866, 104
        %v917 = vpop.permute.xlu0 %916
        %v919 = vpack.c.bf16 %v866, %v866
        %v920 = vpack.c.bf16 %v911, %v911
        %v921 = vpack.c.bf16 %v914, %v914
        %v922 = vpack.c.bf16 %v917, %v917
        %924 = vrot.lane.b32.xlu0 %v891, 120
        %v925 = vpop.permute.xlu0 %924
        %927 = vrot.lane.b32.xlu0 %v891, 112
        %v928 = vpop.permute.xlu0 %927
        %930 = vrot.lane.b32.xlu0 %v891, 104
        %v931 = vpop.permute.xlu0 %930
        %v933 = vpack.c.bf16 %v891, %v891
        %v934 = vpack.c.bf16 %v925, %v925
        %v935 = vpack.c.bf16 %v928, %v928
        %v936 = vpack.c.bf16 %v931, %v931
        %vm937 = vcmask 64512
        %v939 = vsel %vm937, %v905, 0
        %v942 = vsel %vm937, %v919, 0
        %944 = vmatpush.bf16.xpose.msra.mxu0 0
        %945 = vmatpush.bf16.xpose.msra.mxu0 0
        %946 = vmatpush.bf16.xpose.msra.mxu0 0
        %947 = vmatpush.bf16.xpose.msra.mxu0 0
        %948 = vmatpush.bf16.xpose.msra.mxu0 0
        %949 = vmatpush.bf16.xpose.msra.mxu0 0
        %950 = vmatpush.bf16.xpose.msra.mxu0 0
        %951 = vmatpush.bf16.xpose.msra.mxu0 %v942
        %952 = vmatmul.bf16.gmra.mxu0 %v939
        %v953 = vpop.f32.mrf.mxu0
        %v954 = vadd.f32 %v737, %v953
        %v955 = vpop.f32.mrf.mxu0
        %956 = vdwg.mxu0
        %v958 = vsel %vm937, %v906, 0
        %v961 = vsel %vm937, %v920, 0
        %963 = vmatpush.bf16.xpose.msra.mxu0 0
        %964 = vmatpush.bf16.xpose.msra.mxu0 0
        %965 = vmatpush.bf16.xpose.msra.mxu0 0
        %966 = vmatpush.bf16.xpose.msra.mxu0 0
        %967 = vmatpush.bf16.xpose.msra.mxu0 0
        %968 = vmatpush.bf16.xpose.msra.mxu0 0
        %969 = vmatpush.bf16.xpose.msra.mxu0 0
        %970 = vmatpush.bf16.xpose.msra.mxu0 %v961
        %971 = vmatmul.bf16.gmra.mxu0 %v958
        %v972 = vpop.f32.mrf.mxu0
        %v973 = vadd.f32 %v737, %v972
        %v974 = vpop.f32.mrf.mxu0
        %975 = vdwg.mxu0
        %v977 = vsel %vm937, %v907, 0
        %v980 = vsel %vm937, %v921, 0
        %982 = vmatpush.bf16.xpose.msra.mxu0 0
        %983 = vmatpush.bf16.xpose.msra.mxu0 0
        %984 = vmatpush.bf16.xpose.msra.mxu0 0
        %985 = vmatpush.bf16.xpose.msra.mxu0 0
        %986 = vmatpush.bf16.xpose.msra.mxu0 0
        %987 = vmatpush.bf16.xpose.msra.mxu0 0
        %988 = vmatpush.bf16.xpose.msra.mxu0 0
        %989 = vmatpush.bf16.xpose.msra.mxu0 %v980
        %990 = vmatmul.bf16.gmra.mxu0 %v977
        %v991 = vpop.f32.mrf.mxu0
        %v992 = vadd.f32 %v737, %v991
        %v993 = vpop.f32.mrf.mxu0
        %994 = vdwg.mxu0
        %v996 = vsel %vm937, %v908, 0
        %v999 = vsel %vm937, %v922, 0
        %1001 = vmatpush.bf16.xpose.msra.mxu0 0
        %1002 = vmatpush.bf16.xpose.msra.mxu0 0
        %1003 = vmatpush.bf16.xpose.msra.mxu0 0
        %1004 = vmatpush.bf16.xpose.msra.mxu0 0
        %1005 = vmatpush.bf16.xpose.msra.mxu0 0
        %1006 = vmatpush.bf16.xpose.msra.mxu0 0
        %1007 = vmatpush.bf16.xpose.msra.mxu0 0
        %1008 = vmatpush.bf16.xpose.msra.mxu0 %v999
        %1009 = vmatmul.bf16.gmra.mxu0 %v996
        %v1010 = vpop.f32.mrf.mxu0
        %v1011 = vadd.f32 %v737, %v1010
        %v1012 = vpop.f32.mrf.mxu0
        %1013 = vdwg.mxu0
        %v1014 = vsel %vm937, %v954, -inf
        %1015 = vmax.xlane.f32.xlu0 %v1014
        %v1016 = vpop.xlane.xlu0 %1015
        %v1017 = vsel %vm937, %v973, -inf
        %1018 = vmax.xlane.f32.xlu0 %v1017
        %v1019 = vpop.xlane.xlu0 %1018
        %v1020 = vsel %vm937, %v992, -inf
        %1021 = vmax.xlane.f32.xlu0 %v1020
        %v1022 = vpop.xlane.xlu0 %1021
        %v1023 = vsel %vm937, %v1011, -inf
        %1024 = vmax.xlane.f32.xlu0 %v1023
        %v1025 = vpop.xlane.xlu0 %1024
        %v1026 = vsub.f32 %v954, %v1016
        %v1027 = vsub.f32 %v973, %v1019
        %v1028 = vsub.f32 %v992, %v1022
        %v1029 = vsub.f32 %v1011, %v1025
        %v1030 = vmul.f32 %v1026, 1.442695
        %v1031 = vpow.pop %v1030
        %v1032 = vmul.f32 %v1027, 1.442695
        %v1033 = vpow.pop %v1032
        %v1034 = vmul.f32 %v1028, 1.442695
        %v1035 = vpow.pop %v1034
        %v1036 = vmul.f32 %v1029, 1.442695
        %v1037 = vpow.pop %v1036
        %v1038 = vsel %vm937, %v1031, 0.0
        %1039 = vadd.xlane.f32.xlu0 %v1038
        %v1040 = vpop.xlane.xlu0 %1039
        %v1041 = vsel %vm937, %v1033, 0.0
        %1042 = vadd.xlane.f32.xlu0 %v1041
        %v1043 = vpop.xlane.xlu0 %1042
        %v1044 = vsel %vm937, %v1035, 0.0
        %1045 = vadd.xlane.f32.xlu0 %v1044
        %v1046 = vpop.xlane.xlu0 %1045
        %v1047 = vsel %vm937, %v1037, 0.0
        %1048 = vadd.xlane.f32.xlu0 %v1047
        %v1049 = vpop.xlane.xlu0 %1048
        %v1050 = vrcp.pop %v1040
        %v1051 = vrcp.pop %v1043
        %v1052 = vrcp.pop %v1046
        %v1053 = vrcp.pop %v1049
        %v1054 = vmul.f32 %v1031, %v1050
        %v1055 = vmul.f32 %v1033, %v1051
        %v1056 = vmul.f32 %v1035, %v1052
        %v1057 = vmul.f32 %v1037, %v1053
        %v1058 = vpack.c.bf16 %v1054, %v1054
        %v1059 = vpack.c.bf16 %v1055, %v1055
        %v1060 = vpack.c.bf16 %v1056, %v1056
        %v1061 = vpack.c.bf16 %v1057, %v1057
        %v1063 = vsel %vm937, %v1058, 0
        %vm1065 = vcmask 1043456
        %v1067 = vsel %vm1065, %v933, 0
        %1069 = vmatpush.bf16.msra.mxu0 0
        %1070 = vmatpush.bf16.msra.mxu0 0
        %1071 = vmatpush.bf16.msra.mxu0 0
        %1072 = vmatpush.bf16.msra.mxu0 0
        %1073 = vmatpush.bf16.msra.mxu0 0
        %1074 = vmatpush.bf16.msra.mxu0 0
        %1075 = vmatpush.bf16.msra.mxu0 0
        %1076 = vmatpush.bf16.msra.mxu0 %v1067
        %1077 = vmatmul.bf16.gmra.mxu0 %v1063
        %v1078 = vpop.f32.mrf.mxu0
        %v1079 = vadd.f32 0.0, %v1078
        %v1080 = vpop.f32.mrf.mxu0
        %1081 = vdwg.mxu0
        %v1083 = vsel %vm937, %v1059, 0
        %v1086 = vsel %vm1065, %v934, 0
        %1088 = vmatpush.bf16.msra.mxu0 0
        %1089 = vmatpush.bf16.msra.mxu0 0
        %1090 = vmatpush.bf16.msra.mxu0 0
        %1091 = vmatpush.bf16.msra.mxu0 0
        %1092 = vmatpush.bf16.msra.mxu0 0
        %1093 = vmatpush.bf16.msra.mxu0 0
        %1094 = vmatpush.bf16.msra.mxu0 0
        %1095 = vmatpush.bf16.msra.mxu0 %v1086
        %1096 = vmatmul.bf16.gmra.mxu0 %v1083
        %v1097 = vpop.f32.mrf.mxu0
        %v1098 = vadd.f32 0.0, %v1097
        %v1099 = vpop.f32.mrf.mxu0
        %1100 = vdwg.mxu0
        %v1102 = vsel %vm937, %v1060, 0
        %v1105 = vsel %vm1065, %v935, 0
        %1107 = vmatpush.bf16.msra.mxu0 0
        %1108 = vmatpush.bf16.msra.mxu0 0
        %1109 = vmatpush.bf16.msra.mxu0 0
        %1110 = vmatpush.bf16.msra.mxu0 0
        %1111 = vmatpush.bf16.msra.mxu0 0
        %1112 = vmatpush.bf16.msra.mxu0 0
        %1113 = vmatpush.bf16.msra.mxu0 0
        %1114 = vmatpush.bf16.msra.mxu0 %v1105
        %1115 = vmatmul.bf16.gmra.mxu0 %v1102
        %v1116 = vpop.f32.mrf.mxu0
        %v1117 = vadd.f32 0.0, %v1116
        %v1118 = vpop.f32.mrf.mxu0
        %1119 = vdwg.mxu0
        %v1121 = vsel %vm937, %v1061, 0
        %v1124 = vsel %vm1065, %v936, 0
        %1126 = vmatpush.bf16.msra.mxu0 0
        %1127 = vmatpush.bf16.msra.mxu0 0
        %1128 = vmatpush.bf16.msra.mxu0 0
        %1129 = vmatpush.bf16.msra.mxu0 0
        %1130 = vmatpush.bf16.msra.mxu0 0
        %1131 = vmatpush.bf16.msra.mxu0 0
        %1132 = vmatpush.bf16.msra.mxu0 0
        %1133 = vmatpush.bf16.msra.mxu0 %v1124
        %1134 = vmatmul.bf16.gmra.mxu0 %v1121
        %v1135 = vpop.f32.mrf.mxu0
        %v1136 = vadd.f32 0.0, %v1135
        %v1137 = vpop.f32.mrf.mxu0
        %1138 = vdwg.mxu0
        %v1139 = vpack.c.bf16 %v1079, %v1079
        %v1140 = vpack.c.bf16 %v1098, %v1098
        %v1142 = vsel %vm937, %v1140, 0
        %v1145 = vsel %vm1065, %v812, 0
        %1147 = vmatpush.bf16.msra.mxu0 0
        %1148 = vmatpush.bf16.msra.mxu0 0
        %1149 = vmatpush.bf16.msra.mxu0 0
        %1150 = vmatpush.bf16.msra.mxu0 0
        %1151 = vmatpush.bf16.msra.mxu0 0
        %1152 = vmatpush.bf16.msra.mxu0 0
        %1153 = vmatpush.bf16.msra.mxu0 0
        %1154 = vmatpush.bf16.msra.mxu0 %v1145
        %1155 = vmatmul.bf16.gmra.mxu0 %v1142
        %v1156 = vpop.f32.mrf.mxu0
        %v1157 = vadd.f32 0.0, %v1156
        %v1158 = vpop.f32.mrf.mxu0
        %1159 = vdwg.mxu0
        %v1161 = vsel %vm937, %v1139, 0
        %v1164 = vsel %vm1065, %v811, 0
        %1166 = vmatpush.bf16.msra.mxu0 0
        %1167 = vmatpush.bf16.msra.mxu0 0
        %1168 = vmatpush.bf16.msra.mxu0 0
        %1169 = vmatpush.bf16.msra.mxu0 0
        %1170 = vmatpush.bf16.msra.mxu0 0
        %1171 = vmatpush.bf16.msra.mxu0 0
        %1172 = vmatpush.bf16.msra.mxu0 0
        %1173 = vmatpush.bf16.msra.mxu0 %v1164
        %1174 = vmatmul.bf16.gmra.mxu0 %v1161
        %v1175 = vpop.f32.mrf.mxu0
        %v1176 = vadd.f32 %v1157, %v1175
        %v1177 = vpop.f32.mrf.mxu0
        %1178 = vdwg.mxu0
        %v1179 = vpack.c.bf16 %v1117, %v1117
        %v1181 = vsel %vm937, %v1179, 0
        %v1184 = vsel %vm1065, %v813, 0
        %1186 = vmatpush.bf16.msra.mxu0 0
        %1187 = vmatpush.bf16.msra.mxu0 0
        %1188 = vmatpush.bf16.msra.mxu0 0
        %1189 = vmatpush.bf16.msra.mxu0 0
        %1190 = vmatpush.bf16.msra.mxu0 0
        %1191 = vmatpush.bf16.msra.mxu0 0
        %1192 = vmatpush.bf16.msra.mxu0 0
        %1193 = vmatpush.bf16.msra.mxu0 %v1184
        %1194 = vmatmul.bf16.gmra.mxu0 %v1181
        %v1195 = vpop.f32.mrf.mxu0
        %v1196 = vadd.f32 0.0, %v1195
        %v1197 = vpop.f32.mrf.mxu0
        %1198 = vdwg.mxu0
        %v1199 = vadd.f32 %v1176, %v1196
        %v1200 = vpack.c.bf16 %v1136, %v1136
        %v1202 = vsel %vm937, %v1200, 0
        %v1205 = vsel %vm1065, %v814, 0
        %1207 = vmatpush.bf16.msra.mxu0 0
        %1208 = vmatpush.bf16.msra.mxu0 0
        %1209 = vmatpush.bf16.msra.mxu0 0
        %1210 = vmatpush.bf16.msra.mxu0 0
        %1211 = vmatpush.bf16.msra.mxu0 0
        %1212 = vmatpush.bf16.msra.mxu0 0
        %1213 = vmatpush.bf16.msra.mxu0 0
        %1214 = vmatpush.bf16.msra.mxu0 %v1205
        %1215 = vmatmul.bf16.gmra.mxu0 %v1202
        %v1216 = vpop.f32.mrf.mxu0
        %v1217 = vadd.f32 0.0, %v1216
        %v1218 = vpop.f32.mrf.mxu0
        %1219 = vdwg.mxu0
        %v1220 = vadd.f32 %v1199, %v1217
        %v1221 = vadd.f32 %v707, %v1220
        %v1222 = vsel %vm693, %v1221, 0.0
        %1223 = vadd.xlane.f32.xlu0 %v1222
        %v1224 = vpop.xlane.xlu0 %1223
        %v1225 = vmul.f32 %v1224, %v752
        %v1226 = vsub.f32 %v1221, %v1225
        %v1227 = vmul.f32 %v1226, %v1226
        %v1228 = vsel %vm693, %v1227, 0.0
        %1229 = vadd.xlane.f32.xlu0 %v1228
        %v1230 = vpop.xlane.xlu0 %1229
        %v1231 = vmul.f32 %v1230, %v765
        %v1232 = vrsqrt.pop %v1231
        %v1233 = vmul.f32 %v1232, %v1231
        %v1234 = vmul.f32 %v1233, %v1232
        %v1235 = vmul.f32 0.5, %v1234
        %v1236 = vsub.f32 1.5, %v1235
        %v1237 = vmul.f32 %v1232, %v1236
        %v1238 = vmul.f32 %v1231, %v1237
        %vm1239 = vcmp.eq.f32.partialorder %v1231, inf
        %v1240 = vsel %vm1239, %v1231, %v1238
        %vm1241 = vcmp.eq.f32.partialorder %v1231, 0.0
        %v1242 = vand.u32 %v1231, 2147483648
        %v1243 = vsel %vm1241, %v1242, %v1240
        %v1244 = vadd.f32 %v1243, 1e-06
        %v1245 = vrcp.pop %v1244
        %v1246 = vmul.f32 %v1244, %v1245
        %v1247 = vsub.f32 1.0, %v1246
        %v1248 = vmul.f32 %v1245, %v1247
        %v1249 = vadd.f32 %v1245, %v1248
        %vm1250 = vweird.f32 %v1244
        %vm1251 = vweird.f32 %v1245
        %vm1252 = vmor %vm1250, %vm1251
        %v1253 = vsel %vm1252, %v1245, %v1249
        %v1254 = vand.u32 2147483647, %v1244
        %vm1255 = vcmp.eq.f32.partialorder %v1254, 8.507059e+37
        %v1256 = vand.u32 %v1244, 2147483648
        %v1257 = vor.u32 1.1754944e-38, %v1256
        %v1258 = vsel %vm1255, %v1257, %v1253
        %v1259 = vmul.f32 %v1226, %v1258
        %v1260 = vperm.slane %v741, 1
        %v1261 = vmul.f32 %v1259, %v1260
        %v1262 = vperm.slane %v742, 1
        %v1263 = vadd.f32 %v1261, %v1262
        %v1264 = vld [vmem:[%s12] sm:$0xf]
        %v1265 = vld [vmem:[%s12 + $0x4] sm:$0xf]
        %v1266 = vld [vmem:[%s12 + $0x8] sm:$0xf]
        %v1267 = vld [vmem:[%s12 + $0xc] sm:$0xf]
        %v1268 = vld [vmem:[%s13] sm:$0xf]
        %v1269 = vld [vmem:[%s13 + $0x4] sm:$0xf]
        %v1270 = vld [vmem:[%s13 + $0x8] sm:$0xf]
        %v1271 = vld [vmem:[%s13 + $0xc] sm:$0xf]
        %v1272 = vld [vmem:[%s14] sm:$0xf]
        %v1273 = vld [vmem:[%s14 + $0x4] sm:$0xf]
        %v1274 = vld [vmem:[%s14 + $0x8] sm:$0xf]
        %v1275 = vld [vmem:[%s14 + $0xc] sm:$0xf]
        %v1276 = vld [vmem:[%s15] sm:$0xf]
        %v1277 = vld [vmem:[%s15 + $0x4] sm:$0xf]
        %v1278 = vld [vmem:[%s15 + $0x8] sm:$0xf]
        %v1279 = vld [vmem:[%s15 + $0xc] sm:$0xf]
        %v1280 = vpack.c.bf16 %v1263, %v1263
        %v1285 = vunpack.c.l.b16 %v1264
        %v1286 = vunpack.c.l.b16 %v1265
        %v1287 = vunpack.c.l.b16 %v1266
        %v1288 = vunpack.c.l.b16 %v1267
        %v1289 = vpack.c.b16 %v1286, %v1285
        %v1290 = vpack.c.b16 %v1288, %v1287
        %v1294 = vsel %vm693, %v1280, 0
        %1296 = vmatpush.bf16.msra.mxu0 0
        %1297 = vmatpush.bf16.msra.mxu0 0
        %1298 = vmatpush.bf16.msra.mxu0 0
        %1299 = vmatpush.bf16.msra.mxu0 0
        %1300 = vmatpush.bf16.msra.mxu0 0
        %1301 = vmatpush.bf16.msra.mxu0 0
        %1302 = vmatpush.bf16.msra.mxu0 %v1290
        %1303 = vmatpush.bf16.msra.mxu0 %v1289
        %1304 = vmatmul.bf16.gmra.mxu0 %v1294
        %v1305 = vpop.f32.mrf.mxu0
        %v1306 = vadd.f32 0.0, %v1305
        %v1307 = vpop.f32.mrf.mxu0
        %1308 = vdwg.mxu0
        %v1309 = vpack.c.bf16 %v711, %v710
        %v1310 = vpack.c.bf16 %v713, %v712
        %v1311 = vpack.c.bf16 %v715, %v714
        %v1312 = vpack.c.bf16 %v717, %v716
        %v1313 = vpack.c.bf16 %v719, %v718
        %v1314 = vpack.c.bf16 %v721, %v720
        %v1315 = vpack.c.bf16 %v723, %v722
        %v1316 = vpack.c.bf16 %v725, %v724
        %v1321 = vunpack.c.l.b16 %v1268
        %v1322 = vunpack.c.l.b16 %v1269
        %v1323 = vunpack.c.l.b16 %v1270
        %v1324 = vunpack.c.l.b16 %v1271
        %v1325 = vpack.c.b16 %v1322, %v1321
        %v1326 = vpack.c.b16 %v1324, %v1323
        %v1330 = vsel %vm693, %v1309, 0
        %v1333 = vsel %vm693, %v1310, 0
        %v1336 = vsel %vm693, %v1311, 0
        %v1339 = vsel %vm693, %v1312, 0
        %v1342 = vsel %vm693, %v1313, 0
        %v1345 = vsel %vm693, %v1314, 0
        %v1348 = vsel %vm693, %v1315, 0
        %v1351 = vsel %vm693, %v1316, 0
        %1353 = vmatpush.bf16.msra.mxu0 0
        %1354 = vmatpush.bf16.msra.mxu0 0
        %1355 = vmatpush.bf16.msra.mxu0 0
        %1356 = vmatpush.bf16.msra.mxu0 0
        %1357 = vmatpush.bf16.msra.mxu0 0
        %1358 = vmatpush.bf16.msra.mxu0 0
        %1359 = vmatpush.bf16.msra.mxu0 %v1326
        %1360 = vmatpush.bf16.msra.mxu0 %v1325
        %1361 = vmatmul.bf16.gmra.mxu0 %v1330
        %v1362 = vpop.f32.mrf.mxu0
        %v1363 = vadd.f32 0.0, %v1362
        %v1364 = vpop.f32.mrf.mxu0
        %v1365 = vadd.f32 0.0, %v1364
        %1366 = vmatmul.bf16.gmra.mxu0 %v1333
        %v1367 = vpop.f32.mrf.mxu0
        %v1368 = vadd.f32 0.0, %v1367
        %v1369 = vpop.f32.mrf.mxu0
        %v1370 = vadd.f32 0.0, %v1369
        %1371 = vmatmul.bf16.gmra.mxu0 %v1336
        %v1372 = vpop.f32.mrf.mxu0
        %v1373 = vadd.f32 0.0, %v1372
        %v1374 = vpop.f32.mrf.mxu0
        %v1375 = vadd.f32 0.0, %v1374
        %1376 = vmatmul.bf16.gmra.mxu0 %v1339
        %v1377 = vpop.f32.mrf.mxu0
        %v1378 = vadd.f32 0.0, %v1377
        %v1379 = vpop.f32.mrf.mxu0
        %v1380 = vadd.f32 0.0, %v1379
        %1381 = vmatmul.bf16.gmra.mxu0 %v1342
        %v1382 = vpop.f32.mrf.mxu0
        %v1383 = vadd.f32 0.0, %v1382
        %v1384 = vpop.f32.mrf.mxu0
        %v1385 = vadd.f32 0.0, %v1384
        %1386 = vmatmul.bf16.gmra.mxu0 %v1345
        %v1387 = vpop.f32.mrf.mxu0
        %v1388 = vadd.f32 0.0, %v1387
        %v1389 = vpop.f32.mrf.mxu0
        %v1390 = vadd.f32 0.0, %v1389
        %1391 = vmatmul.bf16.gmra.mxu0 %v1348
        %v1392 = vpop.f32.mrf.mxu0
        %v1393 = vadd.f32 0.0, %v1392
        %v1394 = vpop.f32.mrf.mxu0
        %v1395 = vadd.f32 0.0, %v1394
        %1396 = vmatmul.bf16.gmra.mxu0 %v1351
        %v1397 = vpop.f32.mrf.mxu0
        %v1398 = vadd.f32 0.0, %v1397
        %v1399 = vpop.f32.mrf.mxu0
        %v1400 = vadd.f32 0.0, %v1399
        %1401 = vdwg.mxu0
        %v1406 = vunpack.c.l.b16 %v1272
        %v1407 = vunpack.c.l.b16 %v1273
        %v1408 = vunpack.c.l.b16 %v1274
        %v1409 = vunpack.c.l.b16 %v1275
        %v1410 = vpack.c.b16 %v1407, %v1406
        %v1411 = vpack.c.b16 %v1409, %v1408
        %1414 = vmatpush.bf16.msra.mxu0 0
        %1415 = vmatpush.bf16.msra.mxu0 0
        %1416 = vmatpush.bf16.msra.mxu0 0
        %1417 = vmatpush.bf16.msra.mxu0 0
        %1418 = vmatpush.bf16.msra.mxu0 0
        %1419 = vmatpush.bf16.msra.mxu0 0
        %1420 = vmatpush.bf16.msra.mxu0 %v1411
        %1421 = vmatpush.bf16.msra.mxu0 %v1410
        %1422 = vmatmul.bf16.gmra.mxu0 %v1330
        %v1423 = vpop.f32.mrf.mxu0
        %v1424 = vadd.f32 0.0, %v1423
        %v1425 = vpop.f32.mrf.mxu0
        %v1426 = vadd.f32 0.0, %v1425
        %1427 = vmatmul.bf16.gmra.mxu0 %v1333
        %v1428 = vpop.f32.mrf.mxu0
        %v1429 = vadd.f32 0.0, %v1428
        %v1430 = vpop.f32.mrf.mxu0
        %v1431 = vadd.f32 0.0, %v1430
        %1432 = vmatmul.bf16.gmra.mxu0 %v1336
        %v1433 = vpop.f32.mrf.mxu0
        %v1434 = vadd.f32 0.0, %v1433
        %v1435 = vpop.f32.mrf.mxu0
        %v1436 = vadd.f32 0.0, %v1435
        %1437 = vmatmul.bf16.gmra.mxu0 %v1339
        %v1438 = vpop.f32.mrf.mxu0
        %v1439 = vadd.f32 0.0, %v1438
        %v1440 = vpop.f32.mrf.mxu0
        %v1441 = vadd.f32 0.0, %v1440
        %1442 = vmatmul.bf16.gmra.mxu0 %v1342
        %v1443 = vpop.f32.mrf.mxu0
        %v1444 = vadd.f32 0.0, %v1443
        %v1445 = vpop.f32.mrf.mxu0
        %v1446 = vadd.f32 0.0, %v1445
        %1447 = vmatmul.bf16.gmra.mxu0 %v1345
        %v1448 = vpop.f32.mrf.mxu0
        %v1449 = vadd.f32 0.0, %v1448
        %v1450 = vpop.f32.mrf.mxu0
        %v1451 = vadd.f32 0.0, %v1450
        %1452 = vmatmul.bf16.gmra.mxu0 %v1348
        %v1453 = vpop.f32.mrf.mxu0
        %v1454 = vadd.f32 0.0, %v1453
        %v1455 = vpop.f32.mrf.mxu0
        %v1456 = vadd.f32 0.0, %v1455
        %1457 = vmatmul.bf16.gmra.mxu0 %v1351
        %v1458 = vpop.f32.mrf.mxu0
        %v1459 = vadd.f32 0.0, %v1458
        %v1460 = vpop.f32.mrf.mxu0
        %v1461 = vadd.f32 0.0, %v1460
        %1462 = vdwg.mxu0
        %v1463 = vmul.f32 %v1306, 0.35355338
        %1465 = vrot.lane.b32.xlu0 %v1463, 120
        %v1466 = vpop.permute.xlu0 %1465
        %1468 = vrot.lane.b32.xlu0 %v1463, 112
        %v1469 = vpop.permute.xlu0 %1468
        %1471 = vrot.lane.b32.xlu0 %v1463, 104
        %v1472 = vpop.permute.xlu0 %1471
        %v1474 = vpack.c.bf16 %v1463, %v1463
        %v1475 = vpack.c.bf16 %v1466, %v1466
        %v1476 = vpack.c.bf16 %v1469, %v1469
        %v1477 = vpack.c.bf16 %v1472, %v1472
        %1494 = vrot.lane.b32.xlu0 %v1363, 120
        %v1495 = vpop.permute.xlu0 %1494
        %1496 = vrot.lane.b32.xlu0 %v1365, 120
        %v1497 = vpop.permute.xlu0 %1496
        %1498 = vrot.lane.b32.xlu0 %v1368, 120
        %v1499 = vpop.permute.xlu0 %1498
        %1500 = vrot.lane.b32.xlu0 %v1370, 120
        %v1501 = vpop.permute.xlu0 %1500
        %1502 = vrot.lane.b32.xlu0 %v1373, 120
        %v1503 = vpop.permute.xlu0 %1502
        %1504 = vrot.lane.b32.xlu0 %v1375, 120
        %v1505 = vpop.permute.xlu0 %1504
        %1506 = vrot.lane.b32.xlu0 %v1378, 120
        %v1507 = vpop.permute.xlu0 %1506
        %1508 = vrot.lane.b32.xlu0 %v1380, 120
        %v1509 = vpop.permute.xlu0 %1508
        %1510 = vrot.lane.b32.xlu0 %v1383, 120
        %v1511 = vpop.permute.xlu0 %1510
        %1512 = vrot.lane.b32.xlu0 %v1385, 120
        %v1513 = vpop.permute.xlu0 %1512
        %1514 = vrot.lane.b32.xlu0 %v1388, 120
        %v1515 = vpop.permute.xlu0 %1514
        %1516 = vrot.lane.b32.xlu0 %v1390, 120
        %v1517 = vpop.permute.xlu0 %1516
        %1518 = vrot.lane.b32.xlu0 %v1393, 120
        %v1519 = vpop.permute.xlu0 %1518
        %1520 = vrot.lane.b32.xlu0 %v1395, 120
        %v1521 = vpop.permute.xlu0 %1520
        %1522 = vrot.lane.b32.xlu0 %v1398, 120
        %v1523 = vpop.permute.xlu0 %1522
        %1524 = vrot.lane.b32.xlu0 %v1400, 120
        %v1525 = vpop.permute.xlu0 %1524
        %1542 = vrot.lane.b32.xlu0 %v1363, 112
        %v1543 = vpop.permute.xlu0 %1542
        %1544 = vrot.lane.b32.xlu0 %v1365, 112
        %v1545 = vpop.permute.xlu0 %1544
        %1546 = vrot.lane.b32.xlu0 %v1368, 112
        %v1547 = vpop.permute.xlu0 %1546
        %1548 = vrot.lane.b32.xlu0 %v1370, 112
        %v1549 = vpop.permute.xlu0 %1548
        %1550 = vrot.lane.b32.xlu0 %v1373, 112
        %v1551 = vpop.permute.xlu0 %1550
        %1552 = vrot.lane.b32.xlu0 %v1375, 112
        %v1553 = vpop.permute.xlu0 %1552
        %1554 = vrot.lane.b32.xlu0 %v1378, 112
        %v1555 = vpop.permute.xlu0 %1554
        %1556 = vrot.lane.b32.xlu0 %v1380, 112
        %v1557 = vpop.permute.xlu0 %1556
        %1558 = vrot.lane.b32.xlu0 %v1383, 112
        %v1559 = vpop.permute.xlu0 %1558
        %1560 = vrot.lane.b32.xlu0 %v1385, 112
        %v1561 = vpop.permute.xlu0 %1560
        %1562 = vrot.lane.b32.xlu0 %v1388, 112
        %v1563 = vpop.permute.xlu0 %1562
        %1564 = vrot.lane.b32.xlu0 %v1390, 112
        %v1565 = vpop.permute.xlu0 %1564
        %1566 = vrot.lane.b32.xlu0 %v1393, 112
        %v1567 = vpop.permute.xlu0 %1566
        %1568 = vrot.lane.b32.xlu0 %v1395, 112
        %v1569 = vpop.permute.xlu0 %1568
        %1570 = vrot.lane.b32.xlu0 %v1398, 112
        %v1571 = vpop.permute.xlu0 %1570
        %1572 = vrot.lane.b32.xlu0 %v1400, 112
        %v1573 = vpop.permute.xlu0 %1572
        %1590 = vrot.lane.b32.xlu0 %v1363, 104
        %v1591 = vpop.permute.xlu0 %1590
        %1592 = vrot.lane.b32.xlu0 %v1365, 104
        %v1593 = vpop.permute.xlu0 %1592
        %1594 = vrot.lane.b32.xlu0 %v1368, 104
        %v1595 = vpop.permute.xlu0 %1594
        %1596 = vrot.lane.b32.xlu0 %v1370, 104
        %v1597 = vpop.permute.xlu0 %1596
        %1598 = vrot.lane.b32.xlu0 %v1373, 104
        %v1599 = vpop.permute.xlu0 %1598
        %1600 = vrot.lane.b32.xlu0 %v1375, 104
        %v1601 = vpop.permute.xlu0 %1600
        %1602 = vrot.lane.b32.xlu0 %v1378, 104
        %v1603 = vpop.permute.xlu0 %1602
        %1604 = vrot.lane.b32.xlu0 %v1380, 104
        %v1605 = vpop.permute.xlu0 %1604
        %1606 = vrot.lane.b32.xlu0 %v1383, 104
        %v1607 = vpop.permute.xlu0 %1606
        %1608 = vrot.lane.b32.xlu0 %v1385, 104
        %v1609 = vpop.permute.xlu0 %1608
        %1610 = vrot.lane.b32.xlu0 %v1388, 104
        %v1611 = vpop.permute.xlu0 %1610
        %1612 = vrot.lane.b32.xlu0 %v1390, 104
        %v1613 = vpop.permute.xlu0 %1612
        %1614 = vrot.lane.b32.xlu0 %v1393, 104
        %v1615 = vpop.permute.xlu0 %1614
        %1616 = vrot.lane.b32.xlu0 %v1395, 104
        %v1617 = vpop.permute.xlu0 %1616
        %1618 = vrot.lane.b32.xlu0 %v1398, 104
        %v1619 = vpop.permute.xlu0 %1618
        %1620 = vrot.lane.b32.xlu0 %v1400, 104
        %v1621 = vpop.permute.xlu0 %1620
        %v1638 = vpack.c.bf16 %v1363, %v1363
        %v1639 = vpack.c.bf16 %v1365, %v1365
        %v1640 = vpack.c.bf16 %v1368, %v1368
        %v1641 = vpack.c.bf16 %v1370, %v1370
        %v1642 = vpack.c.bf16 %v1373, %v1373
        %v1643 = vpack.c.bf16 %v1375, %v1375
        %v1644 = vpack.c.bf16 %v1378, %v1378
        %v1645 = vpack.c.bf16 %v1380, %v1380
        %v1646 = vpack.c.bf16 %v1383, %v1383
        %v1647 = vpack.c.bf16 %v1385, %v1385
        %v1648 = vpack.c.bf16 %v1388, %v1388
        %v1649 = vpack.c.bf16 %v1390, %v1390
        %v1650 = vpack.c.bf16 %v1393, %v1393
        %v1651 = vpack.c.bf16 %v1395, %v1395
        %v1652 = vpack.c.bf16 %v1398, %v1398
        %v1653 = vpack.c.bf16 %v1400, %v1400
        %v1654 = vpack.c.bf16 %v1495, %v1495
        %v1655 = vpack.c.bf16 %v1497, %v1497
        %v1656 = vpack.c.bf16 %v1499, %v1499
        %v1657 = vpack.c.bf16 %v1501, %v1501
        %v1658 = vpack.c.bf16 %v1503, %v1503
        %v1659 = vpack.c.bf16 %v1505, %v1505
        %v1660 = vpack.c.bf16 %v1507, %v1507
        %v1661 = vpack.c.bf16 %v1509, %v1509
        %v1662 = vpack.c.bf16 %v1511, %v1511
        %v1663 = vpack.c.bf16 %v1513, %v1513
        %v1664 = vpack.c.bf16 %v1515, %v1515
        %v1665 = vpack.c.bf16 %v1517, %v1517
        %v1666 = vpack.c.bf16 %v1519, %v1519
        %v1667 = vpack.c.bf16 %v1521, %v1521
        %v1668 = vpack.c.bf16 %v1523, %v1523
        %v1669 = vpack.c.bf16 %v1525, %v1525
        %v1670 = vpack.c.bf16 %v1543, %v1543
        %v1671 = vpack.c.bf16 %v1545, %v1545
        %v1672 = vpack.c.bf16 %v1547, %v1547
        %v1673 = vpack.c.bf16 %v1549, %v1549
        %v1674 = vpack.c.bf16 %v1551, %v1551
        %v1675 = vpack.c.bf16 %v1553, %v1553
        %v1676 = vpack.c.bf16 %v1555, %v1555
        %v1677 = vpack.c.bf16 %v1557, %v1557
        %v1678 = vpack.c.bf16 %v1559, %v1559
        %v1679 = vpack.c.bf16 %v1561, %v1561
        %v1680 = vpack.c.bf16 %v1563, %v1563
        %v1681 = vpack.c.bf16 %v1565, %v1565
        %v1682 = vpack.c.bf16 %v1567, %v1567
        %v1683 = vpack.c.bf16 %v1569, %v1569
        %v1684 = vpack.c.bf16 %v1571, %v1571
        %v1685 = vpack.c.bf16 %v1573, %v1573
        %v1686 = vpack.c.bf16 %v1591, %v1591
        %v1687 = vpack.c.bf16 %v1593, %v1593
        %v1688 = vpack.c.bf16 %v1595, %v1595
        %v1689 = vpack.c.bf16 %v1597, %v1597
        %v1690 = vpack.c.bf16 %v1599, %v1599
        %v1691 = vpack.c.bf16 %v1601, %v1601
        %v1692 = vpack.c.bf16 %v1603, %v1603
        %v1693 = vpack.c.bf16 %v1605, %v1605
        %v1694 = vpack.c.bf16 %v1607, %v1607
        %v1695 = vpack.c.bf16 %v1609, %v1609
        %v1696 = vpack.c.bf16 %v1611, %v1611
        %v1697 = vpack.c.bf16 %v1613, %v1613
        %v1698 = vpack.c.bf16 %v1615, %v1615
        %v1699 = vpack.c.bf16 %v1617, %v1617
        %v1700 = vpack.c.bf16 %v1619, %v1619
        %v1701 = vpack.c.bf16 %v1621, %v1621
        %1718 = vrot.lane.b32.xlu0 %v1424, 120
        %v1719 = vpop.permute.xlu0 %1718
        %1720 = vrot.lane.b32.xlu0 %v1426, 120
        %v1721 = vpop.permute.xlu0 %1720
        %1722 = vrot.lane.b32.xlu0 %v1429, 120
        %v1723 = vpop.permute.xlu0 %1722
        %1724 = vrot.lane.b32.xlu0 %v1431, 120
        %v1725 = vpop.permute.xlu0 %1724
        %1726 = vrot.lane.b32.xlu0 %v1434, 120
        %v1727 = vpop.permute.xlu0 %1726
        %1728 = vrot.lane.b32.xlu0 %v1436, 120
        %v1729 = vpop.permute.xlu0 %1728
        %1730 = vrot.lane.b32.xlu0 %v1439, 120
        %v1731 = vpop.permute.xlu0 %1730
        %1732 = vrot.lane.b32.xlu0 %v1441, 120
        %v1733 = vpop.permute.xlu0 %1732
        %1734 = vrot.lane.b32.xlu0 %v1444, 120
        %v1735 = vpop.permute.xlu0 %1734
        %1736 = vrot.lane.b32.xlu0 %v1446, 120
        %v1737 = vpop.permute.xlu0 %1736
        %1738 = vrot.lane.b32.xlu0 %v1449, 120
        %v1739 = vpop.permute.xlu0 %1738
        %1740 = vrot.lane.b32.xlu0 %v1451, 120
        %v1741 = vpop.permute.xlu0 %1740
        %1742 = vrot.lane.b32.xlu0 %v1454, 120
        %v1743 = vpop.permute.xlu0 %1742
        %1744 = vrot.lane.b32.xlu0 %v1456, 120
        %v1745 = vpop.permute.xlu0 %1744
        %1746 = vrot.lane.b32.xlu0 %v1459, 120
        %v1747 = vpop.permute.xlu0 %1746
        %1748 = vrot.lane.b32.xlu0 %v1461, 120
        %v1749 = vpop.permute.xlu0 %1748
        %1766 = vrot.lane.b32.xlu0 %v1424, 112
        %v1767 = vpop.permute.xlu0 %1766
        %1768 = vrot.lane.b32.xlu0 %v1426, 112
        %v1769 = vpop.permute.xlu0 %1768
        %1770 = vrot.lane.b32.xlu0 %v1429, 112
        %v1771 = vpop.permute.xlu0 %1770
        %1772 = vrot.lane.b32.xlu0 %v1431, 112
        %v1773 = vpop.permute.xlu0 %1772
        %1774 = vrot.lane.b32.xlu0 %v1434, 112
        %v1775 = vpop.permute.xlu0 %1774
        %1776 = vrot.lane.b32.xlu0 %v1436, 112
        %v1777 = vpop.permute.xlu0 %1776
        %1778 = vrot.lane.b32.xlu0 %v1439, 112
        %v1779 = vpop.permute.xlu0 %1778
        %1780 = vrot.lane.b32.xlu0 %v1441, 112
        %v1781 = vpop.permute.xlu0 %1780
        %1782 = vrot.lane.b32.xlu0 %v1444, 112
        %v1783 = vpop.permute.xlu0 %1782
        %1784 = vrot.lane.b32.xlu0 %v1446, 112
        %v1785 = vpop.permute.xlu0 %1784
        %1786 = vrot.lane.b32.xlu0 %v1449, 112
        %v1787 = vpop.permute.xlu0 %1786
        %1788 = vrot.lane.b32.xlu0 %v1451, 112
        %v1789 = vpop.permute.xlu0 %1788
        %1790 = vrot.lane.b32.xlu0 %v1454, 112
        %v1791 = vpop.permute.xlu0 %1790
        %1792 = vrot.lane.b32.xlu0 %v1456, 112
        %v1793 = vpop.permute.xlu0 %1792
        %1794 = vrot.lane.b32.xlu0 %v1459, 112
        %v1795 = vpop.permute.xlu0 %1794
        %1796 = vrot.lane.b32.xlu0 %v1461, 112
        %v1797 = vpop.permute.xlu0 %1796
        %1814 = vrot.lane.b32.xlu0 %v1424, 104
        %v1815 = vpop.permute.xlu0 %1814
        %1816 = vrot.lane.b32.xlu0 %v1426, 104
        %v1817 = vpop.permute.xlu0 %1816
        %1818 = vrot.lane.b32.xlu0 %v1429, 104
        %v1819 = vpop.permute.xlu0 %1818
        %1820 = vrot.lane.b32.xlu0 %v1431, 104
        %v1821 = vpop.permute.xlu0 %1820
        %1822 = vrot.lane.b32.xlu0 %v1434, 104
        %v1823 = vpop.permute.xlu0 %1822
        %1824 = vrot.lane.b32.xlu0 %v1436, 104
        %v1825 = vpop.permute.xlu0 %1824
        %1826 = vrot.lane.b32.xlu0 %v1439, 104
        %v1827 = vpop.permute.xlu0 %1826
        %1828 = vrot.lane.b32.xlu0 %v1441, 104
        %v1829 = vpop.permute.xlu0 %1828
        %1830 = vrot.lane.b32.xlu0 %v1444, 104
        %v1831 = vpop.permute.xlu0 %1830
        %1832 = vrot.lane.b32.xlu0 %v1446, 104
        %v1833 = vpop.permute.xlu0 %1832
        %1834 = vrot.lane.b32.xlu0 %v1449, 104
        %v1835 = vpop.permute.xlu0 %1834
        %1836 = vrot.lane.b32.xlu0 %v1451, 104
        %v1837 = vpop.permute.xlu0 %1836
        %1838 = vrot.lane.b32.xlu0 %v1454, 104
        %v1839 = vpop.permute.xlu0 %1838
        %1840 = vrot.lane.b32.xlu0 %v1456, 104
        %v1841 = vpop.permute.xlu0 %1840
        %1842 = vrot.lane.b32.xlu0 %v1459, 104
        %v1843 = vpop.permute.xlu0 %1842
        %1844 = vrot.lane.b32.xlu0 %v1461, 104
        %v1845 = vpop.permute.xlu0 %1844
        %v1862 = vpack.c.bf16 %v1424, %v1424
        %v1863 = vpack.c.bf16 %v1426, %v1426
        %v1864 = vpack.c.bf16 %v1429, %v1429
        %v1865 = vpack.c.bf16 %v1431, %v1431
        %v1866 = vpack.c.bf16 %v1434, %v1434
        %v1867 = vpack.c.bf16 %v1436, %v1436
        %v1868 = vpack.c.bf16 %v1439, %v1439
        %v1869 = vpack.c.bf16 %v1441, %v1441
        %v1870 = vpack.c.bf16 %v1444, %v1444
        %v1871 = vpack.c.bf16 %v1446, %v1446
        %v1872 = vpack.c.bf16 %v1449, %v1449
        %v1873 = vpack.c.bf16 %v1451, %v1451
        %v1874 = vpack.c.bf16 %v1454, %v1454
        %v1875 = vpack.c.bf16 %v1456, %v1456
        %v1876 = vpack.c.bf16 %v1459, %v1459
        %v1877 = vpack.c.bf16 %v1461, %v1461
        %v1878 = vpack.c.bf16 %v1719, %v1719
        %v1879 = vpack.c.bf16 %v1721, %v1721
        %v1880 = vpack.c.bf16 %v1723, %v1723
        %v1881 = vpack.c.bf16 %v1725, %v1725
        %v1882 = vpack.c.bf16 %v1727, %v1727
        %v1883 = vpack.c.bf16 %v1729, %v1729
        %v1884 = vpack.c.bf16 %v1731, %v1731
        %v1885 = vpack.c.bf16 %v1733, %v1733
        %v1886 = vpack.c.bf16 %v1735, %v1735
        %v1887 = vpack.c.bf16 %v1737, %v1737
        %v1888 = vpack.c.bf16 %v1739, %v1739
        %v1889 = vpack.c.bf16 %v1741, %v1741
        %v1890 = vpack.c.bf16 %v1743, %v1743
        %v1891 = vpack.c.bf16 %v1745, %v1745
        %v1892 = vpack.c.bf16 %v1747, %v1747
        %v1893 = vpack.c.bf16 %v1749, %v1749
        %v1894 = vpack.c.bf16 %v1767, %v1767
        %v1895 = vpack.c.bf16 %v1769, %v1769
        %v1896 = vpack.c.bf16 %v1771, %v1771
        %v1897 = vpack.c.bf16 %v1773, %v1773
        %v1898 = vpack.c.bf16 %v1775, %v1775
        %v1899 = vpack.c.bf16 %v1777, %v1777
        %v1900 = vpack.c.bf16 %v1779, %v1779
        %v1901 = vpack.c.bf16 %v1781, %v1781
        %v1902 = vpack.c.bf16 %v1783, %v1783
        %v1903 = vpack.c.bf16 %v1785, %v1785
        %v1904 = vpack.c.bf16 %v1787, %v1787
        %v1905 = vpack.c.bf16 %v1789, %v1789
        %v1906 = vpack.c.bf16 %v1791, %v1791
        %v1907 = vpack.c.bf16 %v1793, %v1793
        %v1908 = vpack.c.bf16 %v1795, %v1795
        %v1909 = vpack.c.bf16 %v1797, %v1797
        %v1910 = vpack.c.bf16 %v1815, %v1815
        %v1911 = vpack.c.bf16 %v1817, %v1817
        %v1912 = vpack.c.bf16 %v1819, %v1819
        %v1913 = vpack.c.bf16 %v1821, %v1821
        %v1914 = vpack.c.bf16 %v1823, %v1823
        %v1915 = vpack.c.bf16 %v1825, %v1825
        %v1916 = vpack.c.bf16 %v1827, %v1827
        %v1917 = vpack.c.bf16 %v1829, %v1829
        %v1918 = vpack.c.bf16 %v1831, %v1831
        %v1919 = vpack.c.bf16 %v1833, %v1833
        %v1920 = vpack.c.bf16 %v1835, %v1835
        %v1921 = vpack.c.bf16 %v1837, %v1837
        %v1922 = vpack.c.bf16 %v1839, %v1839
        %v1923 = vpack.c.bf16 %v1841, %v1841
        %v1924 = vpack.c.bf16 %v1843, %v1843
        %v1925 = vpack.c.bf16 %v1845, %v1845
        %v1927 = vperm.slane %v740, 0
        %v1945 = vunpack.c.l.b16 %v1638
        %v1946 = vunpack.c.l.b16 %v1639
        %v1947 = vunpack.c.l.b16 %v1640
        %v1948 = vunpack.c.l.b16 %v1641
        %v1949 = vunpack.c.l.b16 %v1642
        %v1950 = vunpack.c.l.b16 %v1643
        %v1951 = vunpack.c.l.b16 %v1644
        %v1952 = vunpack.c.l.b16 %v1645
        %v1953 = vunpack.c.l.b16 %v1646
        %v1954 = vunpack.c.l.b16 %v1647
        %v1955 = vunpack.c.l.b16 %v1648
        %v1956 = vunpack.c.l.b16 %v1649
        %v1957 = vunpack.c.l.b16 %v1650
        %v1958 = vunpack.c.l.b16 %v1651
        %v1959 = vunpack.c.l.b16 %v1652
        %v1960 = vunpack.c.l.b16 %v1653
        %v1961 = vpack.c.b16 %v1946, %v1945
        %v1962 = vpack.c.b16 %v1948, %v1947
        %v1963 = vpack.c.b16 %v1950, %v1949
        %v1964 = vpack.c.b16 %v1952, %v1951
        %v1965 = vpack.c.b16 %v1954, %v1953
        %v1966 = vpack.c.b16 %v1956, %v1955
        %v1967 = vpack.c.b16 %v1958, %v1957
        %v1968 = vpack.c.b16 %v1960, %v1959
        %v1970 = vsel %vm937, %v1474, 0
        %v1973 = vsel %vm937, %v1961, 0
        %v1976 = vsel %vm937, %v1962, 0
        %v1979 = vsel %vm937, %v1963, 0
        %v1982 = vsel %vm937, %v1964, 0
        %v1985 = vsel %vm937, %v1965, 0
        %v1988 = vsel %vm937, %v1966, 0
        %v1991 = vsel %vm937, %v1967, 0
        %v1994 = vsel %vm937, %v1968, 0
        %1996 = vmatpush.bf16.xpose.msra.mxu0 %v1994
        %1997 = vmatpush.bf16.xpose.msra.mxu0 %v1991
        %1998 = vmatpush.bf16.xpose.msra.mxu0 %v1988
        %1999 = vmatpush.bf16.xpose.msra.mxu0 %v1985
        %2000 = vmatpush.bf16.xpose.msra.mxu0 %v1982
        %2001 = vmatpush.bf16.xpose.msra.mxu0 %v1979
        %2002 = vmatpush.bf16.xpose.msra.mxu0 %v1976
        %2003 = vmatpush.bf16.xpose.msra.mxu0 %v1973
        %2004 = vmatmul.bf16.gmra.mxu0 %v1970
        %v2005 = vpop.f32.mrf.mxu0
        %v2006 = vadd.f32 %v1927, %v2005
        %v2007 = vpop.f32.mrf.mxu0
        %2008 = vdwg.mxu0
        %v2025 = vunpack.c.l.b16 %v1654
        %v2026 = vunpack.c.l.b16 %v1655
        %v2027 = vunpack.c.l.b16 %v1656
        %v2028 = vunpack.c.l.b16 %v1657
        %v2029 = vunpack.c.l.b16 %v1658
        %v2030 = vunpack.c.l.b16 %v1659
        %v2031 = vunpack.c.l.b16 %v1660
        %v2032 = vunpack.c.l.b16 %v1661
        %v2033 = vunpack.c.l.b16 %v1662
        %v2034 = vunpack.c.l.b16 %v1663
        %v2035 = vunpack.c.l.b16 %v1664
        %v2036 = vunpack.c.l.b16 %v1665
        %v2037 = vunpack.c.l.b16 %v1666
        %v2038 = vunpack.c.l.b16 %v1667
        %v2039 = vunpack.c.l.b16 %v1668
        %v2040 = vunpack.c.l.b16 %v1669
        %v2041 = vpack.c.b16 %v2026, %v2025
        %v2042 = vpack.c.b16 %v2028, %v2027
        %v2043 = vpack.c.b16 %v2030, %v2029
        %v2044 = vpack.c.b16 %v2032, %v2031
        %v2045 = vpack.c.b16 %v2034, %v2033
        %v2046 = vpack.c.b16 %v2036, %v2035
        %v2047 = vpack.c.b16 %v2038, %v2037
        %v2048 = vpack.c.b16 %v2040, %v2039
        %v2050 = vsel %vm937, %v1475, 0
        %v2053 = vsel %vm937, %v2041, 0
        %v2056 = vsel %vm937, %v2042, 0
        %v2059 = vsel %vm937, %v2043, 0
        %v2062 = vsel %vm937, %v2044, 0
        %v2065 = vsel %vm937, %v2045, 0
        %v2068 = vsel %vm937, %v2046, 0
        %v2071 = vsel %vm937, %v2047, 0
        %v2074 = vsel %vm937, %v2048, 0
        %2076 = vmatpush.bf16.xpose.msra.mxu0 %v2074
        %2077 = vmatpush.bf16.xpose.msra.mxu0 %v2071
        %2078 = vmatpush.bf16.xpose.msra.mxu0 %v2068
        %2079 = vmatpush.bf16.xpose.msra.mxu0 %v2065
        %2080 = vmatpush.bf16.xpose.msra.mxu0 %v2062
        %2081 = vmatpush.bf16.xpose.msra.mxu0 %v2059
        %2082 = vmatpush.bf16.xpose.msra.mxu0 %v2056
        %2083 = vmatpush.bf16.xpose.msra.mxu0 %v2053
        %2084 = vmatmul.bf16.gmra.mxu0 %v2050
        %v2085 = vpop.f32.mrf.mxu0
        %v2086 = vadd.f32 %v1927, %v2085
        %v2087 = vpop.f32.mrf.mxu0
        %2088 = vdwg.mxu0
        %v2105 = vunpack.c.l.b16 %v1670
        %v2106 = vunpack.c.l.b16 %v1671
        %v2107 = vunpack.c.l.b16 %v1672
        %v2108 = vunpack.c.l.b16 %v1673
        %v2109 = vunpack.c.l.b16 %v1674
        %v2110 = vunpack.c.l.b16 %v1675
        %v2111 = vunpack.c.l.b16 %v1676
        %v2112 = vunpack.c.l.b16 %v1677
        %v2113 = vunpack.c.l.b16 %v1678
        %v2114 = vunpack.c.l.b16 %v1679
        %v2115 = vunpack.c.l.b16 %v1680
        %v2116 = vunpack.c.l.b16 %v1681
        %v2117 = vunpack.c.l.b16 %v1682
        %v2118 = vunpack.c.l.b16 %v1683
        %v2119 = vunpack.c.l.b16 %v1684
        %v2120 = vunpack.c.l.b16 %v1685
        %v2121 = vpack.c.b16 %v2106, %v2105
        %v2122 = vpack.c.b16 %v2108, %v2107
        %v2123 = vpack.c.b16 %v2110, %v2109
        %v2124 = vpack.c.b16 %v2112, %v2111
        %v2125 = vpack.c.b16 %v2114, %v2113
        %v2126 = vpack.c.b16 %v2116, %v2115
        %v2127 = vpack.c.b16 %v2118, %v2117
        %v2128 = vpack.c.b16 %v2120, %v2119
        %v2130 = vsel %vm937, %v1476, 0
        %v2133 = vsel %vm937, %v2121, 0
        %v2136 = vsel %vm937, %v2122, 0
        %v2139 = vsel %vm937, %v2123, 0
        %v2142 = vsel %vm937, %v2124, 0
        %v2145 = vsel %vm937, %v2125, 0
        %v2148 = vsel %vm937, %v2126, 0
        %v2151 = vsel %vm937, %v2127, 0
        %v2154 = vsel %vm937, %v2128, 0
        %2156 = vmatpush.bf16.xpose.msra.mxu0 %v2154
        %2157 = vmatpush.bf16.xpose.msra.mxu0 %v2151
        %2158 = vmatpush.bf16.xpose.msra.mxu0 %v2148
        %2159 = vmatpush.bf16.xpose.msra.mxu0 %v2145
        %2160 = vmatpush.bf16.xpose.msra.mxu0 %v2142
        %2161 = vmatpush.bf16.xpose.msra.mxu0 %v2139
        %2162 = vmatpush.bf16.xpose.msra.mxu0 %v2136
        %2163 = vmatpush.bf16.xpose.msra.mxu0 %v2133
        %2164 = vmatmul.bf16.gmra.mxu0 %v2130
        %v2165 = vpop.f32.mrf.mxu0
        %v2166 = vadd.f32 %v1927, %v2165
        %v2167 = vpop.f32.mrf.mxu0
        %2168 = vdwg.mxu0
        %v2185 = vunpack.c.l.b16 %v1686
        %v2186 = vunpack.c.l.b16 %v1687
        %v2187 = vunpack.c.l.b16 %v1688
        %v2188 = vunpack.c.l.b16 %v1689
        %v2189 = vunpack.c.l.b16 %v1690
        %v2190 = vunpack.c.l.b16 %v1691
        %v2191 = vunpack.c.l.b16 %v1692
        %v2192 = vunpack.c.l.b16 %v1693
        %v2193 = vunpack.c.l.b16 %v1694
        %v2194 = vunpack.c.l.b16 %v1695
        %v2195 = vunpack.c.l.b16 %v1696
        %v2196 = vunpack.c.l.b16 %v1697
        %v2197 = vunpack.c.l.b16 %v1698
        %v2198 = vunpack.c.l.b16 %v1699
        %v2199 = vunpack.c.l.b16 %v1700
        %v2200 = vunpack.c.l.b16 %v1701
        %v2201 = vpack.c.b16 %v2186, %v2185
        %v2202 = vpack.c.b16 %v2188, %v2187
        %v2203 = vpack.c.b16 %v2190, %v2189
        %v2204 = vpack.c.b16 %v2192, %v2191
        %v2205 = vpack.c.b16 %v2194, %v2193
        %v2206 = vpack.c.b16 %v2196, %v2195
        %v2207 = vpack.c.b16 %v2198, %v2197
        %v2208 = vpack.c.b16 %v2200, %v2199
        %v2210 = vsel %vm937, %v1477, 0
        %v2213 = vsel %vm937, %v2201, 0
        %v2216 = vsel %vm937, %v2202, 0
        %v2219 = vsel %vm937, %v2203, 0
        %v2222 = vsel %vm937, %v2204, 0
        %v2225 = vsel %vm937, %v2205, 0
        %v2228 = vsel %vm937, %v2206, 0
        %v2231 = vsel %vm937, %v2207, 0
        %v2234 = vsel %vm937, %v2208, 0
        %2236 = vmatpush.bf16.xpose.msra.mxu0 %v2234
        %2237 = vmatpush.bf16.xpose.msra.mxu0 %v2231
        %2238 = vmatpush.bf16.xpose.msra.mxu0 %v2228
        %2239 = vmatpush.bf16.xpose.msra.mxu0 %v2225
        %2240 = vmatpush.bf16.xpose.msra.mxu0 %v2222
        %2241 = vmatpush.bf16.xpose.msra.mxu0 %v2219
        %2242 = vmatpush.bf16.xpose.msra.mxu0 %v2216
        %2243 = vmatpush.bf16.xpose.msra.mxu0 %v2213
        %2244 = vmatmul.bf16.gmra.mxu0 %v2210
        %v2245 = vpop.f32.mrf.mxu0
        %v2246 = vadd.f32 %v1927, %v2245
        %v2247 = vpop.f32.mrf.mxu0
        %2248 = vdwg.mxu0
        %2249 = vmax.xlane.f32.xlu0 %v2006
        %v2250 = vpop.xlane.xlu0 %2249
        %2251 = vmax.xlane.f32.xlu0 %v2086
        %v2252 = vpop.xlane.xlu0 %2251
        %2253 = vmax.xlane.f32.xlu0 %v2166
        %v2254 = vpop.xlane.xlu0 %2253
        %2255 = vmax.xlane.f32.xlu0 %v2246
        %v2256 = vpop.xlane.xlu0 %2255
        %v2257 = vsub.f32 %v2006, %v2250
        %v2258 = vsub.f32 %v2086, %v2252
        %v2259 = vsub.f32 %v2166, %v2254
        %v2260 = vsub.f32 %v2246, %v2256
        %v2261 = vmul.f32 %v2257, 1.442695
        %v2262 = vpow.pop %v2261
        %v2263 = vmul.f32 %v2258, 1.442695
        %v2264 = vpow.pop %v2263
        %v2265 = vmul.f32 %v2259, 1.442695
        %v2266 = vpow.pop %v2265
        %v2267 = vmul.f32 %v2260, 1.442695
        %v2268 = vpow.pop %v2267
        %2269 = vadd.xlane.f32.xlu0 %v2262
        %v2270 = vpop.xlane.xlu0 %2269
        %2271 = vadd.xlane.f32.xlu0 %v2264
        %v2272 = vpop.xlane.xlu0 %2271
        %2273 = vadd.xlane.f32.xlu0 %v2266
        %v2274 = vpop.xlane.xlu0 %2273
        %2275 = vadd.xlane.f32.xlu0 %v2268
        %v2276 = vpop.xlane.xlu0 %2275
        %v2277 = vrcp.pop %v2270
        %v2278 = vrcp.pop %v2272
        %v2279 = vrcp.pop %v2274
        %v2280 = vrcp.pop %v2276
        %v2281 = vmul.f32 %v2262, %v2277
        %v2282 = vmul.f32 %v2264, %v2278
        %v2283 = vmul.f32 %v2266, %v2279
        %v2284 = vmul.f32 %v2268, %v2280
        %v2285 = vpack.c.bf16 %v2281, %v2281
        %v2286 = vpack.c.bf16 %v2282, %v2282
        %v2287 = vpack.c.bf16 %v2283, %v2283
        %v2288 = vpack.c.bf16 %v2284, %v2284
        %v2305 = vunpack.c.l.b16 %v1862
        %v2306 = vunpack.c.l.b16 %v1863
        %v2307 = vunpack.c.l.b16 %v1864
        %v2308 = vunpack.c.l.b16 %v1865
        %v2309 = vunpack.c.l.b16 %v1866
        %v2310 = vunpack.c.l.b16 %v1867
        %v2311 = vunpack.c.l.b16 %v1868
        %v2312 = vunpack.c.l.b16 %v1869
        %v2313 = vunpack.c.l.b16 %v1870
        %v2314 = vunpack.c.l.b16 %v1871
        %v2315 = vunpack.c.l.b16 %v1872
        %v2316 = vunpack.c.l.b16 %v1873
        %v2317 = vunpack.c.l.b16 %v1874
        %v2318 = vunpack.c.l.b16 %v1875
        %v2319 = vunpack.c.l.b16 %v1876
        %v2320 = vunpack.c.l.b16 %v1877
        %v2321 = vpack.c.b16 %v2306, %v2305
        %v2322 = vpack.c.b16 %v2308, %v2307
        %v2323 = vpack.c.b16 %v2310, %v2309
        %v2324 = vpack.c.b16 %v2312, %v2311
        %v2325 = vpack.c.b16 %v2314, %v2313
        %v2326 = vpack.c.b16 %v2316, %v2315
        %v2327 = vpack.c.b16 %v2318, %v2317
        %v2328 = vpack.c.b16 %v2320, %v2319
        %2337 = vmatpush.bf16.msra.mxu0 %v2328
        %2338 = vmatpush.bf16.msra.mxu0 %v2327
        %2339 = vmatpush.bf16.msra.mxu0 %v2326
        %2340 = vmatpush.bf16.msra.mxu0 %v2325
        %2341 = vmatpush.bf16.msra.mxu0 %v2324
        %2342 = vmatpush.bf16.msra.mxu0 %v2323
        %2343 = vmatpush.bf16.msra.mxu0 %v2322
        %2344 = vmatpush.bf16.msra.mxu0 %v2321
        %2345 = vmatmul.bf16.gmra.mxu0 %v2285
        %v2346 = vpop.f32.mrf.mxu0
        %v2347 = vadd.f32 0.0, %v2346
        %v2348 = vpop.f32.mrf.mxu0
        %2349 = vdwg.mxu0
        %v2366 = vunpack.c.l.b16 %v1878
        %v2367 = vunpack.c.l.b16 %v1879
        %v2368 = vunpack.c.l.b16 %v1880
        %v2369 = vunpack.c.l.b16 %v1881
        %v2370 = vunpack.c.l.b16 %v1882
        %v2371 = vunpack.c.l.b16 %v1883
        %v2372 = vunpack.c.l.b16 %v1884
        %v2373 = vunpack.c.l.b16 %v1885
        %v2374 = vunpack.c.l.b16 %v1886
        %v2375 = vunpack.c.l.b16 %v1887
        %v2376 = vunpack.c.l.b16 %v1888
        %v2377 = vunpack.c.l.b16 %v1889
        %v2378 = vunpack.c.l.b16 %v1890
        %v2379 = vunpack.c.l.b16 %v1891
        %v2380 = vunpack.c.l.b16 %v1892
        %v2381 = vunpack.c.l.b16 %v1893
        %v2382 = vpack.c.b16 %v2367, %v2366
        %v2383 = vpack.c.b16 %v2369, %v2368
        %v2384 = vpack.c.b16 %v2371, %v2370
        %v2385 = vpack.c.b16 %v2373, %v2372
        %v2386 = vpack.c.b16 %v2375, %v2374
        %v2387 = vpack.c.b16 %v2377, %v2376
        %v2388 = vpack.c.b16 %v2379, %v2378
        %v2389 = vpack.c.b16 %v2381, %v2380
        %2398 = vmatpush.bf16.msra.mxu0 %v2389
        %2399 = vmatpush.bf16.msra.mxu0 %v2388
        %2400 = vmatpush.bf16.msra.mxu0 %v2387
        %2401 = vmatpush.bf16.msra.mxu0 %v2386
        %2402 = vmatpush.bf16.msra.mxu0 %v2385
        %2403 = vmatpush.bf16.msra.mxu0 %v2384
        %2404 = vmatpush.bf16.msra.mxu0 %v2383
        %2405 = vmatpush.bf16.msra.mxu0 %v2382
        %2406 = vmatmul.bf16.gmra.mxu0 %v2286
        %v2407 = vpop.f32.mrf.mxu0
        %v2408 = vadd.f32 0.0, %v2407
        %v2409 = vpop.f32.mrf.mxu0
        %2410 = vdwg.mxu0
        %v2427 = vunpack.c.l.b16 %v1894
        %v2428 = vunpack.c.l.b16 %v1895
        %v2429 = vunpack.c.l.b16 %v1896
        %v2430 = vunpack.c.l.b16 %v1897
        %v2431 = vunpack.c.l.b16 %v1898
        %v2432 = vunpack.c.l.b16 %v1899
        %v2433 = vunpack.c.l.b16 %v1900
        %v2434 = vunpack.c.l.b16 %v1901
        %v2435 = vunpack.c.l.b16 %v1902
        %v2436 = vunpack.c.l.b16 %v1903
        %v2437 = vunpack.c.l.b16 %v1904
        %v2438 = vunpack.c.l.b16 %v1905
        %v2439 = vunpack.c.l.b16 %v1906
        %v2440 = vunpack.c.l.b16 %v1907
        %v2441 = vunpack.c.l.b16 %v1908
        %v2442 = vunpack.c.l.b16 %v1909
        %v2443 = vpack.c.b16 %v2428, %v2427
        %v2444 = vpack.c.b16 %v2430, %v2429
        %v2445 = vpack.c.b16 %v2432, %v2431
        %v2446 = vpack.c.b16 %v2434, %v2433
        %v2447 = vpack.c.b16 %v2436, %v2435
        %v2448 = vpack.c.b16 %v2438, %v2437
        %v2449 = vpack.c.b16 %v2440, %v2439
        %v2450 = vpack.c.b16 %v2442, %v2441
        %2459 = vmatpush.bf16.msra.mxu0 %v2450
        %2460 = vmatpush.bf16.msra.mxu0 %v2449
        %2461 = vmatpush.bf16.msra.mxu0 %v2448
        %2462 = vmatpush.bf16.msra.mxu0 %v2447
        %2463 = vmatpush.bf16.msra.mxu0 %v2446
        %2464 = vmatpush.bf16.msra.mxu0 %v2445
        %2465 = vmatpush.bf16.msra.mxu0 %v2444
        %2466 = vmatpush.bf16.msra.mxu0 %v2443
        %2467 = vmatmul.bf16.gmra.mxu0 %v2287
        %v2468 = vpop.f32.mrf.mxu0
        %v2469 = vadd.f32 0.0, %v2468
        %v2470 = vpop.f32.mrf.mxu0
        %2471 = vdwg.mxu0
        %v2488 = vunpack.c.l.b16 %v1910
        %v2489 = vunpack.c.l.b16 %v1911
        %v2490 = vunpack.c.l.b16 %v1912
        %v2491 = vunpack.c.l.b16 %v1913
        %v2492 = vunpack.c.l.b16 %v1914
        %v2493 = vunpack.c.l.b16 %v1915
        %v2494 = vunpack.c.l.b16 %v1916
        %v2495 = vunpack.c.l.b16 %v1917
        %v2496 = vunpack.c.l.b16 %v1918
        %v2497 = vunpack.c.l.b16 %v1919
        %v2498 = vunpack.c.l.b16 %v1920
        %v2499 = vunpack.c.l.b16 %v1921
        %v2500 = vunpack.c.l.b16 %v1922
        %v2501 = vunpack.c.l.b16 %v1923
        %v2502 = vunpack.c.l.b16 %v1924
        %v2503 = vunpack.c.l.b16 %v1925
        %v2504 = vpack.c.b16 %v2489, %v2488
        %v2505 = vpack.c.b16 %v2491, %v2490
        %v2506 = vpack.c.b16 %v2493, %v2492
        %v2507 = vpack.c.b16 %v2495, %v2494
        %v2508 = vpack.c.b16 %v2497, %v2496
        %v2509 = vpack.c.b16 %v2499, %v2498
        %v2510 = vpack.c.b16 %v2501, %v2500
        %v2511 = vpack.c.b16 %v2503, %v2502
        %2520 = vmatpush.bf16.msra.mxu0 %v2511
        %2521 = vmatpush.bf16.msra.mxu0 %v2510
        %2522 = vmatpush.bf16.msra.mxu0 %v2509
        %2523 = vmatpush.bf16.msra.mxu0 %v2508
        %2524 = vmatpush.bf16.msra.mxu0 %v2507
        %2525 = vmatpush.bf16.msra.mxu0 %v2506
        %2526 = vmatpush.bf16.msra.mxu0 %v2505
        %2527 = vmatpush.bf16.msra.mxu0 %v2504
        %2528 = vmatmul.bf16.gmra.mxu0 %v2288
        %v2529 = vpop.f32.mrf.mxu0
        %v2530 = vadd.f32 0.0, %v2529
        %v2531 = vpop.f32.mrf.mxu0
        %2532 = vdwg.mxu0
        %v2533 = vpack.c.bf16 %v2347, %v2347
        %v2534 = vpack.c.bf16 %v2408, %v2408
        %v2536 = vsel %vm937, %v2534, 0
        %v2539 = vsel %vm1065, %v1277, 0
        %2541 = vmatpush.bf16.msra.mxu0 0
        %2542 = vmatpush.bf16.msra.mxu0 0
        %2543 = vmatpush.bf16.msra.mxu0 0
        %2544 = vmatpush.bf16.msra.mxu0 0
        %2545 = vmatpush.bf16.msra.mxu0 0
        %2546 = vmatpush.bf16.msra.mxu0 0
        %2547 = vmatpush.bf16.msra.mxu0 0
        %2548 = vmatpush.bf16.msra.mxu0 %v2539
        %2549 = vmatmul.bf16.gmra.mxu0 %v2536
        %v2550 = vpop.f32.mrf.mxu0
        %v2551 = vadd.f32 0.0, %v2550
        %v2552 = vpop.f32.mrf.mxu0
        %2553 = vdwg.mxu0
        %v2555 = vsel %vm937, %v2533, 0
        %v2558 = vsel %vm1065, %v1276, 0
        %2560 = vmatpush.bf16.msra.mxu0 0
        %2561 = vmatpush.bf16.msra.mxu0 0
        %2562 = vmatpush.bf16.msra.mxu0 0
        %2563 = vmatpush.bf16.msra.mxu0 0
        %2564 = vmatpush.bf16.msra.mxu0 0
        %2565 = vmatpush.bf16.msra.mxu0 0
        %2566 = vmatpush.bf16.msra.mxu0 0
        %2567 = vmatpush.bf16.msra.mxu0 %v2558
        %2568 = vmatmul.bf16.gmra.mxu0 %v2555
        %v2569 = vpop.f32.mrf.mxu0
        %v2570 = vadd.f32 %v2551, %v2569
        %v2571 = vpop.f32.mrf.mxu0
        %2572 = vdwg.mxu0
        %v2573 = vpack.c.bf16 %v2469, %v2469
        %v2575 = vsel %vm937, %v2573, 0
        %v2578 = vsel %vm1065, %v1278, 0
        %2580 = vmatpush.bf16.msra.mxu0 0
        %2581 = vmatpush.bf16.msra.mxu0 0
        %2582 = vmatpush.bf16.msra.mxu0 0
        %2583 = vmatpush.bf16.msra.mxu0 0
        %2584 = vmatpush.bf16.msra.mxu0 0
        %2585 = vmatpush.bf16.msra.mxu0 0
        %2586 = vmatpush.bf16.msra.mxu0 0
        %2587 = vmatpush.bf16.msra.mxu0 %v2578
        %2588 = vmatmul.bf16.gmra.mxu0 %v2575
        %v2589 = vpop.f32.mrf.mxu0
        %v2590 = vadd.f32 0.0, %v2589
        %v2591 = vpop.f32.mrf.mxu0
        %2592 = vdwg.mxu0
        %v2593 = vadd.f32 %v2570, %v2590
        %v2594 = vpack.c.bf16 %v2530, %v2530
        %v2596 = vsel %vm937, %v2594, 0
        %v2599 = vsel %vm1065, %v1279, 0
        %2601 = vmatpush.bf16.msra.mxu0 0
        %2602 = vmatpush.bf16.msra.mxu0 0
        %2603 = vmatpush.bf16.msra.mxu0 0
        %2604 = vmatpush.bf16.msra.mxu0 0
        %2605 = vmatpush.bf16.msra.mxu0 0
        %2606 = vmatpush.bf16.msra.mxu0 0
        %2607 = vmatpush.bf16.msra.mxu0 0
        %2608 = vmatpush.bf16.msra.mxu0 %v2599
        %2609 = vmatmul.bf16.gmra.mxu0 %v2596
        %v2610 = vpop.f32.mrf.mxu0
        %v2611 = vadd.f32 0.0, %v2610
        %v2612 = vpop.f32.mrf.mxu0
        %2613 = vdwg.mxu0
        %v2614 = vadd.f32 %v2593, %v2611
        %v2615 = vadd.f32 %v1221, %v2614
        %v2616 = vsel %vm693, %v2615, 0.0
        %2617 = vadd.xlane.f32.xlu0 %v2616
        %v2618 = vpop.xlane.xlu0 %2617
        %v2619 = vmul.f32 %v2618, %v752
        %v2620 = vsub.f32 %v2615, %v2619
        %v2621 = vmul.f32 %v2620, %v2620
        %v2622 = vsel %vm693, %v2621, 0.0
        %2623 = vadd.xlane.f32.xlu0 %v2622
        %v2624 = vpop.xlane.xlu0 %2623
        %v2625 = vmul.f32 %v2624, %v765
        %v2626 = vrsqrt.pop %v2625
        %v2627 = vmul.f32 %v2626, %v2625
        %v2628 = vmul.f32 %v2627, %v2626
        %v2629 = vmul.f32 0.5, %v2628
        %v2630 = vsub.f32 1.5, %v2629
        %v2631 = vmul.f32 %v2626, %v2630
        %v2632 = vmul.f32 %v2625, %v2631
        %vm2633 = vcmp.eq.f32.partialorder %v2625, inf
        %v2634 = vsel %vm2633, %v2625, %v2632
        %vm2635 = vcmp.eq.f32.partialorder %v2625, 0.0
        %v2636 = vand.u32 %v2625, 2147483648
        %v2637 = vsel %vm2635, %v2636, %v2634
        %v2638 = vadd.f32 %v2637, 1e-06
        %v2639 = vrcp.pop %v2638
        %v2640 = vmul.f32 %v2638, %v2639
        %v2641 = vsub.f32 1.0, %v2640
        %v2642 = vmul.f32 %v2639, %v2641
        %v2643 = vadd.f32 %v2639, %v2642
        %vm2644 = vweird.f32 %v2638
        %vm2645 = vweird.f32 %v2639
        %vm2646 = vmor %vm2644, %vm2645
        %v2647 = vsel %vm2646, %v2639, %v2643
        %v2648 = vand.u32 2147483647, %v2638
        %vm2649 = vcmp.eq.f32.partialorder %v2648, 8.507059e+37
        %v2650 = vand.u32 %v2638, 2147483648
        %v2651 = vor.u32 1.1754944e-38, %v2650
        %v2652 = vsel %vm2649, %v2651, %v2647
        %v2653 = vmul.f32 %v2620, %v2652
        %v2654 = vperm.slane %v741, 2
        %v2655 = vmul.f32 %v2653, %v2654
        %v2656 = vperm.slane %v742, 2
        %v2657 = vadd.f32 %v2655, %v2656
        %v2658 = vpack.c.bf16 %v2657, %v2657
        %v2659 = vld [vmem:[%s16] sm:$0xf]
        %v2660 = vld [vmem:[%s16 + $0x4] sm:$0xf]
        %v2661 = vld [vmem:[%s16 + $0x8] sm:$0xf]
        %v2662 = vld [vmem:[%s16 + $0xc] sm:$0xf]
        %v2663 = vld [vmem:[%s17] sm:$0x1]
        %v2665 = vperm.slane %v2663, 0
        %v2671 = vunpack.c.l.b16 %v2659
        %v2672 = vunpack.c.l.b16 %v2660
        %v2673 = vunpack.c.l.b16 %v2661
        %v2674 = vunpack.c.l.b16 %v2662
        %v2675 = vpack.c.b16 %v2672, %v2671
        %v2676 = vpack.c.b16 %v2674, %v2673
        %v2680 = vsel %vm693, %v2658, 0
        %2682 = vmatpush.bf16.msra.mxu0 0
        %2683 = vmatpush.bf16.msra.mxu0 0
        %2684 = vmatpush.bf16.msra.mxu0 0
        %2685 = vmatpush.bf16.msra.mxu0 0
        %2686 = vmatpush.bf16.msra.mxu0 0
        %2687 = vmatpush.bf16.msra.mxu0 0
        %2688 = vmatpush.bf16.msra.mxu0 %v2676
        %2689 = vmatpush.bf16.msra.mxu0 %v2675
        %2690 = vmatmul.bf16.gmra.mxu0 %v2680
        %v2691 = vpop.f32.mrf.mxu0
        %v2692 = vadd.f32 %v2665, %v2691
        %v2693 = vpop.f32.mrf.mxu0
        %2694 = vdwg.mxu0
        %v2695 = vmax.f32 %v2692, 0.0
        %v2696 = vpack.c.bf16 %v2695, %v2695
        %v2697 = vld [vmem:[%s18] sm:$0xf]
        %v2698 = vld [vmem:[%s18 + $0x4] sm:$0xf]
        %v2699 = vld [vmem:[%s18 + $0x8] sm:$0xf]
        %v2700 = vld [vmem:[%s18 + $0xc] sm:$0xf]
        %v2701 = vld [vmem:[%s18 + $0x10] sm:$0xf]
        %v2702 = vld [vmem:[%s18 + $0x14] sm:$0xf]
        %v2703 = vld [vmem:[%s18 + $0x18] sm:$0xf]
        %v2704 = vld [vmem:[%s18 + $0x1c] sm:$0xf]
        %v2705 = vld [vmem:[%s19] sm:$0x1]
        %v2707 = vperm.slane %v2705, 0
        %v2717 = vunpack.c.l.b16 %v2697
        %v2718 = vunpack.c.l.b16 %v2698
        %v2719 = vunpack.c.l.b16 %v2699
        %v2720 = vunpack.c.l.b16 %v2700
        %v2721 = vunpack.c.l.b16 %v2701
        %v2722 = vunpack.c.l.b16 %v2702
        %v2723 = vunpack.c.l.b16 %v2703
        %v2724 = vunpack.c.l.b16 %v2704
        %v2725 = vpack.c.b16 %v2718, %v2717
        %v2726 = vpack.c.b16 %v2720, %v2719
        %v2727 = vpack.c.b16 %v2722, %v2721
        %v2728 = vpack.c.b16 %v2724, %v2723
        %vm2733 = vcmask 523264
        %v2735 = vsel %vm2733, %v2696, 0
        %2737 = vmatpush.bf16.msra.mxu0 0
        %2738 = vmatpush.bf16.msra.mxu0 0
        %2739 = vmatpush.bf16.msra.mxu0 0
        %2740 = vmatpush.bf16.msra.mxu0 0
        %2741 = vmatpush.bf16.msra.mxu0 %v2728
        %2742 = vmatpush.bf16.msra.mxu0 %v2727
        %2743 = vmatpush.bf16.msra.mxu0 %v2726
        %2744 = vmatpush.bf16.msra.mxu0 %v2725
        %2745 = vmatmul.bf16.gmra.mxu0 %v2735
        %v2746 = vpop.f32.mrf.mxu0
        %v2747 = vadd.f32 %v2707, %v2746
        %v2748 = vpop.f32.mrf.mxu0
        %2749 = vdwg.mxu0
        %v2750 = vadd.f32 %v2615, %v2747
        %2751 = vst.msk [vmem:[%s657] sm:$0xff] %vm693, %v2750
        %s2752 = sand.u32 %s482, 1
        %s2753 = scalar_lea.sflag [#allocation3], %s2752
        %s2754 = sand.u32 %s482, 1
        %s2755 = smul.addr %s2754, 8
        %s2756 = scalar_lea.vmem [#allocation2], %s2755
        // Predicated region
        $region101: #{tpu_custom_call.1} parent=99 // pred_check
          %p2757 = pneg %p492
        $region102: #{tpu_custom_call.1} parent=99 // pred_check_branch
          %2759 = sbr.rel (%p2757) target = $region104
        $region103: #{tpu_custom_call.1} parent=99 // pred_region
          %2761 = vsyncadd %s2753, 0
          %s2762 = smul.addr %s34, 8
          %s2763 = scalar_lea.hbm %s20, %s2762
          %s2765 = sshll.u32 %s2756, 4
          %s2766 = int_to_ptr.vmem [resolvable:$true] %s2765
          %s2767 = sshll.u32 %s2763, 4
          %s2768 = int_to_ptr.hbm [resolvable:$true] %s2767
          %2770 = dma.vmem_to_hbm [thread:$0]  %s2766, 128, %s2768, %s2753
        $region104: #{tpu_custom_call.1} parent=99 // pred_fallthru
          _
      $region100: #{tpu_custom_call.1} parent=5 // pred_fallthru
        _
      %p2771 = scmp.le.s32.totalorder 2, %s29
      // Predicated region
      $region105: #{tpu_custom_call.1} parent=5 // pred_check
        %p2772 = pneg %p2771
      $region106: #{tpu_custom_call.1} parent=5 // pred_check_branch
        %2774 = sbr.rel (%p2772) target = $region108
      $region107: #{tpu_custom_call.1} parent=5 // pred_region
        %s2775 = ssub.s32 %s29, 2
        // Predicated region
        $region109: #{tpu_custom_call.1} parent=107 // pred_check
          %p2776 = pneg %p498
        $region110: #{tpu_custom_call.1} parent=107 // pred_check_branch
          %2778 = sbr.rel (%p2776) target = $region112
        $region111: #{tpu_custom_call.1} parent=107 // pred_region
          %s2779 = sand.u32 %s483, 1
          %s2780 = scalar_lea.sflag [#allocation3], %s2779
          %s2781 = sand.u32 %s483, 1
          %s2782 = smul.addr %s2781, 8
          %s2783 = scalar_lea.vmem [#allocation2], %s2782
          %2785 = dma.done %s2780, 128
        $region112: #{tpu_custom_call.1} parent=107 // pred_fallthru
          _
      $region108: #{tpu_custom_call.1} parent=5 // pred_fallthru
        _
    $region6: #{tpu_custom_call.1} parent=1 // loop_footer
      %s33 = sadd.s32 1, %s29
    $region7: #{tpu_custom_call.1} parent=1 // loop_footer_branch
      %28 = sbr.rel target = $region3
    $region8: #{tpu_custom_call.1} parent=1 // loop_exit
      _
    %2786 = vsyncpa [#allocation3], 1
    %s2787 = scalar_lea.sflag [#allocation3], 1
    %2788 = vsyncpa %s2787, 1

</llo_original>
